<compile_context>
chip_gen: v7x
topology: tpu7x:2x2x1
jax: 0.10.0
libtpu: 0.0.40
codegen_flags: <defaults>
</compile_context>

<pallas_src>
import functools

import jax
import jax.numpy as jnp
from jax.experimental import pallas as pl
from jax.experimental.pallas import tpu as pltpu

BN_EPS = 1e-5
_K = 3  # kernel_size (module default)


def _conv_stats_kernel(xm_ref, xh_ref, w_ref, conv_ref, stats_ref, patch_ref):
    """Conv3d tile (single im2col MXU contraction) + per-tile BN partial stats.

    xm_ref   : (1, TD, Hp, Wp, Ci) bf16  main padded-D rows [j*TD, j*TD+TD)
    xh_ref   : (1, 2,  Hp, Wp, Ci) bf16  2-row D halo [(j+1)*TD, (j+1)*TD+2)
    w_ref    : (Co, K^3*Ci)        bf16  im2col weights, columns (kd, kh, kw, ci)
    conv_ref : (1, Co, TD*H*W)     bf16  conv tile, channel-major (lane-dense)
    stats_ref: (1, 1, Co, 2)       f32   per-tile [sum, sum_sq] per channel
    patch_ref: (TD*H*W, K^3*Ci)    bf16  VMEM scratch: im2col patch matrix
    """
    _, TD, Hp, Wp, Ci = xm_ref.shape
    Co, KC = w_ref.shape
    H, W = Hp - (_K - 1), Wp - (_K - 1)
    HW = H * W
    M = TD * HW

    xm = xm_ref[0]            # (TD, Hp, Wp, Ci)
    xh = xh_ref[0]            # (2,  Hp, Wp, Ci)

    # Assemble the im2col patch matrix directly into the VMEM scratch: one
    # store per (tap, source).  No concatenated (TD+2)-row slab and no staged
    # growing concats; only the 2 halo rows get their own (tiny) stores.
    for kd in range(_K):
        n_main = TD - kd
        for kh in range(_K):
            for kw in range(_K):
                c0 = ((kd * _K + kh) * _K + kw) * Ci
                src = xm[kd:TD, kh:kh + H, kw:kw + W, :]          # (n_main,H,W,Ci)
                patch_ref[0:n_main * HW, c0:c0 + Ci] = src.reshape(n_main * HW, Ci)
                if kd:
                    hsrc = xh[0:kd, kh:kh + H, kw:kw + W, :]      # (kd,H,W,Ci)
                    patch_ref[n_main * HW:M, c0:c0 + Ci] = hsrc.reshape(kd * HW, Ci)

    # Single MXU contraction, produced directly channel-major:
    # (Co, KC) . (M, KC)^T -> (Co, M), fp32 accumulation.  No XLU transpose,
    # no Co->128 lane padding of the accumulator.
    acc = jax.lax.dot_general(
        w_ref[...], patch_ref[...],
        dimension_numbers=(((1,), (1,)), ((), ())),
        preferred_element_type=jnp.float32)                       # (Co, M)

    # bf16 conv intermediate in HBM; the BN statistics use the fp32 accumulator.
    conv_ref[...] = acc.astype(conv_ref.dtype).reshape(1, Co, M)

    s = jnp.sum(acc, axis=1, keepdims=True)                       # (Co, 1)
    ss = jnp.sum(acc * acc, axis=1, keepdims=True)                # (Co, 1)
    stats_ref[0, 0] = jnp.concatenate([s, ss], axis=1)            # (Co, 2)


def _bn_relu_kernel(c_ref, scale_ref, shift_ref, o_ref):
    """y = max(conv * scale + shift, 0); lane-dense fp32 VPU work."""
    o_ref[...] = jnp.maximum(
        c_ref[...].astype(jnp.float32) * scale_ref[...] + shift_ref[...], 0.0)


def _round_up(a, b):
    return -(-a // b) * b


def _vmem_capacity_bytes():
    try:
        return int(pltpu.get_tpu_info().vmem_capacity_bytes)
    except Exception:
        return 64 * 2**20        # conservative fallback = v7x per-core VMEM


def _step_vmem_bytes(td, H, W, Ci, Co):
    """All live VMEM for one grid step: double-buffered pipeline blocks,
    im2col scratch, fp32 accumulator (+ slack)."""
    Hp, Wp = H + 2, W + 2
    KC = _K * _K * _K * Ci
    m = td * H * W
    in_main = td * Hp * _round_up(Wp, 16) * _round_up(Ci, 128) * 2
    in_halo = 2 * Hp * _round_up(Wp, 16) * _round_up(Ci, 128) * 2
    patches = _round_up(m, 16) * _round_up(KC, 128) * 2
    acc = max(Co, 8) * _round_up(m, 128) * 4
    conv_out = _round_up(Co, 16) * _round_up(m, 128) * 2
    stats = 8 * 128 * 4
    return 2 * (in_main + in_halo + conv_out + stats) + patches + 3 * acc


def _pick_d_tile(D, H, W, Ci, Co, vmem_cap):
    """Largest even divisor of D whose per-step working set fits ~1/4 of the
    queried VMEM capacity, keeping the flattened spatial tile a multiple of
    128 lanes (unmasked stores) unless the whole depth fits in one tile."""
    budget = max(vmem_cap // 4, 6 * 2**20)
    cands = [td for td in range(2, D + 1, 2)
             if D % td == 0 and ((td * H * W) % 128 == 0 or td == D)]
    if not cands:
        raise NotImplementedError("TODO(synk): odd / indivisible depth D is not tiled yet")
    fitting = [td for td in cands if _step_vmem_bytes(td, H, W, Ci, Co) <= budget]
    return max(fitting) if fitting else min(cands)


@functools.partial(jax.jit, static_argnames=("pad", "d_tile"))
def conv_bn_relu_3d(x_ncdhw, weight_oidhw, gamma, beta, *, pad=1, d_tile=None):
    """Fused ConvBnReLU3D forward. x: (N, Ci, D, H, W) -> (N, Co, D, H, W)."""
    N, Ci, D, H, W = x_ncdhw.shape
    Co, Ci_w, Kd, Kh, Kw = weight_oidhw.shape
    assert (Kd, Kh, Kw) == (_K, _K, _K) and Ci_w == Ci and pad == 1, (
        "TODO(synk): only kernel_size=3, stride=1, pad=1, dilation=1 supported")

    vmem_cap = _vmem_capacity_bytes()
    TD = d_tile if d_tile is not None else _pick_d_tile(D, H, W, Ci, Co, vmem_cap)
    assert D % TD == 0 and TD % 2 == 0, "d_tile must be an even divisor of D"
    DB = D // TD
    Dp, Hp, Wp = D + 2 * pad, H + 2 * pad, W + 2 * pad
    KC = _K * _K * _K * Ci
    Mt = TD * H * W

    # NCDHW -> NDHWC, zero-pad D/H/W, bf16 MXU operands (fp32 accumulation and
    # all BN math stay fp32).
    # TODO(synk): a channel-major / lane-dense input layout (Ci off the lane
    #             axis) would further cut input-block VMEM at small Ci, but it
    #             needs a minor-dim relayout inside the kernel; NDHWC keeps
    #             every in-kernel reshape a plain major-dim fold.
    xp = jnp.pad(jnp.transpose(x_ncdhw, (0, 2, 3, 4, 1)),
                 ((0, 0), (pad, pad), (pad, pad), (pad, pad), (0, 0)))
    xp = xp.astype(jnp.bfloat16)
    # (Co, Ci, Kd, Kh, Kw) -> (Co, KC) with columns ordered (kd, kh, kw, ci).
    w_im2col = jnp.transpose(weight_oidhw, (0, 2, 3, 4, 1)).reshape(Co, KC)
    w_im2col = w_im2col.astype(jnp.bfloat16)

    grid = (N, DB)   # both axes independent -> megacore / dual-TC sharding
    vmem_limit = max(32 * 2**20, min(vmem_cap * 3 // 4, 112 * 2**20))
    cparams = pltpu.CompilerParams(
        dimension_semantics=("parallel", "parallel"),
        vmem_limit_bytes=int(vmem_limit))

    conv_flat, part = pl.pallas_call(
        _conv_stats_kernel,
        grid=grid,
        in_specs=[
            # main TD-row block and 2-row D halo of the same padded input.
            pl.BlockSpec((1, TD, Hp, Wp, Ci), lambda n, j: (n, j, 0, 0, 0)),
            pl.BlockSpec((1, 2, Hp, Wp, Ci),
                         lambda n, j: (n, (j + 1) * (TD // 2), 0, 0, 0)),
            pl.BlockSpec((Co, KC), lambda n, j: (0, 0)),   # weights stay resident
        ],
        out_shape=(
            jax.ShapeDtypeStruct((N, Co, D * H * W), jnp.bfloat16),
            jax.ShapeDtypeStruct((N, DB, Co, 2), jnp.float32),
        ),
        out_specs=(
            pl.BlockSpec((1, Co, Mt), lambda n, j: (n, 0, j)),
            pl.BlockSpec((1, 1, Co, 2), lambda n, j: (n, j, 0, 0)),
        ),
        scratch_shapes=[pltpu.VMEM((Mt, KC), jnp.bfloat16)],
        compiler_params=cparams,
        cost_estimate=pl.CostEstimate(
            flops=int(2 * N * D * H * W * KC * Co),
            transcendentals=0,
            bytes_accessed=int(xp.size * 2 + w_im2col.size * 2
                               + N * Co * D * H * W * 2 + N * DB * Co * 2 * 4)),
    )(xp, xp, w_im2col)

    # Combine per-tile (sum, sum_sq) into global training-mode BN statistics
    # with Chan's parallel-variance formula (no big-count E[x^2]-E[x]^2
    # cancellation), then fold mean/var with gamma/beta into scale/shift.
    n_t = jnp.float32(Mt)
    total = jnp.float32(N * D * H * W)
    s_t = part[..., 0]                         # (N, DB, Co)
    ss_t = part[..., 1]                        # (N, DB, Co)
    mean_t = s_t / n_t
    m2_t = ss_t - s_t * mean_t                 # per-tile sum of squared deviations
    mean = jnp.sum(s_t, axis=(0, 1)) / total
    m2 = (jnp.sum(m2_t, axis=(0, 1))
          + n_t * jnp.sum(jnp.square(mean_t - mean[None, None, :]), axis=(0, 1)))
    var = jnp.maximum(m2 / total, 0.0)
    scale = gamma.astype(jnp.float32) * jax.lax.rsqrt(var + BN_EPS)
    shift = beta.astype(jnp.float32) - mean * scale
    # TODO(synk): PyTorch BatchNorm3d (training) also updates running_mean /
    #             running_var with momentum; that module state is not produced.

    y = pl.pallas_call(
        _bn_relu_kernel,
        grid=grid,
        in_specs=[
            pl.BlockSpec((1, Co, Mt), lambda n, j: (n, 0, j)),
            pl.BlockSpec((Co, 1), lambda n, j: (0, 0)),
            pl.BlockSpec((Co, 1), lambda n, j: (0, 0)),
        ],
        out_shape=jax.ShapeDtypeStruct((N, Co, D * H * W), jnp.float32),
        out_specs=pl.BlockSpec((1, Co, Mt), lambda n, j: (n, 0, j)),
        compiler_params=cparams,
        cost_estimate=pl.CostEstimate(
            flops=int(3 * N * Co * D * H * W),
            transcendentals=0,
            bytes_accessed=int(N * Co * D * H * W * (2 + 4))),
    )(conv_flat, scale.reshape(Co, 1), shift.reshape(Co, 1))

    # (N, Co, D*H*W) is already channel-major: metadata-only reshape to NCDHW.
    return y.reshape(N, Co, D, H, W)


def _reference(x_ncdhw, weight_oidhw, gamma, beta, pad=1):
    """Pure-JAX fp32 reference (lax conv + training-mode BN + ReLU)."""
    conv = jax.lax.conv_general_dilated(
        x_ncdhw.astype(jnp.float32), weight_oidhw.astype(jnp.float32),
        window_strides=(1, 1, 1), padding=((pad, pad),) * 3,
        dimension_numbers=("NCDHW", "OIDHW", "NCDHW"))
    mean = conv.mean(axis=(0, 2, 3, 4), keepdims=True)
    var = jnp.square(conv - mean).mean(axis=(0, 2, 3, 4), keepdims=True)
    g = gamma.reshape(1, -1, 1, 1, 1)
    b = beta.reshape(1, -1, 1, 1, 1)
    y = (conv - mean) * jax.lax.rsqrt(var + BN_EPS) * g + b
    return jnp.maximum(y, 0.0)


if __name__ == "__main__":
    # Small deterministic shapes consistent with ConvBnReLU3D(in=4, out=8).
    N, Ci, Co = 2, 4, 8
    D = H = W = 8

    key = jax.random.PRNGKey(0)
    kx, kw, kg, kb = jax.random.split(key, 4)
    x = jax.random.normal(kx, (N, Ci, D, H, W), dtype=jnp.float32)
    weight = 0.1 * jax.random.normal(kw, (Co, Ci, _K, _K, _K), dtype=jnp.float32)
    gamma = 1.0 + 0.1 * jax.random.normal(kg, (Co,), dtype=jnp.float32)
    beta = 0.1 * jax.random.normal(kb, (Co,), dtype=jnp.float32)

    # d_tile=4 -> grid (N=2, D-slabs=2): exercises the D-halo path and the
    # cross-tile (global) batch-norm statistics combination.
    out = conv_bn_relu_3d(x, weight, gamma, beta, d_tile=4)
    out = jax.block_until_ready(out)

    ref = jax.block_until_ready(_reference(x, weight, gamma, beta))
    assert out.shape == (N, Co, D, H, W), out.shape
    max_err = float(jnp.max(jnp.abs(out - ref)))
    # bf16 MXU operands and bf16 conv intermediate (fp32 accumulation / fp32 BN
    # statistics) -> loosened absolute tolerance.
    assert max_err < 5e-2, f"max abs error too large: {max_err}"

    print("KERNEL_OK")
</pallas_src>

<mosaic_0001>
module attributes {stable_mosaic.version = 11 : i64} {
  func.func @_conv_stats_kernel(%arg0: i32, %arg1: i32, %arg2: memref<1x4x10x10x4xbf16, #tpu.memory_space<vmem>>, %arg3: memref<1x2x10x10x4xbf16, #tpu.memory_space<vmem>>, %arg4: memref<8x108xbf16, #tpu.memory_space<vmem>>, %arg5: memref<1x8x256xbf16, #tpu.memory_space<vmem>>, %arg6: memref<1x1x8x2xf32, #tpu.memory_space<vmem>>, %arg7: memref<256x108xbf16, #tpu.memory_space<vmem>>) attributes {dimension_semantics = [#tpu.dimension_semantics<parallel>, #tpu.dimension_semantics<parallel>], iteration_bounds = array<i64: 2, 2>, scalar_prefetch = 0 : i64, scratch_operands = 1 : i64, tpu.core_type = #tpu.core_type<tc>, window_params = [{transform_indices = @transform_0, window_bounds = array<i64: 1, 4, 10, 10, 4>}, {transform_indices = @transform_1, window_bounds = array<i64: 1, 2, 10, 10, 4>}, {pipeline_mode = #tpu.pipeline_mode<synchronous>, transform_indices = @transform_2, window_bounds = array<i64: 8, 108>}, {transform_indices = @transform_3, window_bounds = array<i64: 1, 8, 256>}, {transform_indices = @transform_4, window_bounds = array<i64: 1, 1, 8, 2>}]} {
    %c0 = arith.constant 0 : index
    %c0_0 = arith.constant 0 : index
    %c0_1 = arith.constant 0 : index
    %c0_2 = arith.constant 0 : index
    %c0_3 = arith.constant 0 : index
    %0 = vector.load %arg2[%c0, %c0_0, %c0_1, %c0_2, %c0_3] : memref<1x4x10x10x4xbf16, #tpu.memory_space<vmem>>, vector<1x4x10x10x4xbf16>
    %1 = vector.shape_cast %0 : vector<1x4x10x10x4xbf16> to vector<4x10x10x4xbf16>
    %c0_4 = arith.constant 0 : index
    %c0_5 = arith.constant 0 : index
    %c0_6 = arith.constant 0 : index
    %c0_7 = arith.constant 0 : index
    %c0_8 = arith.constant 0 : index
    %2 = vector.load %arg3[%c0_4, %c0_5, %c0_6, %c0_7, %c0_8] : memref<1x2x10x10x4xbf16, #tpu.memory_space<vmem>>, vector<1x2x10x10x4xbf16>
    %3 = vector.shape_cast %2 : vector<1x2x10x10x4xbf16> to vector<2x10x10x4xbf16>
    %4 = vector.extract_strided_slice %1 {offsets = [0, 0, 0, 0], sizes = [4, 8, 8, 4], strides = [1, 1, 1, 1]} : vector<4x10x10x4xbf16> to vector<4x8x8x4xbf16>
    %5 = vector.shape_cast %4 : vector<4x8x8x4xbf16> to vector<256x4xbf16>
    %c0_9 = arith.constant 0 : index
    %c0_10 = arith.constant 0 : index
    %6 = vector.load %arg7[%c0_9, %c0_10] : memref<256x108xbf16, #tpu.memory_space<vmem>>, vector<256x4xbf16>
    tpu.vector_store %arg7[%c0_9, %c0_10], %5 {strides = array<i32>} : memref<256x108xbf16, #tpu.memory_space<vmem>>, vector<256x4xbf16>,
    %7 = vector.extract_strided_slice %1 {offsets = [0, 0, 1, 0], sizes = [4, 8, 8, 4], strides = [1, 1, 1, 1]} : vector<4x10x10x4xbf16> to vector<4x8x8x4xbf16>
    %8 = vector.shape_cast %7 : vector<4x8x8x4xbf16> to vector<256x4xbf16>
    %c0_11 = arith.constant 0 : index
    %c4 = arith.constant 4 : index
    %9 = vector.load %arg7[%c0_11, %c4] : memref<256x108xbf16, #tpu.memory_space<vmem>>, vector<256x4xbf16>
    tpu.vector_store %arg7[%c0_11, %c4], %8 {strides = array<i32>} : memref<256x108xbf16, #tpu.memory_space<vmem>>, vector<256x4xbf16>,
    %10 = vector.extract_strided_slice %1 {offsets = [0, 0, 2, 0], sizes = [4, 8, 8, 4], strides = [1, 1, 1, 1]} : vector<4x10x10x4xbf16> to vector<4x8x8x4xbf16>
    %11 = vector.shape_cast %10 : vector<4x8x8x4xbf16> to vector<256x4xbf16>
    %c0_12 = arith.constant 0 : index
    %c8 = arith.constant 8 : index
    %12 = vector.load %arg7[%c0_12, %c8] : memref<256x108xbf16, #tpu.memory_space<vmem>>, vector<256x4xbf16>
    tpu.vector_store %arg7[%c0_12, %c8], %11 {strides = array<i32>} : memref<256x108xbf16, #tpu.memory_space<vmem>>, vector<256x4xbf16>,
    %13 = vector.extract_strided_slice %1 {offsets = [0, 1, 0, 0], sizes = [4, 8, 8, 4], strides = [1, 1, 1, 1]} : vector<4x10x10x4xbf16> to vector<4x8x8x4xbf16>
    %14 = vector.shape_cast %13 : vector<4x8x8x4xbf16> to vector<256x4xbf16>
    %c0_13 = arith.constant 0 : index
    %c12 = arith.constant 12 : index
    %15 = vector.load %arg7[%c0_13, %c12] : memref<256x108xbf16, #tpu.memory_space<vmem>>, vector<256x4xbf16>
    tpu.vector_store %arg7[%c0_13, %c12], %14 {strides = array<i32>} : memref<256x108xbf16, #tpu.memory_space<vmem>>, vector<256x4xbf16>,
    %16 = vector.extract_strided_slice %1 {offsets = [0, 1, 1, 0], sizes = [4, 8, 8, 4], strides = [1, 1, 1, 1]} : vector<4x10x10x4xbf16> to vector<4x8x8x4xbf16>
    %17 = vector.shape_cast %16 : vector<4x8x8x4xbf16> to vector<256x4xbf16>
    %c0_14 = arith.constant 0 : index
    %c16 = arith.constant 16 : index
    %18 = vector.load %arg7[%c0_14, %c16] : memref<256x108xbf16, #tpu.memory_space<vmem>>, vector<256x4xbf16>
    tpu.vector_store %arg7[%c0_14, %c16], %17 {strides = array<i32>} : memref<256x108xbf16, #tpu.memory_space<vmem>>, vector<256x4xbf16>,
    %19 = vector.extract_strided_slice %1 {offsets = [0, 1, 2, 0], sizes = [4, 8, 8, 4], strides = [1, 1, 1, 1]} : vector<4x10x10x4xbf16> to vector<4x8x8x4xbf16>
    %20 = vector.shape_cast %19 : vector<4x8x8x4xbf16> to vector<256x4xbf16>
    %c0_15 = arith.constant 0 : index
    %c20 = arith.constant 20 : index
    %21 = vector.load %arg7[%c0_15, %c20] : memref<256x108xbf16, #tpu.memory_space<vmem>>, vector<256x4xbf16>
    tpu.vector_store %arg7[%c0_15, %c20], %20 {strides = array<i32>} : memref<256x108xbf16, #tpu.memory_space<vmem>>, vector<256x4xbf16>,
    %22 = vector.extract_strided_slice %1 {offsets = [0, 2, 0, 0], sizes = [4, 8, 8, 4], strides = [1, 1, 1, 1]} : vector<4x10x10x4xbf16> to vector<4x8x8x4xbf16>
    %23 = vector.shape_cast %22 : vector<4x8x8x4xbf16> to vector<256x4xbf16>
    %c0_16 = arith.constant 0 : index
    %c24 = arith.constant 24 : index
    %24 = vector.load %arg7[%c0_16, %c24] : memref<256x108xbf16, #tpu.memory_space<vmem>>, vector<256x4xbf16>
    tpu.vector_store %arg7[%c0_16, %c24], %23 {strides = array<i32>} : memref<256x108xbf16, #tpu.memory_space<vmem>>, vector<256x4xbf16>,
    %25 = vector.extract_strided_slice %1 {offsets = [0, 2, 1, 0], sizes = [4, 8, 8, 4], strides = [1, 1, 1, 1]} : vector<4x10x10x4xbf16> to vector<4x8x8x4xbf16>
    %26 = vector.shape_cast %25 : vector<4x8x8x4xbf16> to vector<256x4xbf16>
    %c0_17 = arith.constant 0 : index
    %c28 = arith.constant 28 : index
    %27 = vector.load %arg7[%c0_17, %c28] : memref<256x108xbf16, #tpu.memory_space<vmem>>, vector<256x4xbf16>
    tpu.vector_store %arg7[%c0_17, %c28], %26 {strides = array<i32>} : memref<256x108xbf16, #tpu.memory_space<vmem>>, vector<256x4xbf16>,
    %28 = vector.extract_strided_slice %1 {offsets = [0, 2, 2, 0], sizes = [4, 8, 8, 4], strides = [1, 1, 1, 1]} : vector<4x10x10x4xbf16> to vector<4x8x8x4xbf16>
    %29 = vector.shape_cast %28 : vector<4x8x8x4xbf16> to vector<256x4xbf16>
    %c0_18 = arith.constant 0 : index
    %c32 = arith.constant 32 : index
    %30 = vector.load %arg7[%c0_18, %c32] : memref<256x108xbf16, #tpu.memory_space<vmem>>, vector<256x4xbf16>
    tpu.vector_store %arg7[%c0_18, %c32], %29 {strides = array<i32>} : memref<256x108xbf16, #tpu.memory_space<vmem>>, vector<256x4xbf16>,
    %31 = vector.extract_strided_slice %1 {offsets = [1, 0, 0, 0], sizes = [3, 8, 8, 4], strides = [1, 1, 1, 1]} : vector<4x10x10x4xbf16> to vector<3x8x8x4xbf16>
    %32 = vector.shape_cast %31 : vector<3x8x8x4xbf16> to vector<192x4xbf16>
    %c0_19 = arith.constant 0 : index
    %c36 = arith.constant 36 : index
    %33 = vector.load %arg7[%c0_19, %c36] : memref<256x108xbf16, #tpu.memory_space<vmem>>, vector<192x4xbf16>
    tpu.vector_store %arg7[%c0_19, %c36], %32 {strides = array<i32>} : memref<256x108xbf16, #tpu.memory_space<vmem>>, vector<192x4xbf16>,
    %34 = vector.extract_strided_slice %3 {offsets = [0, 0, 0, 0], sizes = [1, 8, 8, 4], strides = [1, 1, 1, 1]} : vector<2x10x10x4xbf16> to vector<1x8x8x4xbf16>
    %35 = vector.shape_cast %34 : vector<1x8x8x4xbf16> to vector<64x4xbf16>
    %c192 = arith.constant 192 : index
    %c36_20 = arith.constant 36 : index
    %36 = vector.load %arg7[%c192, %c36_20] : memref<256x108xbf16, #tpu.memory_space<vmem>>, vector<64x4xbf16>
    tpu.vector_store %arg7[%c192, %c36_20], %35 {strides = array<i32>} : memref<256x108xbf16, #tpu.memory_space<vmem>>, vector<64x4xbf16>,
    %37 = vector.extract_strided_slice %1 {offsets = [1, 0, 1, 0], sizes = [3, 8, 8, 4], strides = [1, 1, 1, 1]} : vector<4x10x10x4xbf16> to vector<3x8x8x4xbf16>
    %38 = vector.shape_cast %37 : vector<3x8x8x4xbf16> to vector<192x4xbf16>
    %c0_21 = arith.constant 0 : index
    %c40 = arith.constant 40 : index
    %39 = vector.load %arg7[%c0_21, %c40] : memref<256x108xbf16, #tpu.memory_space<vmem>>, vector<192x4xbf16>
    tpu.vector_store %arg7[%c0_21, %c40], %38 {strides = array<i32>} : memref<256x108xbf16, #tpu.memory_space<vmem>>, vector<192x4xbf16>,
    %40 = vector.extract_strided_slice %3 {offsets = [0, 0, 1, 0], sizes = [1, 8, 8, 4], strides = [1, 1, 1, 1]} : vector<2x10x10x4xbf16> to vector<1x8x8x4xbf16>
    %41 = vector.shape_cast %40 : vector<1x8x8x4xbf16> to vector<64x4xbf16>
    %c192_22 = arith.constant 192 : index
    %c40_23 = arith.constant 40 : index
    %42 = vector.load %arg7[%c192_22, %c40_23] : memref<256x108xbf16, #tpu.memory_space<vmem>>, vector<64x4xbf16>
    tpu.vector_store %arg7[%c192_22, %c40_23], %41 {strides = array<i32>} : memref<256x108xbf16, #tpu.memory_space<vmem>>, vector<64x4xbf16>,
    %43 = vector.extract_strided_slice %1 {offsets = [1, 0, 2, 0], sizes = [3, 8, 8, 4], strides = [1, 1, 1, 1]} : vector<4x10x10x4xbf16> to vector<3x8x8x4xbf16>
    %44 = vector.shape_cast %43 : vector<3x8x8x4xbf16> to vector<192x4xbf16>
    %c0_24 = arith.constant 0 : index
    %c44 = arith.constant 44 : index
    %45 = vector.load %arg7[%c0_24, %c44] : memref<256x108xbf16, #tpu.memory_space<vmem>>, vector<192x4xbf16>
    tpu.vector_store %arg7[%c0_24, %c44], %44 {strides = array<i32>} : memref<256x108xbf16, #tpu.memory_space<vmem>>, vector<192x4xbf16>,
    %46 = vector.extract_strided_slice %3 {offsets = [0, 0, 2, 0], sizes = [1, 8, 8, 4], strides = [1, 1, 1, 1]} : vector<2x10x10x4xbf16> to vector<1x8x8x4xbf16>
    %47 = vector.shape_cast %46 : vector<1x8x8x4xbf16> to vector<64x4xbf16>
    %c192_25 = arith.constant 192 : index
    %c44_26 = arith.constant 44 : index
    %48 = vector.load %arg7[%c192_25, %c44_26] : memref<256x108xbf16, #tpu.memory_space<vmem>>, vector<64x4xbf16>
    tpu.vector_store %arg7[%c192_25, %c44_26], %47 {strides = array<i32>} : memref<256x108xbf16, #tpu.memory_space<vmem>>, vector<64x4xbf16>,
    %49 = vector.extract_strided_slice %1 {offsets = [1, 1, 0, 0], sizes = [3, 8, 8, 4], strides = [1, 1, 1, 1]} : vector<4x10x10x4xbf16> to vector<3x8x8x4xbf16>
    %50 = vector.shape_cast %49 : vector<3x8x8x4xbf16> to vector<192x4xbf16>
    %c0_27 = arith.constant 0 : index
    %c48 = arith.constant 48 : index
    %51 = vector.load %arg7[%c0_27, %c48] : memref<256x108xbf16, #tpu.memory_space<vmem>>, vector<192x4xbf16>
    tpu.vector_store %arg7[%c0_27, %c48], %50 {strides = array<i32>} : memref<256x108xbf16, #tpu.memory_space<vmem>>, vector<192x4xbf16>,
    %52 = vector.extract_strided_slice %3 {offsets = [0, 1, 0, 0], sizes = [1, 8, 8, 4], strides = [1, 1, 1, 1]} : vector<2x10x10x4xbf16> to vector<1x8x8x4xbf16>
    %53 = vector.shape_cast %52 : vector<1x8x8x4xbf16> to vector<64x4xbf16>
    %c192_28 = arith.constant 192 : index
    %c48_29 = arith.constant 48 : index
    %54 = vector.load %arg7[%c192_28, %c48_29] : memref<256x108xbf16, #tpu.memory_space<vmem>>, vector<64x4xbf16>
    tpu.vector_store %arg7[%c192_28, %c48_29], %53 {strides = array<i32>} : memref<256x108xbf16, #tpu.memory_space<vmem>>, vector<64x4xbf16>,
    %55 = vector.extract_strided_slice %1 {offsets = [1, 1, 1, 0], sizes = [3, 8, 8, 4], strides = [1, 1, 1, 1]} : vector<4x10x10x4xbf16> to vector<3x8x8x4xbf16>
    %56 = vector.shape_cast %55 : vector<3x8x8x4xbf16> to vector<192x4xbf16>
    %c0_30 = arith.constant 0 : index
    %c52 = arith.constant 52 : index
    %57 = vector.load %arg7[%c0_30, %c52] : memref<256x108xbf16, #tpu.memory_space<vmem>>, vector<192x4xbf16>
    tpu.vector_store %arg7[%c0_30, %c52], %56 {strides = array<i32>} : memref<256x108xbf16, #tpu.memory_space<vmem>>, vector<192x4xbf16>,
    %58 = vector.extract_strided_slice %3 {offsets = [0, 1, 1, 0], sizes = [1, 8, 8, 4], strides = [1, 1, 1, 1]} : vector<2x10x10x4xbf16> to vector<1x8x8x4xbf16>
    %59 = vector.shape_cast %58 : vector<1x8x8x4xbf16> to vector<64x4xbf16>
    %c192_31 = arith.constant 192 : index
    %c52_32 = arith.constant 52 : index
    %60 = vector.load %arg7[%c192_31, %c52_32] : memref<256x108xbf16, #tpu.memory_space<vmem>>, vector<64x4xbf16>
    tpu.vector_store %arg7[%c192_31, %c52_32], %59 {strides = array<i32>} : memref<256x108xbf16, #tpu.memory_space<vmem>>, vector<64x4xbf16>,
    %61 = vector.extract_strided_slice %1 {offsets = [1, 1, 2, 0], sizes = [3, 8, 8, 4], strides = [1, 1, 1, 1]} : vector<4x10x10x4xbf16> to vector<3x8x8x4xbf16>
    %62 = vector.shape_cast %61 : vector<3x8x8x4xbf16> to vector<192x4xbf16>
    %c0_33 = arith.constant 0 : index
    %c56 = arith.constant 56 : index
    %63 = vector.load %arg7[%c0_33, %c56] : memref<256x108xbf16, #tpu.memory_space<vmem>>, vector<192x4xbf16>
    tpu.vector_store %arg7[%c0_33, %c56], %62 {strides = array<i32>} : memref<256x108xbf16, #tpu.memory_space<vmem>>, vector<192x4xbf16>,
    %64 = vector.extract_strided_slice %3 {offsets = [0, 1, 2, 0], sizes = [1, 8, 8, 4], strides = [1, 1, 1, 1]} : vector<2x10x10x4xbf16> to vector<1x8x8x4xbf16>
    %65 = vector.shape_cast %64 : vector<1x8x8x4xbf16> to vector<64x4xbf16>
    %c192_34 = arith.constant 192 : index
    %c56_35 = arith.constant 56 : index
    %66 = vector.load %arg7[%c192_34, %c56_35] : memref<256x108xbf16, #tpu.memory_space<vmem>>, vector<64x4xbf16>
    tpu.vector_store %arg7[%c192_34, %c56_35], %65 {strides = array<i32>} : memref<256x108xbf16, #tpu.memory_space<vmem>>, vector<64x4xbf16>,
    %67 = vector.extract_strided_slice %1 {offsets = [1, 2, 0, 0], sizes = [3, 8, 8, 4], strides = [1, 1, 1, 1]} : vector<4x10x10x4xbf16> to vector<3x8x8x4xbf16>
    %68 = vector.shape_cast %67 : vector<3x8x8x4xbf16> to vector<192x4xbf16>
    %c0_36 = arith.constant 0 : index
    %c60 = arith.constant 60 : index
    %69 = vector.load %arg7[%c0_36, %c60] : memref<256x108xbf16, #tpu.memory_space<vmem>>, vector<192x4xbf16>
    tpu.vector_store %arg7[%c0_36, %c60], %68 {strides = array<i32>} : memref<256x108xbf16, #tpu.memory_space<vmem>>, vector<192x4xbf16>,
    %70 = vector.extract_strided_slice %3 {offsets = [0, 2, 0, 0], sizes = [1, 8, 8, 4], strides = [1, 1, 1, 1]} : vector<2x10x10x4xbf16> to vector<1x8x8x4xbf16>
    %71 = vector.shape_cast %70 : vector<1x8x8x4xbf16> to vector<64x4xbf16>
    %c192_37 = arith.constant 192 : index
    %c60_38 = arith.constant 60 : index
    %72 = vector.load %arg7[%c192_37, %c60_38] : memref<256x108xbf16, #tpu.memory_space<vmem>>, vector<64x4xbf16>
    tpu.vector_store %arg7[%c192_37, %c60_38], %71 {strides = array<i32>} : memref<256x108xbf16, #tpu.memory_space<vmem>>, vector<64x4xbf16>,
    %73 = vector.extract_strided_slice %1 {offsets = [1, 2, 1, 0], sizes = [3, 8, 8, 4], strides = [1, 1, 1, 1]} : vector<4x10x10x4xbf16> to vector<3x8x8x4xbf16>
    %74 = vector.shape_cast %73 : vector<3x8x8x4xbf16> to vector<192x4xbf16>
    %c0_39 = arith.constant 0 : index
    %c64 = arith.constant 64 : index
    %75 = vector.load %arg7[%c0_39, %c64] : memref<256x108xbf16, #tpu.memory_space<vmem>>, vector<192x4xbf16>
    tpu.vector_store %arg7[%c0_39, %c64], %74 {strides = array<i32>} : memref<256x108xbf16, #tpu.memory_space<vmem>>, vector<192x4xbf16>,
    %76 = vector.extract_strided_slice %3 {offsets = [0, 2, 1, 0], sizes = [1, 8, 8, 4], strides = [1, 1, 1, 1]} : vector<2x10x10x4xbf16> to vector<1x8x8x4xbf16>
    %77 = vector.shape_cast %76 : vector<1x8x8x4xbf16> to vector<64x4xbf16>
    %c192_40 = arith.constant 192 : index
    %c64_41 = arith.constant 64 : index
    %78 = vector.load %arg7[%c192_40, %c64_41] : memref<256x108xbf16, #tpu.memory_space<vmem>>, vector<64x4xbf16>
    tpu.vector_store %arg7[%c192_40, %c64_41], %77 {strides = array<i32>} : memref<256x108xbf16, #tpu.memory_space<vmem>>, vector<64x4xbf16>,
    %79 = vector.extract_strided_slice %1 {offsets = [1, 2, 2, 0], sizes = [3, 8, 8, 4], strides = [1, 1, 1, 1]} : vector<4x10x10x4xbf16> to vector<3x8x8x4xbf16>
    %80 = vector.shape_cast %79 : vector<3x8x8x4xbf16> to vector<192x4xbf16>
    %c0_42 = arith.constant 0 : index
    %c68 = arith.constant 68 : index
    %81 = vector.load %arg7[%c0_42, %c68] : memref<256x108xbf16, #tpu.memory_space<vmem>>, vector<192x4xbf16>
    tpu.vector_store %arg7[%c0_42, %c68], %80 {strides = array<i32>} : memref<256x108xbf16, #tpu.memory_space<vmem>>, vector<192x4xbf16>,
    %82 = vector.extract_strided_slice %3 {offsets = [0, 2, 2, 0], sizes = [1, 8, 8, 4], strides = [1, 1, 1, 1]} : vector<2x10x10x4xbf16> to vector<1x8x8x4xbf16>
    %83 = vector.shape_cast %82 : vector<1x8x8x4xbf16> to vector<64x4xbf16>
    %c192_43 = arith.constant 192 : index
    %c68_44 = arith.constant 68 : index
    %84 = vector.load %arg7[%c192_43, %c68_44] : memref<256x108xbf16, #tpu.memory_space<vmem>>, vector<64x4xbf16>
    tpu.vector_store %arg7[%c192_43, %c68_44], %83 {strides = array<i32>} : memref<256x108xbf16, #tpu.memory_space<vmem>>, vector<64x4xbf16>,
    %85 = vector.extract_strided_slice %1 {offsets = [2, 0, 0, 0], sizes = [2, 8, 8, 4], strides = [1, 1, 1, 1]} : vector<4x10x10x4xbf16> to vector<2x8x8x4xbf16>
    %86 = vector.shape_cast %85 : vector<2x8x8x4xbf16> to vector<128x4xbf16>
    %c0_45 = arith.constant 0 : index
    %c72 = arith.constant 72 : index
    %87 = vector.load %arg7[%c0_45, %c72] : memref<256x108xbf16, #tpu.memory_space<vmem>>, vector<128x4xbf16>
    tpu.vector_store %arg7[%c0_45, %c72], %86 {strides = array<i32>} : memref<256x108xbf16, #tpu.memory_space<vmem>>, vector<128x4xbf16>,
    %88 = vector.extract_strided_slice %3 {offsets = [0, 0, 0, 0], sizes = [2, 8, 8, 4], strides = [1, 1, 1, 1]} : vector<2x10x10x4xbf16> to vector<2x8x8x4xbf16>
    %89 = vector.shape_cast %88 : vector<2x8x8x4xbf16> to vector<128x4xbf16>
    %c128 = arith.constant 128 : index
    %c72_46 = arith.constant 72 : index
    %90 = vector.load %arg7[%c128, %c72_46] : memref<256x108xbf16, #tpu.memory_space<vmem>>, vector<128x4xbf16>
    tpu.vector_store %arg7[%c128, %c72_46], %89 {strides = array<i32>} : memref<256x108xbf16, #tpu.memory_space<vmem>>, vector<128x4xbf16>,
    %91 = vector.extract_strided_slice %1 {offsets = [2, 0, 1, 0], sizes = [2, 8, 8, 4], strides = [1, 1, 1, 1]} : vector<4x10x10x4xbf16> to vector<2x8x8x4xbf16>
    %92 = vector.shape_cast %91 : vector<2x8x8x4xbf16> to vector<128x4xbf16>
    %c0_47 = arith.constant 0 : index
    %c76 = arith.constant 76 : index
    %93 = vector.load %arg7[%c0_47, %c76] : memref<256x108xbf16, #tpu.memory_space<vmem>>, vector<128x4xbf16>
    tpu.vector_store %arg7[%c0_47, %c76], %92 {strides = array<i32>} : memref<256x108xbf16, #tpu.memory_space<vmem>>, vector<128x4xbf16>,
    %94 = vector.extract_strided_slice %3 {offsets = [0, 0, 1, 0], sizes = [2, 8, 8, 4], strides = [1, 1, 1, 1]} : vector<2x10x10x4xbf16> to vector<2x8x8x4xbf16>
    %95 = vector.shape_cast %94 : vector<2x8x8x4xbf16> to vector<128x4xbf16>
    %c128_48 = arith.constant 128 : index
    %c76_49 = arith.constant 76 : index
    %96 = vector.load %arg7[%c128_48, %c76_49] : memref<256x108xbf16, #tpu.memory_space<vmem>>, vector<128x4xbf16>
    tpu.vector_store %arg7[%c128_48, %c76_49], %95 {strides = array<i32>} : memref<256x108xbf16, #tpu.memory_space<vmem>>, vector<128x4xbf16>,
    %97 = vector.extract_strided_slice %1 {offsets = [2, 0, 2, 0], sizes = [2, 8, 8, 4], strides = [1, 1, 1, 1]} : vector<4x10x10x4xbf16> to vector<2x8x8x4xbf16>
    %98 = vector.shape_cast %97 : vector<2x8x8x4xbf16> to vector<128x4xbf16>
    %c0_50 = arith.constant 0 : index
    %c80 = arith.constant 80 : index
    %99 = vector.load %arg7[%c0_50, %c80] : memref<256x108xbf16, #tpu.memory_space<vmem>>, vector<128x4xbf16>
    tpu.vector_store %arg7[%c0_50, %c80], %98 {strides = array<i32>} : memref<256x108xbf16, #tpu.memory_space<vmem>>, vector<128x4xbf16>,
    %100 = vector.extract_strided_slice %3 {offsets = [0, 0, 2, 0], sizes = [2, 8, 8, 4], strides = [1, 1, 1, 1]} : vector<2x10x10x4xbf16> to vector<2x8x8x4xbf16>
    %101 = vector.shape_cast %100 : vector<2x8x8x4xbf16> to vector<128x4xbf16>
    %c128_51 = arith.constant 128 : index
    %c80_52 = arith.constant 80 : index
    %102 = vector.load %arg7[%c128_51, %c80_52] : memref<256x108xbf16, #tpu.memory_space<vmem>>, vector<128x4xbf16>
    tpu.vector_store %arg7[%c128_51, %c80_52], %101 {strides = array<i32>} : memref<256x108xbf16, #tpu.memory_space<vmem>>, vector<128x4xbf16>,
    %103 = vector.extract_strided_slice %1 {offsets = [2, 1, 0, 0], sizes = [2, 8, 8, 4], strides = [1, 1, 1, 1]} : vector<4x10x10x4xbf16> to vector<2x8x8x4xbf16>
    %104 = vector.shape_cast %103 : vector<2x8x8x4xbf16> to vector<128x4xbf16>
    %c0_53 = arith.constant 0 : index
    %c84 = arith.constant 84 : index
    %105 = vector.load %arg7[%c0_53, %c84] : memref<256x108xbf16, #tpu.memory_space<vmem>>, vector<128x4xbf16>
    tpu.vector_store %arg7[%c0_53, %c84], %104 {strides = array<i32>} : memref<256x108xbf16, #tpu.memory_space<vmem>>, vector<128x4xbf16>,
    %106 = vector.extract_strided_slice %3 {offsets = [0, 1, 0, 0], sizes = [2, 8, 8, 4], strides = [1, 1, 1, 1]} : vector<2x10x10x4xbf16> to vector<2x8x8x4xbf16>
    %107 = vector.shape_cast %106 : vector<2x8x8x4xbf16> to vector<128x4xbf16>
    %c128_54 = arith.constant 128 : index
    %c84_55 = arith.constant 84 : index
    %108 = vector.load %arg7[%c128_54, %c84_55] : memref<256x108xbf16, #tpu.memory_space<vmem>>, vector<128x4xbf16>
    tpu.vector_store %arg7[%c128_54, %c84_55], %107 {strides = array<i32>} : memref<256x108xbf16, #tpu.memory_space<vmem>>, vector<128x4xbf16>,
    %109 = vector.extract_strided_slice %1 {offsets = [2, 1, 1, 0], sizes = [2, 8, 8, 4], strides = [1, 1, 1, 1]} : vector<4x10x10x4xbf16> to vector<2x8x8x4xbf16>
    %110 = vector.shape_cast %109 : vector<2x8x8x4xbf16> to vector<128x4xbf16>
    %c0_56 = arith.constant 0 : index
    %c88 = arith.constant 88 : index
    %111 = vector.load %arg7[%c0_56, %c88] : memref<256x108xbf16, #tpu.memory_space<vmem>>, vector<128x4xbf16>
    tpu.vector_store %arg7[%c0_56, %c88], %110 {strides = array<i32>} : memref<256x108xbf16, #tpu.memory_space<vmem>>, vector<128x4xbf16>,
    %112 = vector.extract_strided_slice %3 {offsets = [0, 1, 1, 0], sizes = [2, 8, 8, 4], strides = [1, 1, 1, 1]} : vector<2x10x10x4xbf16> to vector<2x8x8x4xbf16>
    %113 = vector.shape_cast %112 : vector<2x8x8x4xbf16> to vector<128x4xbf16>
    %c128_57 = arith.constant 128 : index
    %c88_58 = arith.constant 88 : index
    %114 = vector.load %arg7[%c128_57, %c88_58] : memref<256x108xbf16, #tpu.memory_space<vmem>>, vector<128x4xbf16>
    tpu.vector_store %arg7[%c128_57, %c88_58], %113 {strides = array<i32>} : memref<256x108xbf16, #tpu.memory_space<vmem>>, vector<128x4xbf16>,
    %115 = vector.extract_strided_slice %1 {offsets = [2, 1, 2, 0], sizes = [2, 8, 8, 4], strides = [1, 1, 1, 1]} : vector<4x10x10x4xbf16> to vector<2x8x8x4xbf16>
    %116 = vector.shape_cast %115 : vector<2x8x8x4xbf16> to vector<128x4xbf16>
    %c0_59 = arith.constant 0 : index
    %c92 = arith.constant 92 : index
    %117 = vector.load %arg7[%c0_59, %c92] : memref<256x108xbf16, #tpu.memory_space<vmem>>, vector<128x4xbf16>
    tpu.vector_store %arg7[%c0_59, %c92], %116 {strides = array<i32>} : memref<256x108xbf16, #tpu.memory_space<vmem>>, vector<128x4xbf16>,
    %118 = vector.extract_strided_slice %3 {offsets = [0, 1, 2, 0], sizes = [2, 8, 8, 4], strides = [1, 1, 1, 1]} : vector<2x10x10x4xbf16> to vector<2x8x8x4xbf16>
    %119 = vector.shape_cast %118 : vector<2x8x8x4xbf16> to vector<128x4xbf16>
    %c128_60 = arith.constant 128 : index
    %c92_61 = arith.constant 92 : index
    %120 = vector.load %arg7[%c128_60, %c92_61] : memref<256x108xbf16, #tpu.memory_space<vmem>>, vector<128x4xbf16>
    tpu.vector_store %arg7[%c128_60, %c92_61], %119 {strides = array<i32>} : memref<256x108xbf16, #tpu.memory_space<vmem>>, vector<128x4xbf16>,
    %121 = vector.extract_strided_slice %1 {offsets = [2, 2, 0, 0], sizes = [2, 8, 8, 4], strides = [1, 1, 1, 1]} : vector<4x10x10x4xbf16> to vector<2x8x8x4xbf16>
    %122 = vector.shape_cast %121 : vector<2x8x8x4xbf16> to vector<128x4xbf16>
    %c0_62 = arith.constant 0 : index
    %c96 = arith.constant 96 : index
    %123 = vector.load %arg7[%c0_62, %c96] : memref<256x108xbf16, #tpu.memory_space<vmem>>, vector<128x4xbf16>
    tpu.vector_store %arg7[%c0_62, %c96], %122 {strides = array<i32>} : memref<256x108xbf16, #tpu.memory_space<vmem>>, vector<128x4xbf16>,
    %124 = vector.extract_strided_slice %3 {offsets = [0, 2, 0, 0], sizes = [2, 8, 8, 4], strides = [1, 1, 1, 1]} : vector<2x10x10x4xbf16> to vector<2x8x8x4xbf16>
    %125 = vector.shape_cast %124 : vector<2x8x8x4xbf16> to vector<128x4xbf16>
    %c128_63 = arith.constant 128 : index
    %c96_64 = arith.constant 96 : index
    %126 = vector.load %arg7[%c128_63, %c96_64] : memref<256x108xbf16, #tpu.memory_space<vmem>>, vector<128x4xbf16>
    tpu.vector_store %arg7[%c128_63, %c96_64], %125 {strides = array<i32>} : memref<256x108xbf16, #tpu.memory_space<vmem>>, vector<128x4xbf16>,
    %127 = vector.extract_strided_slice %1 {offsets = [2, 2, 1, 0], sizes = [2, 8, 8, 4], strides = [1, 1, 1, 1]} : vector<4x10x10x4xbf16> to vector<2x8x8x4xbf16>
    %128 = vector.shape_cast %127 : vector<2x8x8x4xbf16> to vector<128x4xbf16>
    %c0_65 = arith.constant 0 : index
    %c100 = arith.constant 100 : index
    %129 = vector.load %arg7[%c0_65, %c100] : memref<256x108xbf16, #tpu.memory_space<vmem>>, vector<128x4xbf16>
    tpu.vector_store %arg7[%c0_65, %c100], %128 {strides = array<i32>} : memref<256x108xbf16, #tpu.memory_space<vmem>>, vector<128x4xbf16>,
    %130 = vector.extract_strided_slice %3 {offsets = [0, 2, 1, 0], sizes = [2, 8, 8, 4], strides = [1, 1, 1, 1]} : vector<2x10x10x4xbf16> to vector<2x8x8x4xbf16>
    %131 = vector.shape_cast %130 : vector<2x8x8x4xbf16> to vector<128x4xbf16>
    %c128_66 = arith.constant 128 : index
    %c100_67 = arith.constant 100 : index
    %132 = vector.load %arg7[%c128_66, %c100_67] : memref<256x108xbf16, #tpu.memory_space<vmem>>, vector<128x4xbf16>
    tpu.vector_store %arg7[%c128_66, %c100_67], %131 {strides = array<i32>} : memref<256x108xbf16, #tpu.memory_space<vmem>>, vector<128x4xbf16>,
    %133 = vector.extract_strided_slice %1 {offsets = [2, 2, 2, 0], sizes = [2, 8, 8, 4], strides = [1, 1, 1, 1]} : vector<4x10x10x4xbf16> to vector<2x8x8x4xbf16>
    %134 = vector.shape_cast %133 : vector<2x8x8x4xbf16> to vector<128x4xbf16>
    %c0_68 = arith.constant 0 : index
    %c104 = arith.constant 104 : index
    %135 = vector.load %arg7[%c0_68, %c104] : memref<256x108xbf16, #tpu.memory_space<vmem>>, vector<128x4xbf16>
    tpu.vector_store %arg7[%c0_68, %c104], %134 {strides = array<i32>} : memref<256x108xbf16, #tpu.memory_space<vmem>>, vector<128x4xbf16>,
    %136 = vector.extract_strided_slice %3 {offsets = [0, 2, 2, 0], sizes = [2, 8, 8, 4], strides = [1, 1, 1, 1]} : vector<2x10x10x4xbf16> to vector<2x8x8x4xbf16>
    %137 = vector.shape_cast %136 : vector<2x8x8x4xbf16> to vector<128x4xbf16>
    %c128_69 = arith.constant 128 : index
    %c104_70 = arith.constant 104 : index
    %138 = vector.load %arg7[%c128_69, %c104_70] : memref<256x108xbf16, #tpu.memory_space<vmem>>, vector<128x4xbf16>
    tpu.vector_store %arg7[%c128_69, %c104_70], %137 {strides = array<i32>} : memref<256x108xbf16, #tpu.memory_space<vmem>>, vector<128x4xbf16>,
    %c0_71 = arith.constant 0 : index
    %c0_72 = arith.constant 0 : index
    %139 = vector.load %arg4[%c0_71, %c0_72] : memref<8x108xbf16, #tpu.memory_space<vmem>>, vector<8x108xbf16>
    %c0_73 = arith.constant 0 : index
    %c0_74 = arith.constant 0 : index
    %140 = vector.load %arg7[%c0_73, %c0_74] : memref<256x108xbf16, #tpu.memory_space<vmem>>, vector<256x108xbf16>
    %cst = arith.constant dense<0.000000e+00> : vector<8x256xf32>
    %141 = tpu.matmul %139, %140, %cst {dimension_numbers = #tpu.dot_dimension_numbers<[1], [1], [0], [0], [0, 0, 1, 0], [], []>} : vector<8x108xbf16>, vector<256x108xbf16>, vector<8x256xf32> -> vector<8x256xf32>
    %142 = arith.truncf %141 : vector<8x256xf32> to vector<8x256xbf16>
    %143 = vector.shape_cast %142 : vector<8x256xbf16> to vector<1x8x256xbf16>
    %c0_75 = arith.constant 0 : index
    %c0_76 = arith.constant 0 : index
    %c0_77 = arith.constant 0 : index
    %144 = vector.load %arg5[%c0_75, %c0_76, %c0_77] : memref<1x8x256xbf16, #tpu.memory_space<vmem>>, vector<1x8x256xbf16>
    tpu.vector_store %arg5[%c0_75, %c0_76, %c0_77], %143 {strides = array<i32>} : memref<1x8x256xbf16, #tpu.memory_space<vmem>>, vector<1x8x256xbf16>,
    %cst_78 = arith.constant dense<0.000000e+00> : vector<8xf32>
    %145 = vector.multi_reduction <add>, %141, %cst_78 [1] : vector<8x256xf32> to vector<8xf32>
    %146 = vector.shape_cast %145 : vector<8xf32> to vector<8x1xf32>
    %147 = arith.mulf %141, %141 : vector<8x256xf32>
    %cst_79 = arith.constant dense<0.000000e+00> : vector<8xf32>
    %148 = vector.multi_reduction <add>, %147, %cst_79 [1] : vector<8x256xf32> to vector<8xf32>
    %149 = vector.shape_cast %148 : vector<8xf32> to vector<8x1xf32>
    %150 = tpu.concatenate %146, %149 in 1 : vector<8x1xf32>, vector<8x1xf32> -> vector<8x2xf32>
    %c0_80 = arith.constant 0 : index
    %c0_81 = arith.constant 0 : index
    %c0_82 = arith.constant 0 : index
    %c0_83 = arith.constant 0 : index
    %151 = vector.load %arg6[%c0_80, %c0_81, %c0_82, %c0_83] : memref<1x1x8x2xf32, #tpu.memory_space<vmem>>, vector<1x1x8x2xf32>
    %152 = vector.shape_cast %151 : vector<1x1x8x2xf32> to vector<8x2xf32>
    %153 = vector.shape_cast %150 : vector<8x2xf32> to vector<1x1x8x2xf32>
    tpu.vector_store %arg6[%c0_80, %c0_81, %c0_82, %c0_83], %153 {strides = array<i32>} : memref<1x1x8x2xf32, #tpu.memory_space<vmem>>, vector<1x1x8x2xf32>,
    return
  }
  func.func @transform_0(%arg0: i32, %arg1: i32) -> (i32, i32, i32, i32, i32) {
    %c0_i32 = arith.constant 0 : i32
    %c0_i32_0 = arith.constant 0 : i32
    %c0_i32_1 = arith.constant 0 : i32
    %c0_i32_2 = arith.constant 0 : i32
    return %arg0, %arg1, %c0_i32, %c0_i32_0, %c0_i32_1 : i32, i32, i32, i32, i32
  }
  func.func @transform_1(%arg0: i32, %arg1: i32) -> (i32, i32, i32, i32, i32) {
    %c1_i32 = arith.constant 1 : i32
    %0 = arith.addi %arg1, %c1_i32 : i32
    %c2_i32 = arith.constant 2 : i32
    %1 = arith.muli %0, %c2_i32 : i32
    %c0_i32 = arith.constant 0 : i32
    %c0_i32_0 = arith.constant 0 : i32
    %c0_i32_1 = arith.constant 0 : i32
    %c0_i32_2 = arith.constant 0 : i32
    return %arg0, %1, %c0_i32, %c0_i32_0, %c0_i32_1 : i32, i32, i32, i32, i32
  }
  func.func @transform_2(%arg0: i32, %arg1: i32) -> (i32, i32) {
    %c0_i32 = arith.constant 0 : i32
    %c0_i32_0 = arith.constant 0 : i32
    %c0_i32_1 = arith.constant 0 : i32
    return %c0_i32, %c0_i32_0 : i32, i32
  }
  func.func @transform_3(%arg0: i32, %arg1: i32) -> (i32, i32, i32) {
    %c0_i32 = arith.constant 0 : i32
    %c0_i32_0 = arith.constant 0 : i32
    return %arg0, %c0_i32, %arg1 : i32, i32, i32
  }
  func.func @transform_4(%arg0: i32, %arg1: i32) -> (i32, i32, i32, i32) {
    %c0_i32 = arith.constant 0 : i32
    %c0_i32_0 = arith.constant 0 : i32
    %c0_i32_1 = arith.constant 0 : i32
    return %arg0, %arg1, %c0_i32, %c0_i32_0 : i32, i32, i32, i32
  }
}

module attributes {stable_mosaic.version = 11 : i64} {
  func.func @_bn_relu_kernel(%arg0: i32, %arg1: i32, %arg2: memref<1x8x256xbf16, #tpu.memory_space<vmem>>, %arg3: memref<8x1xf32, #tpu.memory_space<vmem>>, %arg4: memref<8x1xf32, #tpu.memory_space<vmem>>, %arg5: memref<1x8x256xf32, #tpu.memory_space<vmem>>) attributes {dimension_semantics = [#tpu.dimension_semantics<parallel>, #tpu.dimension_semantics<parallel>], iteration_bounds = array<i64: 2, 2>, scalar_prefetch = 0 : i64, scratch_operands = 0 : i64, tpu.core_type = #tpu.core_type<tc>, window_params = [{transform_indices = @transform_0, window_bounds = array<i64: 1, 8, 256>}, {pipeline_mode = #tpu.pipeline_mode<synchronous>, transform_indices = @transform_1, window_bounds = array<i64: 8, 1>}, {pipeline_mode = #tpu.pipeline_mode<synchronous>, transform_indices = @transform_2, window_bounds = array<i64: 8, 1>}, {transform_indices = @transform_3, window_bounds = array<i64: 1, 8, 256>}]} {
    %c0 = arith.constant 0 : index
    %c0_0 = arith.constant 0 : index
    %c0_1 = arith.constant 0 : index
    %0 = vector.load %arg2[%c0, %c0_0, %c0_1] : memref<1x8x256xbf16, #tpu.memory_space<vmem>>, vector<1x8x256xbf16>
    %1 = arith.extf %0 : vector<1x8x256xbf16> to vector<1x8x256xf32>
    %c0_2 = arith.constant 0 : index
    %c0_3 = arith.constant 0 : index
    %2 = vector.load %arg3[%c0_2, %c0_3] : memref<8x1xf32, #tpu.memory_space<vmem>>, vector<8x1xf32>
    %3 = vector.shape_cast %2 : vector<8x1xf32> to vector<1x8x1xf32>
    %4 = vector.broadcast %3 : vector<1x8x1xf32> to vector<1x8x256xf32>
    %5 = arith.mulf %1, %4 : vector<1x8x256xf32>
    %c0_4 = arith.constant 0 : index
    %c0_5 = arith.constant 0 : index
    %6 = vector.load %arg4[%c0_4, %c0_5] : memref<8x1xf32, #tpu.memory_space<vmem>>, vector<8x1xf32>
    %7 = vector.shape_cast %6 : vector<8x1xf32> to vector<1x8x1xf32>
    %8 = vector.broadcast %7 : vector<1x8x1xf32> to vector<1x8x256xf32>
    %9 = arith.addf %5, %8 : vector<1x8x256xf32>
    %cst = arith.constant 0.000000e+00 : f32
    %10 = vector.broadcast %cst : f32 to vector<1x8x256xf32>
    %11 = arith.maximumf %9, %10 : vector<1x8x256xf32>
    %c0_6 = arith.constant 0 : index
    %c0_7 = arith.constant 0 : index
    %c0_8 = arith.constant 0 : index
    %12 = vector.load %arg5[%c0_6, %c0_7, %c0_8] : memref<1x8x256xf32, #tpu.memory_space<vmem>>, vector<1x8x256xf32>
    tpu.vector_store %arg5[%c0_6, %c0_7, %c0_8], %11 {strides = array<i32>} : memref<1x8x256xf32, #tpu.memory_space<vmem>>, vector<1x8x256xf32>,
    return
  }
  func.func @transform_0(%arg0: i32, %arg1: i32) -> (i32, i32, i32) {
    %c0_i32 = arith.constant 0 : i32
    %c0_i32_0 = arith.constant 0 : i32
    return %arg0, %c0_i32, %arg1 : i32, i32, i32
  }
  func.func @transform_1(%arg0: i32, %arg1: i32) -> (i32, i32) {
    %c0_i32 = arith.constant 0 : i32
    %c0_i32_0 = arith.constant 0 : i32
    %c0_i32_1 = arith.constant 0 : i32
    return %c0_i32, %c0_i32_0 : i32, i32
  }
  func.func @transform_2(%arg0: i32, %arg1: i32) -> (i32, i32) {
    %c0_i32 = arith.constant 0 : i32
    %c0_i32_0 = arith.constant 0 : i32
    %c0_i32_1 = arith.constant 0 : i32
    return %c0_i32, %c0_i32_0 : i32, i32
  }
  func.func @transform_3(%arg0: i32, %arg1: i32) -> (i32, i32, i32) {
    %c0_i32 = arith.constant 0 : i32
    %c0_i32_0 = arith.constant 0 : i32
    return %arg0, %c0_i32, %arg1 : i32, i32, i32
  }
}

</mosaic_0001>

<llo_original>
// kernel: conv_bn_relu_3d.3
$region0: #{conv_bn_relu_3d.3}
  #allocation0 [shape = 'u32[]', space=smem, size = 0x4, offset = 0x4, fixed_abs, tag = 'smem constant byte address 0x4 - core index']
  #allocation1 [shape = 'u32[144,128]{1,0:T(1,128)}', space=vmem, size = 0x12000, scoped, tag = 'internal scratch']
  %s0 = inlined_call_operand.vmem [shape: bf16[2,8,512], index: 0, kind: input, shape index: {}]
  %s1 = inlined_call_operand.vmem [shape: f32[8,1], index: 1, kind: input, shape index: {}]
  %s2 = inlined_call_operand.vmem [shape: f32[8,1], index: 2, kind: input, shape index: {}]
  %s3 = inlined_call_operand.vmem [shape: f32[2,8,512], index: 3, kind: output, shape index: {}]
  %s4 = sld [smem:[#allocation0]]
  $region45: #{conv_bn_relu_3d.3} parent=0
    _
  %s6 = ssub.s32 1, %s4
  %s7 = scalar_select 0, %s6, %s4
  loop: start=0, step=1, limit=6
  $region2: #{conv_bn_relu_3d.3} parent=0 // loop_pre_header
    _
  $region3: #{conv_bn_relu_3d.3} parent=0 // loop_header
    %s9 = sphi 0, %s13
    %p10 = scmp.ge.s32.totalorder %s9, 6
    %s16 = sphi 0, %s28
    %s17 = sphi 0, %s24
    %s18 = sphi 0, %s16
    %s19 = sphi 0, %s17
    %s20 = sphi 0, %s18
    %s21 = sphi 0, %s19
    %s33 = sphi 0, %s35
    %s36 = sphi 0, %s33
    %s37 = sphi 0, %s36
    %s53 = sphi 0, %s37
    %s57 = sphi 0, %s57
    %s59 = sphi 0, %s57
    %s60 = sphi 0, %s59
    %s74 = sphi 0, %s60
    %s78 = sphi 0, %s78
    %s80 = sphi 0, %s78
    %s81 = sphi 0, %s80
    %s95 = sphi 0, %s81
    %s103 = sphi 0, %s105
    %s106 = sphi 0, %s103
    %s107 = sphi 0, %s106
    %s123 = sphi 0, %s107
  $region4: #{conv_bn_relu_3d.3} parent=0 // loop_header_branch
    %12 = sbr.rel (%p10) target = $region8
  $region5: #{conv_bn_relu_3d.3} parent=0 // loop_body
    %s14 = ssub.s32 %s9, 1
    %s15 = ssub.s32 %s9, 2
    %s22 = sadd.s32 1, %s17
    %p23 = scmp.ge.s32.totalorder %s22, 2
    %s24 = scalar_select %p23, 0, %s22
    %s25 = sadd.s32 1, %s16
    %s26 = scalar_select %p23, %s25, %s16
    %p27 = scmp.ge.s32.totalorder %s26, 2
    %s28 = scalar_select %p27, 0, %s26
    %s29 = ssub.s32 %s16, %s28
    %s30 = ssub.s32 %s17, %s24
    %s31 = sor.u32 %s29, %s30
    %p32 = scmp.eq.s32.totalorder %s31, 0
    %s34 = sadd.s32 %s33, 1
    %s35 = scalar_select %p32, %s33, %s34
    %p38 = pneg %p32
    %p39 = scmp.eq.s32.totalorder %s9, 3
    %p40 = por %p38, %p39
    %p41 = scmp.ne.s32.totalorder %s33, %s36
    %p42 = scmp.eq.s32.totalorder %s9, 0
    %p43 = por %p41, %p42
    %p44 = scmp.ne.s32.totalorder %s33, %s36
    %p45 = scmp.eq.s32.totalorder %s14, 3
    %p46 = por %p44, %p45
    %p47 = scmp.ne.s32.totalorder %s36, %s37
    %p48 = scmp.eq.s32.totalorder %s14, 0
    %p49 = por %p47, %p48
    %p50 = scmp.ne.s32.totalorder %s36, %s37
    %p51 = scmp.eq.s32.totalorder %s15, 3
    %p52 = por %p50, %p51
    %p54 = scmp.ne.s32.totalorder %s37, %s53
    %p55 = scmp.eq.s32.totalorder %s15, 0
    %p56 = por %p54, %p55
    %s58 = sadd.s32 %s57, 1
    %p61 = scmp.eq.s32.totalorder %s9, 3
    %p62 = scmp.ne.s32.totalorder %s57, %s59
    %p63 = scmp.eq.s32.totalorder %s9, 0
    %p64 = por %p62, %p63
    %p65 = scmp.ne.s32.totalorder %s57, %s59
    %p66 = scmp.eq.s32.totalorder %s14, 3
    %p67 = por %p65, %p66
    %p68 = scmp.ne.s32.totalorder %s59, %s60
    %p69 = scmp.eq.s32.totalorder %s14, 0
    %p70 = por %p68, %p69
    %p71 = scmp.ne.s32.totalorder %s59, %s60
    %p72 = scmp.eq.s32.totalorder %s15, 3
    %p73 = por %p71, %p72
    %p75 = scmp.ne.s32.totalorder %s60, %s74
    %p76 = scmp.eq.s32.totalorder %s15, 0
    %p77 = por %p75, %p76
    %s79 = sadd.s32 %s78, 1
    %p82 = scmp.eq.s32.totalorder %s9, 3
    %p83 = scmp.ne.s32.totalorder %s78, %s80
    %p84 = scmp.eq.s32.totalorder %s9, 0
    %p85 = por %p83, %p84
    %p86 = scmp.ne.s32.totalorder %s78, %s80
    %p87 = scmp.eq.s32.totalorder %s14, 3
    %p88 = por %p86, %p87
    %p89 = scmp.ne.s32.totalorder %s80, %s81
    %p90 = scmp.eq.s32.totalorder %s14, 0
    %p91 = por %p89, %p90
    %p92 = scmp.ne.s32.totalorder %s80, %s81
    %p93 = scmp.eq.s32.totalorder %s15, 3
    %p94 = por %p92, %p93
    %p96 = scmp.ne.s32.totalorder %s81, %s95
    %p97 = scmp.eq.s32.totalorder %s15, 0
    %p98 = por %p96, %p97
    %s99 = ssub.s32 %s16, %s28
    %s100 = ssub.s32 %s17, %s24
    %s101 = sor.u32 %s99, %s100
    %p102 = scmp.eq.s32.totalorder %s101, 0
    %s104 = sadd.s32 %s103, 1
    %s105 = scalar_select %p102, %s103, %s104
    %p108 = pneg %p102
    %p109 = scmp.eq.s32.totalorder %s9, 3
    %p110 = por %p108, %p109
    %p111 = scmp.ne.s32.totalorder %s103, %s106
    %p112 = scmp.eq.s32.totalorder %s9, 0
    %p113 = por %p111, %p112
    %p114 = scmp.ne.s32.totalorder %s103, %s106
    %p115 = scmp.eq.s32.totalorder %s14, 3
    %p116 = por %p114, %p115
    %p117 = scmp.ne.s32.totalorder %s106, %s107
    %p118 = scmp.eq.s32.totalorder %s14, 0
    %p119 = por %p117, %p118
    %p120 = scmp.ne.s32.totalorder %s106, %s107
    %p121 = scmp.eq.s32.totalorder %s15, 3
    %p122 = por %p120, %p121
    %p124 = scmp.ne.s32.totalorder %s107, %s123
    %p125 = scmp.eq.s32.totalorder %s15, 0
    %p126 = por %p124, %p125
    %p127 = scmp.le.s32.totalorder 1, %s9
    %p128 = scmp.lt.s32.totalorder %s9, 5
    %p129 = pnand %p127, %p128
    %p130 = pneg %p129
    // Predicated region
    $region9: #{conv_bn_relu_3d.3} parent=5 // pred_check
      _
    $region10: #{conv_bn_relu_3d.3} parent=5 // pred_check_branch
      %132 = sbr.rel (%p129) target = $region12
    $region11: #{conv_bn_relu_3d.3} parent=5 // pred_region
      %s133 = ssub.s32 %s9, 1
      // Predicated region
      $region13: #{conv_bn_relu_3d.3} parent=11 // pred_check
        %p134 = pneg %p70
      $region14: #{conv_bn_relu_3d.3} parent=11 // pred_check_branch
        %136 = sbr.rel (%p134) target = $region16
      $region15: #{conv_bn_relu_3d.3} parent=11 // pred_region
        _
      $region16: #{conv_bn_relu_3d.3} parent=11 // pred_fallthru
        _
      // Predicated region
      $region17: #{conv_bn_relu_3d.3} parent=11 // pred_check
        %p137 = pneg %p91
      $region18: #{conv_bn_relu_3d.3} parent=11 // pred_check_branch
        %139 = sbr.rel (%p137) target = $region20
      $region19: #{conv_bn_relu_3d.3} parent=11 // pred_region
        _
      $region20: #{conv_bn_relu_3d.3} parent=11 // pred_fallthru
        _
    $region12: #{conv_bn_relu_3d.3} parent=5 // pred_fallthru
      _
    %p140 = scmp.lt.s32.totalorder %s9, 4
    // Predicated region
    $region21: #{conv_bn_relu_3d.3} parent=5 // pred_check
      %p141 = pneg %p140
    $region22: #{conv_bn_relu_3d.3} parent=5 // pred_check_branch
      %143 = sbr.rel (%p141) target = $region24
    $region23: #{conv_bn_relu_3d.3} parent=5 // pred_region
      // Predicated region
      $region25: #{conv_bn_relu_3d.3} parent=23 // pred_check
        %p144 = pneg %p43
      $region26: #{conv_bn_relu_3d.3} parent=23 // pred_check_branch
        %146 = sbr.rel (%p144) target = $region28
      $region27: #{conv_bn_relu_3d.3} parent=23 // pred_region
        %s147 = smul.u32 2, %s17
        %p148 = scmp.lt.s32.totalorder %s16, 1
        %s149 = scalar_select %p148, %s16, 1
        %p150 = scmp.lt.s32.totalorder %s147, 3
        %s151 = scalar_select %p150, %s147, 3
        %s152 = smul.addr %s149, 4
        %s153 = sadd.s32 %s151, %s152
        %s154 = smul.addr %s153, 4
        %s155 = scalar_lea.vmem %s0, %s154
        %s156 = smul.u32 2, %s17
      $region28: #{conv_bn_relu_3d.3} parent=23 // pred_fallthru
        _
    $region24: #{conv_bn_relu_3d.3} parent=5 // pred_fallthru
      _
    %p157 = scmp.le.s32.totalorder 1, %s9
    %p158 = scmp.lt.s32.totalorder %s9, 5
    %p159 = pnand %p157, %p158
    %p160 = pneg %p159
    // Predicated region
    $region29: #{conv_bn_relu_3d.3} parent=5 // pred_check
      _
    $region30: #{conv_bn_relu_3d.3} parent=5 // pred_check_branch
      %162 = sbr.rel (%p159) target = $region32
    $region31: #{conv_bn_relu_3d.3} parent=5 // pred_region
      %s163 = ssub.s32 %s9, 1
      %s164 = smul.u32 2, %s19
      %p165 = scmp.lt.s32.totalorder %s18, 1
      %s166 = scalar_select %p165, %s18, 1
      %p167 = scmp.lt.s32.totalorder %s164, 3
      %s168 = scalar_select %p167, %s164, 3
      %s169 = smul.addr %s166, 4
      %s170 = sadd.s32 %s168, %s169
      %s171 = smul.addr %s170, 4
      %s172 = scalar_lea.vmem %s0, %s171
      %p173 = pneg %p49
      %p174 = pneg %p46
      %p175 = pneg %p70
      %p176 = pneg %p67
      %p177 = pneg %p91
      %p178 = pneg %p88
      %p179 = pneg %p119
      %p180 = pneg %p116
      %s181 = smul.u32 2, %s19
      %p182 = scmp.lt.s32.totalorder %s18, 1
      %s183 = scalar_select %p182, %s18, 1
      %p184 = scmp.lt.s32.totalorder %s181, 3
      %s185 = scalar_select %p184, %s181, 3
      %s186 = smul.addr %s183, 4
      %s187 = sadd.s32 %s185, %s186
      %s188 = smul.addr %s187, 8
      %s189 = scalar_lea.vmem %s3, %s188
      %s190 = smul.u32 2, %s19
      %p191 = scmp.lt.s32.totalorder %s18, 1
      %s192 = scalar_select %p191, %s18, 1
      %p193 = scmp.lt.s32.totalorder %s190, 3
      %s194 = scalar_select %p193, %s190, 3
      %s195 = smul.addr %s192, 4
      %s196 = sadd.s32 %s194, %s195
      %s197 = smul.addr %s196, 4
      %s198 = scalar_lea.vmem %s0, %s197
      %s199 = smul.u32 2, %s19
      %s200 = smul.u32 2, %s19
      %p201 = scmp.lt.s32.totalorder %s18, 1
      %s202 = scalar_select %p201, %s18, 1
      %p203 = scmp.lt.s32.totalorder %s200, 3
      %s204 = scalar_select %p203, %s200, 3
      %s205 = smul.addr %s202, 4
      %s206 = sadd.s32 %s204, %s205
      %s207 = smul.addr %s206, 8
      %s208 = scalar_lea.vmem %s3, %s207
      %s209 = smul.u32 2, %s19
      %v210 = vld [vmem:[%s198] sm:$0xff]
      %v211 = vunpack.c.l.bf16 %v210
      %v212 = vunpack.c.h.bf16 %v210
      %v213 = vld [vmem:[%s1] sm:$0xff]
      %215 = vset.pattern.permute.xlu0 0
      %216 = vperm.xlu0 %215, %v213
      %v217 = vpop.permute.xlu0 %216
      %v219 = vmul.f32 %v211, %v217
      %v220 = vmul.f32 %v212, %v217
      %v221 = vld [vmem:[%s2] sm:$0xff]
      %223 = vset.pattern.permute.xlu0 0
      %224 = vperm.xlu0 %223, %v221
      %v225 = vpop.permute.xlu0 %224
      %v227 = vadd.f32 %v219, %v225
      %v228 = vadd.f32 %v220, %v225
      %v229 = vmax.f32 %v227, 0.0
      %v230 = vmax.f32 %v228, 0.0
      %231 = vst [vmem:[%s208] sm:$0xff] %v229
      %232 = vst [vmem:[%s208 + $0x8] sm:$0xff] %v230
      %s233 = smul.u32 2, %s19
      %p234 = scmp.lt.s32.totalorder %s18, 1
      %s235 = scalar_select %p234, %s18, 1
      %p236 = scmp.lt.s32.totalorder %s233, 3
      %s237 = scalar_select %p236, %s233, 3
      %s238 = smul.addr %s235, 4
      %s239 = sadd.s32 %s237, %s238
      %s240 = smul.addr %s239, 8
      %s241 = scalar_lea.vmem %s3, %s240
      // Predicated region
      $region33: #{conv_bn_relu_3d.3} parent=31 // pred_check
        %p242 = pneg %p116
      $region34: #{conv_bn_relu_3d.3} parent=31 // pred_check_branch
        %244 = sbr.rel (%p242) target = $region36
      $region35: #{conv_bn_relu_3d.3} parent=31 // pred_region
        %s245 = smul.u32 2, %s19
      $region36: #{conv_bn_relu_3d.3} parent=31 // pred_fallthru
        _
    $region32: #{conv_bn_relu_3d.3} parent=5 // pred_fallthru
      _
    %p246 = scmp.le.s32.totalorder 2, %s9
    // Predicated region
    $region37: #{conv_bn_relu_3d.3} parent=5 // pred_check
      %p247 = pneg %p246
    $region38: #{conv_bn_relu_3d.3} parent=5 // pred_check_branch
      %249 = sbr.rel (%p247) target = $region40
    $region39: #{conv_bn_relu_3d.3} parent=5 // pred_region
      %s250 = ssub.s32 %s9, 2
      // Predicated region
      $region41: #{conv_bn_relu_3d.3} parent=39 // pred_check
        %p251 = pneg %p122
      $region42: #{conv_bn_relu_3d.3} parent=39 // pred_check_branch
        %253 = sbr.rel (%p251) target = $region44
      $region43: #{conv_bn_relu_3d.3} parent=39 // pred_region
        %s254 = smul.u32 2, %s21
        %p255 = scmp.lt.s32.totalorder %s20, 1
        %s256 = scalar_select %p255, %s20, 1
        %p257 = scmp.lt.s32.totalorder %s254, 3
        %s258 = scalar_select %p257, %s254, 3
        %s259 = smul.addr %s256, 4
        %s260 = sadd.s32 %s258, %s259
        %s261 = smul.addr %s260, 8
        %s262 = scalar_lea.vmem %s3, %s261
      $region44: #{conv_bn_relu_3d.3} parent=39 // pred_fallthru
        _
    $region40: #{conv_bn_relu_3d.3} parent=5 // pred_fallthru
      _
  $region6: #{conv_bn_relu_3d.3} parent=0 // loop_footer
    %s13 = sadd.s32 1, %s9
  $region7: #{conv_bn_relu_3d.3} parent=0 // loop_footer_branch
    %8 = sbr.rel target = $region3
  $region8: #{conv_bn_relu_3d.3} parent=0 // loop_exit
    _

// kernel: conv_bn_relu_3d.2
$region0: #{conv_bn_relu_3d.2}
  #allocation0 [shape = 'u32[]', space=smem, size = 0x4, offset = 0x4, fixed_abs, tag = 'smem constant byte address 0x4 - core index']
  #allocation1 [shape = 'u32[144,128]{1,0:T(1,128)}', space=vmem, size = 0x12000, scoped, tag = 'internal scratch']
  #allocation2 [shape = 'bf16[256,108]{1,0:T(16,128)(2,1)}', space=vmem, size = 0x10000, scoped, tag = 'scratch operand']
  %s0 = inlined_call_operand.vmem [shape: bf16[2,10,10,10,4], index: 0, kind: input, shape index: {}, may-alias: {0,1}]
  %s1 = inlined_call_operand.vmem [shape: bf16[2,10,10,10,4], index: 1, kind: input, shape index: {}, may-alias: {0,1}]
  %s2 = inlined_call_operand.vmem [shape: bf16[8,108], index: 2, kind: input, shape index: {}]
  %s3 = inlined_call_operand.vmem [shape: bf16[2,8,512], index: 3, kind: output, shape index: {0}]
  %s4 = inlined_call_operand.vmem [shape: f32[2,2,8,2], index: 4, kind: output, shape index: {1}]
  %5 = xla_tuple %s3, %s4
  %s6 = sld [smem:[#allocation0]]
  $region53: #{conv_bn_relu_3d.2} parent=0
    _
  %s8 = ssub.s32 1, %s6
  %s9 = scalar_select 0, %s8, %s6
  loop: start=0, step=1, limit=6
  $region2: #{conv_bn_relu_3d.2} parent=0 // loop_pre_header
    _
  $region3: #{conv_bn_relu_3d.2} parent=0 // loop_header
    %s11 = sphi 0, %s15
    %p12 = scmp.ge.s32.totalorder %s11, 6
    %s18 = sphi 0, %s30
    %s19 = sphi 0, %s26
    %s20 = sphi 0, %s18
    %s21 = sphi 0, %s19
    %s22 = sphi 0, %s20
    %s23 = sphi 0, %s21
    %s35 = sphi 0, %s37
    %s38 = sphi 0, %s35
    %s39 = sphi 0, %s38
    %s55 = sphi 0, %s39
    %s67 = sphi 0, %s69
    %s70 = sphi 0, %s67
    %s71 = sphi 0, %s70
    %s87 = sphi 0, %s71
    %s91 = sphi 0, %s91
    %s93 = sphi 0, %s91
    %s94 = sphi 0, %s93
    %s108 = sphi 0, %s94
    %s116 = sphi 0, %s118
    %s119 = sphi 0, %s116
    %s120 = sphi 0, %s119
    %s136 = sphi 0, %s120
    %s144 = sphi 0, %s146
    %s147 = sphi 0, %s144
    %s148 = sphi 0, %s147
    %s164 = sphi 0, %s148
  $region4: #{conv_bn_relu_3d.2} parent=0 // loop_header_branch
    %14 = sbr.rel (%p12) target = $region8
  $region5: #{conv_bn_relu_3d.2} parent=0 // loop_body
    %s16 = ssub.s32 %s11, 1
    %s17 = ssub.s32 %s11, 2
    %s24 = sadd.s32 1, %s19
    %p25 = scmp.ge.s32.totalorder %s24, 2
    %s26 = scalar_select %p25, 0, %s24
    %s27 = sadd.s32 1, %s18
    %s28 = scalar_select %p25, %s27, %s18
    %p29 = scmp.ge.s32.totalorder %s28, 2
    %s30 = scalar_select %p29, 0, %s28
    %s31 = ssub.s32 %s18, %s30
    %s32 = ssub.s32 %s19, %s26
    %s33 = sor.u32 %s31, %s32
    %p34 = scmp.eq.s32.totalorder %s33, 0
    %s36 = sadd.s32 %s35, 1
    %s37 = scalar_select %p34, %s35, %s36
    %p40 = pneg %p34
    %p41 = scmp.eq.s32.totalorder %s11, 3
    %p42 = por %p40, %p41
    %p43 = scmp.ne.s32.totalorder %s35, %s38
    %p44 = scmp.eq.s32.totalorder %s11, 0
    %p45 = por %p43, %p44
    %p46 = scmp.ne.s32.totalorder %s35, %s38
    %p47 = scmp.eq.s32.totalorder %s16, 3
    %p48 = por %p46, %p47
    %p49 = scmp.ne.s32.totalorder %s38, %s39
    %p50 = scmp.eq.s32.totalorder %s16, 0
    %p51 = por %p49, %p50
    %p52 = scmp.ne.s32.totalorder %s38, %s39
    %p53 = scmp.eq.s32.totalorder %s17, 3
    %p54 = por %p52, %p53
    %p56 = scmp.ne.s32.totalorder %s39, %s55
    %p57 = scmp.eq.s32.totalorder %s17, 0
    %p58 = por %p56, %p57
    %s59 = sadd.s32 %s19, 1
    %s60 = smul.u32 %s59, 2
    %s61 = sadd.s32 %s26, 1
    %s62 = smul.u32 %s61, 2
    %s63 = ssub.s32 %s18, %s30
    %s64 = ssub.s32 %s60, %s62
    %s65 = sor.u32 %s63, %s64
    %p66 = scmp.eq.s32.totalorder %s65, 0
    %s68 = sadd.s32 %s67, 1
    %s69 = scalar_select %p66, %s67, %s68
    %p72 = pneg %p66
    %p73 = scmp.eq.s32.totalorder %s11, 3
    %p74 = por %p72, %p73
    %p75 = scmp.ne.s32.totalorder %s67, %s70
    %p76 = scmp.eq.s32.totalorder %s11, 0
    %p77 = por %p75, %p76
    %p78 = scmp.ne.s32.totalorder %s67, %s70
    %p79 = scmp.eq.s32.totalorder %s16, 3
    %p80 = por %p78, %p79
    %p81 = scmp.ne.s32.totalorder %s70, %s71
    %p82 = scmp.eq.s32.totalorder %s16, 0
    %p83 = por %p81, %p82
    %p84 = scmp.ne.s32.totalorder %s70, %s71
    %p85 = scmp.eq.s32.totalorder %s17, 3
    %p86 = por %p84, %p85
    %p88 = scmp.ne.s32.totalorder %s71, %s87
    %p89 = scmp.eq.s32.totalorder %s17, 0
    %p90 = por %p88, %p89
    %s92 = sadd.s32 %s91, 1
    %p95 = scmp.eq.s32.totalorder %s11, 3
    %p96 = scmp.ne.s32.totalorder %s91, %s93
    %p97 = scmp.eq.s32.totalorder %s11, 0
    %p98 = por %p96, %p97
    %p99 = scmp.ne.s32.totalorder %s91, %s93
    %p100 = scmp.eq.s32.totalorder %s16, 3
    %p101 = por %p99, %p100
    %p102 = scmp.ne.s32.totalorder %s93, %s94
    %p103 = scmp.eq.s32.totalorder %s16, 0
    %p104 = por %p102, %p103
    %p105 = scmp.ne.s32.totalorder %s93, %s94
    %p106 = scmp.eq.s32.totalorder %s17, 3
    %p107 = por %p105, %p106
    %p109 = scmp.ne.s32.totalorder %s94, %s108
    %p110 = scmp.eq.s32.totalorder %s17, 0
    %p111 = por %p109, %p110
    %s112 = ssub.s32 %s18, %s30
    %s113 = ssub.s32 %s19, %s26
    %s114 = sor.u32 %s112, %s113
    %p115 = scmp.eq.s32.totalorder %s114, 0
    %s117 = sadd.s32 %s116, 1
    %s118 = scalar_select %p115, %s116, %s117
    %p121 = pneg %p115
    %p122 = scmp.eq.s32.totalorder %s11, 3
    %p123 = por %p121, %p122
    %p124 = scmp.ne.s32.totalorder %s116, %s119
    %p125 = scmp.eq.s32.totalorder %s11, 0
    %p126 = por %p124, %p125
    %p127 = scmp.ne.s32.totalorder %s116, %s119
    %p128 = scmp.eq.s32.totalorder %s16, 3
    %p129 = por %p127, %p128
    %p130 = scmp.ne.s32.totalorder %s119, %s120
    %p131 = scmp.eq.s32.totalorder %s16, 0
    %p132 = por %p130, %p131
    %p133 = scmp.ne.s32.totalorder %s119, %s120
    %p134 = scmp.eq.s32.totalorder %s17, 3
    %p135 = por %p133, %p134
    %p137 = scmp.ne.s32.totalorder %s120, %s136
    %p138 = scmp.eq.s32.totalorder %s17, 0
    %p139 = por %p137, %p138
    %s140 = ssub.s32 %s18, %s30
    %s141 = ssub.s32 %s19, %s26
    %s142 = sor.u32 %s140, %s141
    %p143 = scmp.eq.s32.totalorder %s142, 0
    %s145 = sadd.s32 %s144, 1
    %s146 = scalar_select %p143, %s144, %s145
    %p149 = pneg %p143
    %p150 = scmp.eq.s32.totalorder %s11, 3
    %p151 = por %p149, %p150
    %p152 = scmp.ne.s32.totalorder %s144, %s147
    %p153 = scmp.eq.s32.totalorder %s11, 0
    %p154 = por %p152, %p153
    %p155 = scmp.ne.s32.totalorder %s144, %s147
    %p156 = scmp.eq.s32.totalorder %s16, 3
    %p157 = por %p155, %p156
    %p158 = scmp.ne.s32.totalorder %s147, %s148
    %p159 = scmp.eq.s32.totalorder %s16, 0
    %p160 = por %p158, %p159
    %p161 = scmp.ne.s32.totalorder %s147, %s148
    %p162 = scmp.eq.s32.totalorder %s17, 3
    %p163 = por %p161, %p162
    %p165 = scmp.ne.s32.totalorder %s148, %s164
    %p166 = scmp.eq.s32.totalorder %s17, 0
    %p167 = por %p165, %p166
    %p168 = scmp.le.s32.totalorder 1, %s11
    %p169 = scmp.lt.s32.totalorder %s11, 5
    %p170 = pnand %p168, %p169
    %p171 = pneg %p170
    // Predicated region
    $region9: #{conv_bn_relu_3d.2} parent=5 // pred_check
      _
    $region10: #{conv_bn_relu_3d.2} parent=5 // pred_check_branch
      %173 = sbr.rel (%p170) target = $region12
    $region11: #{conv_bn_relu_3d.2} parent=5 // pred_region
      %s174 = ssub.s32 %s11, 1
      // Predicated region
      $region13: #{conv_bn_relu_3d.2} parent=11 // pred_check
        %p175 = pneg %p104
      $region14: #{conv_bn_relu_3d.2} parent=11 // pred_check_branch
        %177 = sbr.rel (%p175) target = $region16
      $region15: #{conv_bn_relu_3d.2} parent=11 // pred_region
        _
      $region16: #{conv_bn_relu_3d.2} parent=11 // pred_fallthru
        _
    $region12: #{conv_bn_relu_3d.2} parent=5 // pred_fallthru
      _
    %p178 = scmp.lt.s32.totalorder %s11, 4
    // Predicated region
    $region17: #{conv_bn_relu_3d.2} parent=5 // pred_check
      %p179 = pneg %p178
    $region18: #{conv_bn_relu_3d.2} parent=5 // pred_check_branch
      %181 = sbr.rel (%p179) target = $region20
    $region19: #{conv_bn_relu_3d.2} parent=5 // pred_region
      // Predicated region
      $region21: #{conv_bn_relu_3d.2} parent=19 // pred_check
        %p182 = pneg %p45
      $region22: #{conv_bn_relu_3d.2} parent=19 // pred_check_branch
        %184 = sbr.rel (%p182) target = $region24
      $region23: #{conv_bn_relu_3d.2} parent=19 // pred_region
        %s185 = smul.u32 4, %s19
        %s186 = ssub.s32 10, %s185
        %p187 = scmp.lt.s32.totalorder %s186, 4
        %s188 = scalar_select %p187, %s186, 4
        %s189 = smul.u32 64, %s188
        %s190 = smul.u32 %s189, 10
        %s191 = smul.u32 %s190, 2
        %p192 = scmp.lt.s32.totalorder %s18, 1
        %s193 = scalar_select %p192, %s18, 1
        %p194 = scmp.lt.s32.totalorder %s185, 9
        %s195 = scalar_select %p194, %s185, 9
        %s196 = smul.addr %s195, 20
        %s197 = smul.addr %s193, 200
        %s198 = sadd.s32 %s196, %s197
        %s199 = smul.addr %s198, 4
        %s200 = scalar_lea.vmem %s0, %s199
        %s201 = smul.u32 4, %s19
        %s202 = ssub.s32 10, %s201
        %p203 = scmp.lt.s32.totalorder %s202, 4
        %s204 = scalar_select %p203, %s202, 4
        %s205 = smul.u32 64, %s204
        %s206 = smul.u32 %s205, 10
        %s207 = smul.u32 %s206, 2
      $region24: #{conv_bn_relu_3d.2} parent=19 // pred_fallthru
        _
      // Predicated region
      $region25: #{conv_bn_relu_3d.2} parent=19 // pred_check
        %p208 = pneg %p77
      $region26: #{conv_bn_relu_3d.2} parent=19 // pred_check_branch
        %210 = sbr.rel (%p208) target = $region28
      $region27: #{conv_bn_relu_3d.2} parent=19 // pred_region
        %s211 = sadd.s32 %s19, 1
        %s212 = smul.u32 %s211, 2
        %s213 = smul.u32 2, %s212
        %p214 = scmp.lt.s32.totalorder %s18, 1
        %s215 = scalar_select %p214, %s18, 1
        %p216 = scmp.lt.s32.totalorder %s213, 9
        %s217 = scalar_select %p216, %s213, 9
        %s218 = smul.addr %s217, 20
        %s219 = smul.addr %s215, 200
        %s220 = sadd.s32 %s218, %s219
        %s221 = smul.addr %s220, 4
        %s222 = scalar_lea.vmem %s1, %s221
        %s223 = sadd.s32 %s19, 1
        %s224 = smul.u32 %s223, 2
        %s225 = smul.u32 2, %s224
      $region28: #{conv_bn_relu_3d.2} parent=19 // pred_fallthru
        _
    $region20: #{conv_bn_relu_3d.2} parent=5 // pred_fallthru
      _
    %p226 = scmp.le.s32.totalorder 1, %s11
    %p227 = scmp.lt.s32.totalorder %s11, 5
    %p228 = pnand %p226, %p227
    %p229 = pneg %p228
    // Predicated region
    $region29: #{conv_bn_relu_3d.2} parent=5 // pred_check
      _
    $region30: #{conv_bn_relu_3d.2} parent=5 // pred_check_branch
      %231 = sbr.rel (%p228) target = $region32
    $region31: #{conv_bn_relu_3d.2} parent=5 // pred_region
      %s232 = ssub.s32 %s11, 1
      %s233 = smul.u32 4, %s21
      %s234 = ssub.s32 10, %s233
      %p235 = scmp.lt.s32.totalorder %s234, 4
      %s236 = scalar_select %p235, %s234, 4
      %s237 = smul.u32 64, %s236
      %s238 = smul.u32 %s237, 10
      %s239 = smul.u32 %s238, 2
      %p240 = scmp.lt.s32.totalorder %s20, 1
      %s241 = scalar_select %p240, %s20, 1
      %p242 = scmp.lt.s32.totalorder %s233, 9
      %s243 = scalar_select %p242, %s233, 9
      %s244 = smul.addr %s243, 20
      %s245 = smul.addr %s241, 200
      %s246 = sadd.s32 %s244, %s245
      %s247 = smul.addr %s246, 4
      %s248 = scalar_lea.vmem %s0, %s247
      %p249 = pneg %p51
      %p250 = pneg %p48
      %s251 = sadd.s32 %s21, 1
      %s252 = smul.u32 %s251, 2
      %s253 = smul.u32 2, %s252
      %p254 = scmp.lt.s32.totalorder %s20, 1
      %s255 = scalar_select %p254, %s20, 1
      %p256 = scmp.lt.s32.totalorder %s253, 9
      %s257 = scalar_select %p256, %s253, 9
      %s258 = smul.addr %s257, 20
      %s259 = smul.addr %s255, 200
      %s260 = sadd.s32 %s258, %s259
      %s261 = smul.addr %s260, 4
      %s262 = scalar_lea.vmem %s1, %s261
      %p263 = pneg %p83
      %p264 = pneg %p80
      %p265 = pneg %p104
      %p266 = pneg %p101
      %p267 = pneg %p132
      %p268 = pneg %p129
      %s269 = smul.u32 2, %s21
      %p270 = scmp.lt.s32.totalorder %s20, 1
      %s271 = scalar_select %p270, %s20, 1
      %p272 = scmp.lt.s32.totalorder %s269, 3
      %s273 = scalar_select %p272, %s269, 3
      %s274 = smul.addr %s271, 4
      %s275 = sadd.s32 %s273, %s274
      %s276 = smul.addr %s275, 4
      %s277 = scalar_lea.vmem %s3, %s276
      %p278 = pneg %p160
      %p279 = pneg %p157
      %p280 = scmp.lt.s32.totalorder %s20, 1
      %s281 = scalar_select %p280, %s20, 1
      %p282 = scmp.lt.s32.totalorder %s21, 1
      %s283 = scalar_select %p282, %s21, 1
      %s284 = smul.addr %s281, 2
      %s285 = sadd.s32 %s283, %s284
      %s286 = smul.addr %s285, 8
      %s287 = scalar_lea.vmem %s4, %s286
      %s288 = smul.u32 4, %s21
      %s289 = ssub.s32 10, %s288
      %p290 = scmp.lt.s32.totalorder %s289, 4
      %s291 = scalar_select %p290, %s289, 4
      %s292 = smul.u32 64, %s291
      %s293 = smul.u32 %s292, 10
      %s294 = smul.u32 %s293, 2
      %p295 = scmp.lt.s32.totalorder %s20, 1
      %s296 = scalar_select %p295, %s20, 1
      %p297 = scmp.lt.s32.totalorder %s288, 9
      %s298 = scalar_select %p297, %s288, 9
      %s299 = smul.addr %s298, 20
      %s300 = smul.addr %s296, 200
      %s301 = sadd.s32 %s299, %s300
      %s302 = smul.addr %s301, 4
      %s303 = scalar_lea.vmem %s0, %s302
      %s304 = smul.u32 4, %s21
      %s305 = ssub.s32 10, %s304
      %p306 = scmp.lt.s32.totalorder %s305, 4
      %s307 = scalar_select %p306, %s305, 4
      %s308 = smul.u32 64, %s307
      %s309 = smul.u32 %s308, 10
      %s310 = smul.u32 %s309, 2
      %s311 = sadd.s32 %s21, 1
      %s312 = smul.u32 %s311, 2
      %s313 = smul.u32 2, %s312
      %p314 = scmp.lt.s32.totalorder %s20, 1
      %s315 = scalar_select %p314, %s20, 1
      %p316 = scmp.lt.s32.totalorder %s313, 9
      %s317 = scalar_select %p316, %s313, 9
      %s318 = smul.addr %s317, 20
      %s319 = smul.addr %s315, 200
      %s320 = sadd.s32 %s318, %s319
      %s321 = smul.addr %s320, 4
      %s322 = scalar_lea.vmem %s1, %s321
      %s323 = sadd.s32 %s21, 1
      %s324 = smul.u32 %s323, 2
      %s325 = smul.u32 2, %s324
      %s326 = smul.u32 2, %s21
      %p327 = scmp.lt.s32.totalorder %s20, 1
      %s328 = scalar_select %p327, %s20, 1
      %p329 = scmp.lt.s32.totalorder %s326, 3
      %s330 = scalar_select %p329, %s326, 3
      %s331 = smul.addr %s328, 4
      %s332 = sadd.s32 %s330, %s331
      %s333 = smul.addr %s332, 4
      %s334 = scalar_lea.vmem %s3, %s333
      %s335 = smul.u32 2, %s21
      %p336 = scmp.lt.s32.totalorder %s20, 1
      %s337 = scalar_select %p336, %s20, 1
      %p338 = scmp.lt.s32.totalorder %s21, 1
      %s339 = scalar_select %p338, %s21, 1
      %s340 = smul.addr %s337, 2
      %s341 = sadd.s32 %s339, %s340
      %s342 = smul.addr %s341, 8
      %s343 = scalar_lea.vmem %s4, %s342
      %v345 = vld [vmem:[%s303] sm:$0xf]
      %v346 = vld [vmem:[%s303 + $0x4] sm:$0x1]
      %v347 = vld [vmem:[%s303 + $0x8] sm:$0xf]
      %v348 = vld [vmem:[%s303 + $0xc] sm:$0x1]
      %v349 = vld [vmem:[%s303 + $0x10] sm:$0xf]
      %v350 = vld [vmem:[%s303 + $0x14] sm:$0x1]
      %v351 = vld [vmem:[%s303 + $0x18] sm:$0xf]
      %v352 = vld [vmem:[%s303 + $0x1c] sm:$0x1]
      %v353 = vld [vmem:[%s303 + $0x20] sm:$0xf]
      %v354 = vld [vmem:[%s303 + $0x24] sm:$0x1]
      %v355 = vld [vmem:[%s303 + $0x28] sm:$0xf]
      %v356 = vld [vmem:[%s303 + $0x2c] sm:$0x1]
      %v357 = vld [vmem:[%s303 + $0x30] sm:$0xf]
      %v358 = vld [vmem:[%s303 + $0x34] sm:$0x1]
      %v359 = vld [vmem:[%s303 + $0x38] sm:$0xf]
      %v360 = vld [vmem:[%s303 + $0x3c] sm:$0x1]
      %v361 = vld [vmem:[%s303 + $0x40] sm:$0xf]
      %v362 = vld [vmem:[%s303 + $0x44] sm:$0x1]
      %v363 = vld [vmem:[%s303 + $0x48] sm:$0xf]
      %v364 = vld [vmem:[%s303 + $0x4c] sm:$0x1]
      %v365 = vld [vmem:[%s303 + $0x50] sm:$0xf]
      %v366 = vld [vmem:[%s303 + $0x54] sm:$0x1]
      %v367 = vld [vmem:[%s303 + $0x58] sm:$0xf]
      %v368 = vld [vmem:[%s303 + $0x5c] sm:$0x1]
      %v369 = vld [vmem:[%s303 + $0x60] sm:$0xf]
      %v370 = vld [vmem:[%s303 + $0x64] sm:$0x1]
      %v371 = vld [vmem:[%s303 + $0x68] sm:$0xf]
      %v372 = vld [vmem:[%s303 + $0x6c] sm:$0x1]
      %v373 = vld [vmem:[%s303 + $0x70] sm:$0xf]
      %v374 = vld [vmem:[%s303 + $0x74] sm:$0x1]
      %v375 = vld [vmem:[%s303 + $0x78] sm:$0xf]
      %v376 = vld [vmem:[%s303 + $0x7c] sm:$0x1]
      %v377 = vld [vmem:[%s303 + $0x80] sm:$0xf]
      %v378 = vld [vmem:[%s303 + $0x84] sm:$0x1]
      %v379 = vld [vmem:[%s303 + $0x88] sm:$0xf]
      %v380 = vld [vmem:[%s303 + $0x8c] sm:$0x1]
      %v381 = vld [vmem:[%s303 + $0x90] sm:$0xf]
      %v382 = vld [vmem:[%s303 + $0x94] sm:$0x1]
      %v383 = vld [vmem:[%s303 + $0x98] sm:$0xf]
      %v384 = vld [vmem:[%s303 + $0x9c] sm:$0x1]
      %v385 = vld [vmem:[%s303 + $0xa0] sm:$0xf]
      %v386 = vld [vmem:[%s303 + $0xa4] sm:$0x1]
      %v387 = vld [vmem:[%s303 + $0xa8] sm:$0xf]
      %v388 = vld [vmem:[%s303 + $0xac] sm:$0x1]
      %v389 = vld [vmem:[%s303 + $0xb0] sm:$0xf]
      %v390 = vld [vmem:[%s303 + $0xb4] sm:$0x1]
      %v391 = vld [vmem:[%s303 + $0xb8] sm:$0xf]
      %v392 = vld [vmem:[%s303 + $0xbc] sm:$0x1]
      %v393 = vld [vmem:[%s303 + $0xc0] sm:$0xf]
      %v394 = vld [vmem:[%s303 + $0xc4] sm:$0x1]
      %v395 = vld [vmem:[%s303 + $0xc8] sm:$0xf]
      %v396 = vld [vmem:[%s303 + $0xcc] sm:$0x1]
      %v397 = vld [vmem:[%s303 + $0xd0] sm:$0xf]
      %v398 = vld [vmem:[%s303 + $0xd4] sm:$0x1]
      %v399 = vld [vmem:[%s303 + $0xd8] sm:$0xf]
      %v400 = vld [vmem:[%s303 + $0xdc] sm:$0x1]
      %v401 = vld [vmem:[%s303 + $0xe0] sm:$0xf]
      %v402 = vld [vmem:[%s303 + $0xe4] sm:$0x1]
      %v403 = vld [vmem:[%s303 + $0xe8] sm:$0xf]
      %v404 = vld [vmem:[%s303 + $0xec] sm:$0x1]
      %v405 = vld [vmem:[%s303 + $0xf0] sm:$0xf]
      %v406 = vld [vmem:[%s303 + $0xf4] sm:$0x1]
      %v407 = vld [vmem:[%s303 + $0xf8] sm:$0xf]
      %v408 = vld [vmem:[%s303 + $0xfc] sm:$0x1]
      %v409 = vld [vmem:[%s303 + $0x100] sm:$0xf]
      %v410 = vld [vmem:[%s303 + $0x104] sm:$0x1]
      %v411 = vld [vmem:[%s303 + $0x108] sm:$0xf]
      %v412 = vld [vmem:[%s303 + $0x10c] sm:$0x1]
      %v413 = vld [vmem:[%s303 + $0x110] sm:$0xf]
      %v414 = vld [vmem:[%s303 + $0x114] sm:$0x1]
      %v415 = vld [vmem:[%s303 + $0x118] sm:$0xf]
      %v416 = vld [vmem:[%s303 + $0x11c] sm:$0x1]
      %v417 = vld [vmem:[%s303 + $0x120] sm:$0xf]
      %v418 = vld [vmem:[%s303 + $0x124] sm:$0x1]
      %v419 = vld [vmem:[%s303 + $0x128] sm:$0xf]
      %v420 = vld [vmem:[%s303 + $0x12c] sm:$0x1]
      %v421 = vld [vmem:[%s303 + $0x130] sm:$0xf]
      %v422 = vld [vmem:[%s303 + $0x134] sm:$0x1]
      %v423 = vld [vmem:[%s303 + $0x138] sm:$0xf]
      %v424 = vld [vmem:[%s303 + $0x13c] sm:$0x1]
      %v425 = vld [vmem:[%s322] sm:$0xf]
      %v426 = vld [vmem:[%s322 + $0x4] sm:$0x1]
      %v427 = vld [vmem:[%s322 + $0x8] sm:$0xf]
      %v428 = vld [vmem:[%s322 + $0xc] sm:$0x1]
      %v429 = vld [vmem:[%s322 + $0x10] sm:$0xf]
      %v430 = vld [vmem:[%s322 + $0x14] sm:$0x1]
      %v431 = vld [vmem:[%s322 + $0x18] sm:$0xf]
      %v432 = vld [vmem:[%s322 + $0x1c] sm:$0x1]
      %v433 = vld [vmem:[%s322 + $0x20] sm:$0xf]
      %v434 = vld [vmem:[%s322 + $0x24] sm:$0x1]
      %v435 = vld [vmem:[%s322 + $0x28] sm:$0xf]
      %v436 = vld [vmem:[%s322 + $0x2c] sm:$0x1]
      %v437 = vld [vmem:[%s322 + $0x30] sm:$0xf]
      %v438 = vld [vmem:[%s322 + $0x34] sm:$0x1]
      %v439 = vld [vmem:[%s322 + $0x38] sm:$0xf]
      %v440 = vld [vmem:[%s322 + $0x3c] sm:$0x1]
      %v441 = vld [vmem:[%s322 + $0x40] sm:$0xf]
      %v442 = vld [vmem:[%s322 + $0x44] sm:$0x1]
      %v443 = vld [vmem:[%s322 + $0x48] sm:$0xf]
      %v444 = vld [vmem:[%s322 + $0x4c] sm:$0x1]
      %v445 = vld [vmem:[%s322 + $0x50] sm:$0xf]
      %v446 = vld [vmem:[%s322 + $0x54] sm:$0x1]
      %v447 = vld [vmem:[%s322 + $0x58] sm:$0xf]
      %v448 = vld [vmem:[%s322 + $0x5c] sm:$0x1]
      %v449 = vld [vmem:[%s322 + $0x60] sm:$0xf]
      %v450 = vld [vmem:[%s322 + $0x64] sm:$0x1]
      %v451 = vld [vmem:[%s322 + $0x68] sm:$0xf]
      %v452 = vld [vmem:[%s322 + $0x6c] sm:$0x1]
      %v453 = vld [vmem:[%s322 + $0x70] sm:$0xf]
      %v454 = vld [vmem:[%s322 + $0x74] sm:$0x1]
      %v455 = vld [vmem:[%s322 + $0x78] sm:$0xf]
      %v456 = vld [vmem:[%s322 + $0x7c] sm:$0x1]
      %v457 = vld [vmem:[%s322 + $0x80] sm:$0xf]
      %v458 = vld [vmem:[%s322 + $0x84] sm:$0x1]
      %v459 = vld [vmem:[%s322 + $0x88] sm:$0xf]
      %v460 = vld [vmem:[%s322 + $0x8c] sm:$0x1]
      %v461 = vld [vmem:[%s322 + $0x90] sm:$0xf]
      %v462 = vld [vmem:[%s322 + $0x94] sm:$0x1]
      %v463 = vld [vmem:[%s322 + $0x98] sm:$0xf]
      %v464 = vld [vmem:[%s322 + $0x9c] sm:$0x1]
      %v497 = vunpack.c.l.b16 %v345
      %v498 = vunpack.c.l.b16 %v347
      %v499 = vunpack.c.l.b16 %v349
      %v500 = vunpack.c.l.b16 %v351
      %v501 = vunpack.c.l.b16 %v353
      %v502 = vunpack.c.l.b16 %v355
      %v503 = vunpack.c.l.b16 %v357
      %v504 = vunpack.c.l.b16 %v359
      %v505 = vunpack.c.l.b16 %v365
      %v506 = vunpack.c.l.b16 %v367
      %v507 = vunpack.c.l.b16 %v369
      %v508 = vunpack.c.l.b16 %v371
      %v509 = vunpack.c.l.b16 %v373
      %v510 = vunpack.c.l.b16 %v375
      %v511 = vunpack.c.l.b16 %v377
      %v512 = vunpack.c.l.b16 %v379
      %v513 = vunpack.c.l.b16 %v385
      %v514 = vunpack.c.l.b16 %v387
      %v515 = vunpack.c.l.b16 %v389
      %v516 = vunpack.c.l.b16 %v391
      %v517 = vunpack.c.l.b16 %v393
      %v518 = vunpack.c.l.b16 %v395
      %v519 = vunpack.c.l.b16 %v397
      %v520 = vunpack.c.l.b16 %v399
      %v521 = vunpack.c.l.b16 %v405
      %v522 = vunpack.c.l.b16 %v407
      %v523 = vunpack.c.l.b16 %v409
      %v524 = vunpack.c.l.b16 %v411
      %v525 = vunpack.c.l.b16 %v413
      %v526 = vunpack.c.l.b16 %v415
      %v527 = vunpack.c.l.b16 %v417
      %v528 = vunpack.c.l.b16 %v419
      %v529 = vpack.c.b16 %v498, %v497
      %v530 = vpack.c.b16 %v500, %v499
      %v531 = vpack.c.b16 %v502, %v501
      %v532 = vpack.c.b16 %v504, %v503
      %v533 = vpack.c.b16 %v506, %v505
      %v534 = vpack.c.b16 %v508, %v507
      %v535 = vpack.c.b16 %v510, %v509
      %v536 = vpack.c.b16 %v512, %v511
      %v537 = vpack.c.b16 %v514, %v513
      %v538 = vpack.c.b16 %v516, %v515
      %v539 = vpack.c.b16 %v518, %v517
      %v540 = vpack.c.b16 %v520, %v519
      %v541 = vpack.c.b16 %v522, %v521
      %v542 = vpack.c.b16 %v524, %v523
      %v543 = vpack.c.b16 %v526, %v525
      %v544 = vpack.c.b16 %v528, %v527
      %vm561 = vcmask 31744
      %562 = vst.msk [vmem:[#allocation2] sm:$0xff] %vm561, %v529
      %563 = vst.msk [vmem:[#allocation2 + $0x8] sm:$0xff] %vm561, %v530
      %564 = vst.msk [vmem:[#allocation2 + $0x10] sm:$0xff] %vm561, %v531
      %565 = vst.msk [vmem:[#allocation2 + $0x18] sm:$0xff] %vm561, %v532
      %566 = vst.msk [vmem:[#allocation2 + $0x20] sm:$0xff] %vm561, %v533
      %567 = vst.msk [vmem:[#allocation2 + $0x28] sm:$0xff] %vm561, %v534
      %568 = vst.msk [vmem:[#allocation2 + $0x30] sm:$0xff] %vm561, %v535
      %569 = vst.msk [vmem:[#allocation2 + $0x38] sm:$0xff] %vm561, %v536
      %570 = vst.msk [vmem:[#allocation2 + $0x40] sm:$0xff] %vm561, %v537
      %571 = vst.msk [vmem:[#allocation2 + $0x48] sm:$0xff] %vm561, %v538
      %572 = vst.msk [vmem:[#allocation2 + $0x50] sm:$0xff] %vm561, %v539
      %573 = vst.msk [vmem:[#allocation2 + $0x58] sm:$0xff] %vm561, %v540
      %574 = vst.msk [vmem:[#allocation2 + $0x60] sm:$0xff] %vm561, %v541
      %575 = vst.msk [vmem:[#allocation2 + $0x68] sm:$0xff] %vm561, %v542
      %576 = vst.msk [vmem:[#allocation2 + $0x70] sm:$0xff] %vm561, %v543
      %577 = vst.msk [vmem:[#allocation2 + $0x78] sm:$0xff] %vm561, %v544
      %vm578 = vsmask.f32 3328
      %vm579 = vsmask.f32 7440
      %vm580 = vmor %vm578, %vm579
      %v582 = vshrl.u32 %v345, 16
      %v584 = vrot.slane %v582, 4
      %v585 = vshll.u32 %v345, 16
      %v587 = vrot.slane %v585, 5
      %v588 = vor.u32 %v584, %v587
      %v589 = vrot.slane %v588, 4
      %v591 = vshll.u32 %v346, 16
      %v593 = vrot.slane %v591, 5
      %v594 = vsel %vm580, %v589, %v593
      %v596 = vshrl.u32 %v347, 16
      %v598 = vrot.slane %v596, 4
      %v599 = vshll.u32 %v347, 16
      %v601 = vrot.slane %v599, 5
      %v602 = vor.u32 %v598, %v601
      %v603 = vrot.slane %v602, 4
      %v605 = vshll.u32 %v348, 16
      %v607 = vrot.slane %v605, 5
      %v608 = vsel %vm580, %v603, %v607
      %v610 = vshrl.u32 %v349, 16
      %v612 = vrot.slane %v610, 4
      %v613 = vshll.u32 %v349, 16
      %v615 = vrot.slane %v613, 5
      %v616 = vor.u32 %v612, %v615
      %v617 = vrot.slane %v616, 4
      %v619 = vshll.u32 %v350, 16
      %v621 = vrot.slane %v619, 5
      %v622 = vsel %vm580, %v617, %v621
      %v624 = vshrl.u32 %v351, 16
      %v626 = vrot.slane %v624, 4
      %v627 = vshll.u32 %v351, 16
      %v629 = vrot.slane %v627, 5
      %v630 = vor.u32 %v626, %v629
      %v631 = vrot.slane %v630, 4
      %v633 = vshll.u32 %v352, 16
      %v635 = vrot.slane %v633, 5
      %v636 = vsel %vm580, %v631, %v635
      %v638 = vshrl.u32 %v353, 16
      %v640 = vrot.slane %v638, 4
      %v641 = vshll.u32 %v353, 16
      %v643 = vrot.slane %v641, 5
      %v644 = vor.u32 %v640, %v643
      %v645 = vrot.slane %v644, 4
      %v647 = vshll.u32 %v354, 16
      %v649 = vrot.slane %v647, 5
      %v650 = vsel %vm580, %v645, %v649
      %v652 = vshrl.u32 %v355, 16
      %v654 = vrot.slane %v652, 4
      %v655 = vshll.u32 %v355, 16
      %v657 = vrot.slane %v655, 5
      %v658 = vor.u32 %v654, %v657
      %v659 = vrot.slane %v658, 4
      %v661 = vshll.u32 %v356, 16
      %v663 = vrot.slane %v661, 5
      %v664 = vsel %vm580, %v659, %v663
      %v666 = vshrl.u32 %v357, 16
      %v668 = vrot.slane %v666, 4
      %v669 = vshll.u32 %v357, 16
      %v671 = vrot.slane %v669, 5
      %v672 = vor.u32 %v668, %v671
      %v673 = vrot.slane %v672, 4
      %v675 = vshll.u32 %v358, 16
      %v677 = vrot.slane %v675, 5
      %v678 = vsel %vm580, %v673, %v677
      %v680 = vshrl.u32 %v359, 16
      %v682 = vrot.slane %v680, 4
      %v683 = vshll.u32 %v359, 16
      %v685 = vrot.slane %v683, 5
      %v686 = vor.u32 %v682, %v685
      %v687 = vrot.slane %v686, 4
      %v689 = vshll.u32 %v360, 16
      %v691 = vrot.slane %v689, 5
      %v692 = vsel %vm580, %v687, %v691
      %v694 = vshrl.u32 %v365, 16
      %v696 = vrot.slane %v694, 4
      %v697 = vshll.u32 %v365, 16
      %v699 = vrot.slane %v697, 5
      %v700 = vor.u32 %v696, %v699
      %v701 = vrot.slane %v700, 4
      %v703 = vshll.u32 %v366, 16
      %v705 = vrot.slane %v703, 5
      %v706 = vsel %vm580, %v701, %v705
      %v708 = vshrl.u32 %v367, 16
      %v710 = vrot.slane %v708, 4
      %v711 = vshll.u32 %v367, 16
      %v713 = vrot.slane %v711, 5
      %v714 = vor.u32 %v710, %v713
      %v715 = vrot.slane %v714, 4
      %v717 = vshll.u32 %v368, 16
      %v719 = vrot.slane %v717, 5
      %v720 = vsel %vm580, %v715, %v719
      %v722 = vshrl.u32 %v369, 16
      %v724 = vrot.slane %v722, 4
      %v725 = vshll.u32 %v369, 16
      %v727 = vrot.slane %v725, 5
      %v728 = vor.u32 %v724, %v727
      %v729 = vrot.slane %v728, 4
      %v731 = vshll.u32 %v370, 16
      %v733 = vrot.slane %v731, 5
      %v734 = vsel %vm580, %v729, %v733
      %v736 = vshrl.u32 %v371, 16
      %v738 = vrot.slane %v736, 4
      %v739 = vshll.u32 %v371, 16
      %v741 = vrot.slane %v739, 5
      %v742 = vor.u32 %v738, %v741
      %v743 = vrot.slane %v742, 4
      %v745 = vshll.u32 %v372, 16
      %v747 = vrot.slane %v745, 5
      %v748 = vsel %vm580, %v743, %v747
      %v750 = vshrl.u32 %v373, 16
      %v752 = vrot.slane %v750, 4
      %v753 = vshll.u32 %v373, 16
      %v755 = vrot.slane %v753, 5
      %v756 = vor.u32 %v752, %v755
      %v757 = vrot.slane %v756, 4
      %v759 = vshll.u32 %v374, 16
      %v761 = vrot.slane %v759, 5
      %v762 = vsel %vm580, %v757, %v761
      %v764 = vshrl.u32 %v375, 16
      %v766 = vrot.slane %v764, 4
      %v767 = vshll.u32 %v375, 16
      %v769 = vrot.slane %v767, 5
      %v770 = vor.u32 %v766, %v769
      %v771 = vrot.slane %v770, 4
      %v773 = vshll.u32 %v376, 16
      %v775 = vrot.slane %v773, 5
      %v776 = vsel %vm580, %v771, %v775
      %v778 = vshrl.u32 %v377, 16
      %v780 = vrot.slane %v778, 4
      %v781 = vshll.u32 %v377, 16
      %v783 = vrot.slane %v781, 5
      %v784 = vor.u32 %v780, %v783
      %v785 = vrot.slane %v784, 4
      %v787 = vshll.u32 %v378, 16
      %v789 = vrot.slane %v787, 5
      %v790 = vsel %vm580, %v785, %v789
      %v792 = vshrl.u32 %v379, 16
      %v794 = vrot.slane %v792, 4
      %v795 = vshll.u32 %v379, 16
      %v797 = vrot.slane %v795, 5
      %v798 = vor.u32 %v794, %v797
      %v799 = vrot.slane %v798, 4
      %v801 = vshll.u32 %v380, 16
      %v803 = vrot.slane %v801, 5
      %v804 = vsel %vm580, %v799, %v803
      %v806 = vshrl.u32 %v385, 16
      %v808 = vrot.slane %v806, 4
      %v809 = vshll.u32 %v385, 16
      %v811 = vrot.slane %v809, 5
      %v812 = vor.u32 %v808, %v811
      %v813 = vrot.slane %v812, 4
      %v815 = vshll.u32 %v386, 16
      %v817 = vrot.slane %v815, 5
      %v818 = vsel %vm580, %v813, %v817
      %v820 = vshrl.u32 %v387, 16
      %v822 = vrot.slane %v820, 4
      %v823 = vshll.u32 %v387, 16
      %v825 = vrot.slane %v823, 5
      %v826 = vor.u32 %v822, %v825
      %v827 = vrot.slane %v826, 4
      %v829 = vshll.u32 %v388, 16
      %v831 = vrot.slane %v829, 5
      %v832 = vsel %vm580, %v827, %v831
      %v834 = vshrl.u32 %v389, 16
      %v836 = vrot.slane %v834, 4
      %v837 = vshll.u32 %v389, 16
      %v839 = vrot.slane %v837, 5
      %v840 = vor.u32 %v836, %v839
      %v841 = vrot.slane %v840, 4
      %v843 = vshll.u32 %v390, 16
      %v845 = vrot.slane %v843, 5
      %v846 = vsel %vm580, %v841, %v845
      %v848 = vshrl.u32 %v391, 16
      %v850 = vrot.slane %v848, 4
      %v851 = vshll.u32 %v391, 16
      %v853 = vrot.slane %v851, 5
      %v854 = vor.u32 %v850, %v853
      %v855 = vrot.slane %v854, 4
      %v857 = vshll.u32 %v392, 16
      %v859 = vrot.slane %v857, 5
      %v860 = vsel %vm580, %v855, %v859
      %v862 = vshrl.u32 %v393, 16
      %v864 = vrot.slane %v862, 4
      %v865 = vshll.u32 %v393, 16
      %v867 = vrot.slane %v865, 5
      %v868 = vor.u32 %v864, %v867
      %v869 = vrot.slane %v868, 4
      %v871 = vshll.u32 %v394, 16
      %v873 = vrot.slane %v871, 5
      %v874 = vsel %vm580, %v869, %v873
      %v876 = vshrl.u32 %v395, 16
      %v878 = vrot.slane %v876, 4
      %v879 = vshll.u32 %v395, 16
      %v881 = vrot.slane %v879, 5
      %v882 = vor.u32 %v878, %v881
      %v883 = vrot.slane %v882, 4
      %v885 = vshll.u32 %v396, 16
      %v887 = vrot.slane %v885, 5
      %v888 = vsel %vm580, %v883, %v887
      %v890 = vshrl.u32 %v397, 16
      %v892 = vrot.slane %v890, 4
      %v893 = vshll.u32 %v397, 16
      %v895 = vrot.slane %v893, 5
      %v896 = vor.u32 %v892, %v895
      %v897 = vrot.slane %v896, 4
      %v899 = vshll.u32 %v398, 16
      %v901 = vrot.slane %v899, 5
      %v902 = vsel %vm580, %v897, %v901
      %v904 = vshrl.u32 %v399, 16
      %v906 = vrot.slane %v904, 4
      %v907 = vshll.u32 %v399, 16
      %v909 = vrot.slane %v907, 5
      %v910 = vor.u32 %v906, %v909
      %v911 = vrot.slane %v910, 4
      %v913 = vshll.u32 %v400, 16
      %v915 = vrot.slane %v913, 5
      %v916 = vsel %vm580, %v911, %v915
      %v918 = vshrl.u32 %v405, 16
      %v920 = vrot.slane %v918, 4
      %v921 = vshll.u32 %v405, 16
      %v923 = vrot.slane %v921, 5
      %v924 = vor.u32 %v920, %v923
      %v925 = vrot.slane %v924, 4
      %v927 = vshll.u32 %v406, 16
      %v929 = vrot.slane %v927, 5
      %v930 = vsel %vm580, %v925, %v929
      %v932 = vshrl.u32 %v407, 16
      %v934 = vrot.slane %v932, 4
      %v935 = vshll.u32 %v407, 16
      %v937 = vrot.slane %v935, 5
      %v938 = vor.u32 %v934, %v937
      %v939 = vrot.slane %v938, 4
      %v941 = vshll.u32 %v408, 16
      %v943 = vrot.slane %v941, 5
      %v944 = vsel %vm580, %v939, %v943
      %v946 = vshrl.u32 %v409, 16
      %v948 = vrot.slane %v946, 4
      %v949 = vshll.u32 %v409, 16
      %v951 = vrot.slane %v949, 5
      %v952 = vor.u32 %v948, %v951
      %v953 = vrot.slane %v952, 4
      %v955 = vshll.u32 %v410, 16
      %v957 = vrot.slane %v955, 5
      %v958 = vsel %vm580, %v953, %v957
      %v960 = vshrl.u32 %v411, 16
      %v962 = vrot.slane %v960, 4
      %v963 = vshll.u32 %v411, 16
      %v965 = vrot.slane %v963, 5
      %v966 = vor.u32 %v962, %v965
      %v967 = vrot.slane %v966, 4
      %v969 = vshll.u32 %v412, 16
      %v971 = vrot.slane %v969, 5
      %v972 = vsel %vm580, %v967, %v971
      %v974 = vshrl.u32 %v413, 16
      %v976 = vrot.slane %v974, 4
      %v977 = vshll.u32 %v413, 16
      %v979 = vrot.slane %v977, 5
      %v980 = vor.u32 %v976, %v979
      %v981 = vrot.slane %v980, 4
      %v983 = vshll.u32 %v414, 16
      %v985 = vrot.slane %v983, 5
      %v986 = vsel %vm580, %v981, %v985
      %v988 = vshrl.u32 %v415, 16
      %v990 = vrot.slane %v988, 4
      %v991 = vshll.u32 %v415, 16
      %v993 = vrot.slane %v991, 5
      %v994 = vor.u32 %v990, %v993
      %v995 = vrot.slane %v994, 4
      %v997 = vshll.u32 %v416, 16
      %v999 = vrot.slane %v997, 5
      %v1000 = vsel %vm580, %v995, %v999
      %v1002 = vshrl.u32 %v417, 16
      %v1004 = vrot.slane %v1002, 4
      %v1005 = vshll.u32 %v417, 16
      %v1007 = vrot.slane %v1005, 5
      %v1008 = vor.u32 %v1004, %v1007
      %v1009 = vrot.slane %v1008, 4
      %v1011 = vshll.u32 %v418, 16
      %v1013 = vrot.slane %v1011, 5
      %v1014 = vsel %vm580, %v1009, %v1013
      %v1016 = vshrl.u32 %v419, 16
      %v1018 = vrot.slane %v1016, 4
      %v1019 = vshll.u32 %v419, 16
      %v1021 = vrot.slane %v1019, 5
      %v1022 = vor.u32 %v1018, %v1021
      %v1023 = vrot.slane %v1022, 4
      %v1025 = vshll.u32 %v420, 16
      %v1027 = vrot.slane %v1025, 5
      %v1028 = vsel %vm580, %v1023, %v1027
      %v1029 = vunpack.c.l.b16 %v594
      %v1030 = vunpack.c.l.b16 %v608
      %v1031 = vunpack.c.l.b16 %v622
      %v1032 = vunpack.c.l.b16 %v636
      %v1033 = vunpack.c.l.b16 %v650
      %v1034 = vunpack.c.l.b16 %v664
      %v1035 = vunpack.c.l.b16 %v678
      %v1036 = vunpack.c.l.b16 %v692
      %v1037 = vunpack.c.l.b16 %v706
      %v1038 = vunpack.c.l.b16 %v720
      %v1039 = vunpack.c.l.b16 %v734
      %v1040 = vunpack.c.l.b16 %v748
      %v1041 = vunpack.c.l.b16 %v762
      %v1042 = vunpack.c.l.b16 %v776
      %v1043 = vunpack.c.l.b16 %v790
      %v1044 = vunpack.c.l.b16 %v804
      %v1045 = vunpack.c.l.b16 %v818
      %v1046 = vunpack.c.l.b16 %v832
      %v1047 = vunpack.c.l.b16 %v846
      %v1048 = vunpack.c.l.b16 %v860
      %v1049 = vunpack.c.l.b16 %v874
      %v1050 = vunpack.c.l.b16 %v888
      %v1051 = vunpack.c.l.b16 %v902
      %v1052 = vunpack.c.l.b16 %v916
      %v1053 = vunpack.c.l.b16 %v930
      %v1054 = vunpack.c.l.b16 %v944
      %v1055 = vunpack.c.l.b16 %v958
      %v1056 = vunpack.c.l.b16 %v972
      %v1057 = vunpack.c.l.b16 %v986
      %v1058 = vunpack.c.l.b16 %v1000
      %v1059 = vunpack.c.l.b16 %v1014
      %v1060 = vunpack.c.l.b16 %v1028
      %v1061 = vpack.c.b16 %v1030, %v1029
      %v1062 = vpack.c.b16 %v1032, %v1031
      %v1063 = vpack.c.b16 %v1034, %v1033
      %v1064 = vpack.c.b16 %v1036, %v1035
      %v1065 = vpack.c.b16 %v1038, %v1037
      %v1066 = vpack.c.b16 %v1040, %v1039
      %v1067 = vpack.c.b16 %v1042, %v1041
      %v1068 = vpack.c.b16 %v1044, %v1043
      %v1069 = vpack.c.b16 %v1046, %v1045
      %v1070 = vpack.c.b16 %v1048, %v1047
      %v1071 = vpack.c.b16 %v1050, %v1049
      %v1072 = vpack.c.b16 %v1052, %v1051
      %v1073 = vpack.c.b16 %v1054, %v1053
      %v1074 = vpack.c.b16 %v1056, %v1055
      %v1075 = vpack.c.b16 %v1058, %v1057
      %v1076 = vpack.c.b16 %v1060, %v1059
      %1077 = vrot.lane.b32.xlu0 %v1061, 4
      %v1078 = vpop.permute.xlu0 %1077
      %1079 = vrot.lane.b32.xlu0 %v1062, 4
      %v1080 = vpop.permute.xlu0 %1079
      %1081 = vrot.lane.b32.xlu0 %v1063, 4
      %v1082 = vpop.permute.xlu0 %1081
      %1083 = vrot.lane.b32.xlu0 %v1064, 4
      %v1084 = vpop.permute.xlu0 %1083
      %1085 = vrot.lane.b32.xlu0 %v1065, 4
      %v1086 = vpop.permute.xlu0 %1085
      %1087 = vrot.lane.b32.xlu0 %v1066, 4
      %v1088 = vpop.permute.xlu0 %1087
      %1089 = vrot.lane.b32.xlu0 %v1067, 4
      %v1090 = vpop.permute.xlu0 %1089
      %1091 = vrot.lane.b32.xlu0 %v1068, 4
      %v1092 = vpop.permute.xlu0 %1091
      %1093 = vrot.lane.b32.xlu0 %v1069, 4
      %v1094 = vpop.permute.xlu0 %1093
      %1095 = vrot.lane.b32.xlu0 %v1070, 4
      %v1096 = vpop.permute.xlu0 %1095
      %1097 = vrot.lane.b32.xlu0 %v1071, 4
      %v1098 = vpop.permute.xlu0 %1097
      %1099 = vrot.lane.b32.xlu0 %v1072, 4
      %v1100 = vpop.permute.xlu0 %1099
      %1101 = vrot.lane.b32.xlu0 %v1073, 4
      %v1102 = vpop.permute.xlu0 %1101
      %1103 = vrot.lane.b32.xlu0 %v1074, 4
      %v1104 = vpop.permute.xlu0 %1103
      %1105 = vrot.lane.b32.xlu0 %v1075, 4
      %v1106 = vpop.permute.xlu0 %1105
      %1107 = vrot.lane.b32.xlu0 %v1076, 4
      %v1108 = vpop.permute.xlu0 %1107
      %vm1125 = vcmask 64544
      %1126 = vst.msk [vmem:[#allocation2] sm:$0xff] %vm1125, %v1078
      %1127 = vst.msk [vmem:[#allocation2 + $0x8] sm:$0xff] %vm1125, %v1080
      %1128 = vst.msk [vmem:[#allocation2 + $0x10] sm:$0xff] %vm1125, %v1082
      %1129 = vst.msk [vmem:[#allocation2 + $0x18] sm:$0xff] %vm1125, %v1084
      %1130 = vst.msk [vmem:[#allocation2 + $0x20] sm:$0xff] %vm1125, %v1086
      %1131 = vst.msk [vmem:[#allocation2 + $0x28] sm:$0xff] %vm1125, %v1088
      %1132 = vst.msk [vmem:[#allocation2 + $0x30] sm:$0xff] %vm1125, %v1090
      %1133 = vst.msk [vmem:[#allocation2 + $0x38] sm:$0xff] %vm1125, %v1092
      %1134 = vst.msk [vmem:[#allocation2 + $0x40] sm:$0xff] %vm1125, %v1094
      %1135 = vst.msk [vmem:[#allocation2 + $0x48] sm:$0xff] %vm1125, %v1096
      %1136 = vst.msk [vmem:[#allocation2 + $0x50] sm:$0xff] %vm1125, %v1098
      %1137 = vst.msk [vmem:[#allocation2 + $0x58] sm:$0xff] %vm1125, %v1100
      %1138 = vst.msk [vmem:[#allocation2 + $0x60] sm:$0xff] %vm1125, %v1102
      %1139 = vst.msk [vmem:[#allocation2 + $0x68] sm:$0xff] %vm1125, %v1104
      %1140 = vst.msk [vmem:[#allocation2 + $0x70] sm:$0xff] %vm1125, %v1106
      %1141 = vst.msk [vmem:[#allocation2 + $0x78] sm:$0xff] %vm1125, %v1108
      %vm1174 = vcmask 1042432
      %vm1175 = vcmask 1046532
      %vm1176 = vmor %vm1174, %vm1175
      %v1177 = vrot.slane %v345, 5
      %v1178 = vrot.slane %v1177, 4
      %v1179 = vrot.slane %v346, 5
      %v1180 = vsel %vm1176, %v1178, %v1179
      %v1181 = vrot.slane %v347, 5
      %v1182 = vrot.slane %v1181, 4
      %v1183 = vrot.slane %v348, 5
      %v1184 = vsel %vm1176, %v1182, %v1183
      %v1185 = vrot.slane %v349, 5
      %v1186 = vrot.slane %v1185, 4
      %v1187 = vrot.slane %v350, 5
      %v1188 = vsel %vm1176, %v1186, %v1187
      %v1189 = vrot.slane %v351, 5
      %v1190 = vrot.slane %v1189, 4
      %v1191 = vrot.slane %v352, 5
      %v1192 = vsel %vm1176, %v1190, %v1191
      %v1193 = vrot.slane %v353, 5
      %v1194 = vrot.slane %v1193, 4
      %v1195 = vrot.slane %v354, 5
      %v1196 = vsel %vm1176, %v1194, %v1195
      %v1197 = vrot.slane %v355, 5
      %v1198 = vrot.slane %v1197, 4
      %v1199 = vrot.slane %v356, 5
      %v1200 = vsel %vm1176, %v1198, %v1199
      %v1201 = vrot.slane %v357, 5
      %v1202 = vrot.slane %v1201, 4
      %v1203 = vrot.slane %v358, 5
      %v1204 = vsel %vm1176, %v1202, %v1203
      %v1205 = vrot.slane %v359, 5
      %v1206 = vrot.slane %v1205, 4
      %v1207 = vrot.slane %v360, 5
      %v1208 = vsel %vm1176, %v1206, %v1207
      %v1209 = vrot.slane %v365, 5
      %v1210 = vrot.slane %v1209, 4
      %v1211 = vrot.slane %v366, 5
      %v1212 = vsel %vm1176, %v1210, %v1211
      %v1213 = vrot.slane %v367, 5
      %v1214 = vrot.slane %v1213, 4
      %v1215 = vrot.slane %v368, 5
      %v1216 = vsel %vm1176, %v1214, %v1215
      %v1217 = vrot.slane %v369, 5
      %v1218 = vrot.slane %v1217, 4
      %v1219 = vrot.slane %v370, 5
      %v1220 = vsel %vm1176, %v1218, %v1219
      %v1221 = vrot.slane %v371, 5
      %v1222 = vrot.slane %v1221, 4
      %v1223 = vrot.slane %v372, 5
      %v1224 = vsel %vm1176, %v1222, %v1223
      %v1225 = vrot.slane %v373, 5
      %v1226 = vrot.slane %v1225, 4
      %v1227 = vrot.slane %v374, 5
      %v1228 = vsel %vm1176, %v1226, %v1227
      %v1229 = vrot.slane %v375, 5
      %v1230 = vrot.slane %v1229, 4
      %v1231 = vrot.slane %v376, 5
      %v1232 = vsel %vm1176, %v1230, %v1231
      %v1233 = vrot.slane %v377, 5
      %v1234 = vrot.slane %v1233, 4
      %v1235 = vrot.slane %v378, 5
      %v1236 = vsel %vm1176, %v1234, %v1235
      %v1237 = vrot.slane %v379, 5
      %v1238 = vrot.slane %v1237, 4
      %v1239 = vrot.slane %v380, 5
      %v1240 = vsel %vm1176, %v1238, %v1239
      %v1241 = vrot.slane %v385, 5
      %v1242 = vrot.slane %v1241, 4
      %v1243 = vrot.slane %v386, 5
      %v1244 = vsel %vm1176, %v1242, %v1243
      %v1245 = vrot.slane %v387, 5
      %v1246 = vrot.slane %v1245, 4
      %v1247 = vrot.slane %v388, 5
      %v1248 = vsel %vm1176, %v1246, %v1247
      %v1249 = vrot.slane %v389, 5
      %v1250 = vrot.slane %v1249, 4
      %v1251 = vrot.slane %v390, 5
      %v1252 = vsel %vm1176, %v1250, %v1251
      %v1253 = vrot.slane %v391, 5
      %v1254 = vrot.slane %v1253, 4
      %v1255 = vrot.slane %v392, 5
      %v1256 = vsel %vm1176, %v1254, %v1255
      %v1257 = vrot.slane %v393, 5
      %v1258 = vrot.slane %v1257, 4
      %v1259 = vrot.slane %v394, 5
      %v1260 = vsel %vm1176, %v1258, %v1259
      %v1261 = vrot.slane %v395, 5
      %v1262 = vrot.slane %v1261, 4
      %v1263 = vrot.slane %v396, 5
      %v1264 = vsel %vm1176, %v1262, %v1263
      %v1265 = vrot.slane %v397, 5
      %v1266 = vrot.slane %v1265, 4
      %v1267 = vrot.slane %v398, 5
      %v1268 = vsel %vm1176, %v1266, %v1267
      %v1269 = vrot.slane %v399, 5
      %v1270 = vrot.slane %v1269, 4
      %v1271 = vrot.slane %v400, 5
      %v1272 = vsel %vm1176, %v1270, %v1271
      %v1273 = vrot.slane %v405, 5
      %v1274 = vrot.slane %v1273, 4
      %v1275 = vrot.slane %v406, 5
      %v1276 = vsel %vm1176, %v1274, %v1275
      %v1277 = vrot.slane %v407, 5
      %v1278 = vrot.slane %v1277, 4
      %v1279 = vrot.slane %v408, 5
      %v1280 = vsel %vm1176, %v1278, %v1279
      %v1281 = vrot.slane %v409, 5
      %v1282 = vrot.slane %v1281, 4
      %v1283 = vrot.slane %v410, 5
      %v1284 = vsel %vm1176, %v1282, %v1283
      %v1285 = vrot.slane %v411, 5
      %v1286 = vrot.slane %v1285, 4
      %v1287 = vrot.slane %v412, 5
      %v1288 = vsel %vm1176, %v1286, %v1287
      %v1289 = vrot.slane %v413, 5
      %v1290 = vrot.slane %v1289, 4
      %v1291 = vrot.slane %v414, 5
      %v1292 = vsel %vm1176, %v1290, %v1291
      %v1293 = vrot.slane %v415, 5
      %v1294 = vrot.slane %v1293, 4
      %v1295 = vrot.slane %v416, 5
      %v1296 = vsel %vm1176, %v1294, %v1295
      %v1297 = vrot.slane %v417, 5
      %v1298 = vrot.slane %v1297, 4
      %v1299 = vrot.slane %v418, 5
      %v1300 = vsel %vm1176, %v1298, %v1299
      %v1301 = vrot.slane %v419, 5
      %v1302 = vrot.slane %v1301, 4
      %v1303 = vrot.slane %v420, 5
      %v1304 = vsel %vm1176, %v1302, %v1303
      %v1305 = vunpack.c.l.b16 %v1180
      %v1306 = vunpack.c.l.b16 %v1184
      %v1307 = vunpack.c.l.b16 %v1188
      %v1308 = vunpack.c.l.b16 %v1192
      %v1309 = vunpack.c.l.b16 %v1196
      %v1310 = vunpack.c.l.b16 %v1200
      %v1311 = vunpack.c.l.b16 %v1204
      %v1312 = vunpack.c.l.b16 %v1208
      %v1313 = vunpack.c.l.b16 %v1212
      %v1314 = vunpack.c.l.b16 %v1216
      %v1315 = vunpack.c.l.b16 %v1220
      %v1316 = vunpack.c.l.b16 %v1224
      %v1317 = vunpack.c.l.b16 %v1228
      %v1318 = vunpack.c.l.b16 %v1232
      %v1319 = vunpack.c.l.b16 %v1236
      %v1320 = vunpack.c.l.b16 %v1240
      %v1321 = vunpack.c.l.b16 %v1244
      %v1322 = vunpack.c.l.b16 %v1248
      %v1323 = vunpack.c.l.b16 %v1252
      %v1324 = vunpack.c.l.b16 %v1256
      %v1325 = vunpack.c.l.b16 %v1260
      %v1326 = vunpack.c.l.b16 %v1264
      %v1327 = vunpack.c.l.b16 %v1268
      %v1328 = vunpack.c.l.b16 %v1272
      %v1329 = vunpack.c.l.b16 %v1276
      %v1330 = vunpack.c.l.b16 %v1280
      %v1331 = vunpack.c.l.b16 %v1284
      %v1332 = vunpack.c.l.b16 %v1288
      %v1333 = vunpack.c.l.b16 %v1292
      %v1334 = vunpack.c.l.b16 %v1296
      %v1335 = vunpack.c.l.b16 %v1300
      %v1336 = vunpack.c.l.b16 %v1304
      %v1337 = vpack.c.b16 %v1306, %v1305
      %v1338 = vpack.c.b16 %v1308, %v1307
      %v1339 = vpack.c.b16 %v1310, %v1309
      %v1340 = vpack.c.b16 %v1312, %v1311
      %v1341 = vpack.c.b16 %v1314, %v1313
      %v1342 = vpack.c.b16 %v1316, %v1315
      %v1343 = vpack.c.b16 %v1318, %v1317
      %v1344 = vpack.c.b16 %v1320, %v1319
      %v1345 = vpack.c.b16 %v1322, %v1321
      %v1346 = vpack.c.b16 %v1324, %v1323
      %v1347 = vpack.c.b16 %v1326, %v1325
      %v1348 = vpack.c.b16 %v1328, %v1327
      %v1349 = vpack.c.b16 %v1330, %v1329
      %v1350 = vpack.c.b16 %v1332, %v1331
      %v1351 = vpack.c.b16 %v1334, %v1333
      %v1352 = vpack.c.b16 %v1336, %v1335
      %1353 = vrot.lane.b32.xlu0 %v1337, 8
      %v1354 = vpop.permute.xlu0 %1353
      %1355 = vrot.lane.b32.xlu0 %v1338, 8
      %v1356 = vpop.permute.xlu0 %1355
      %1357 = vrot.lane.b32.xlu0 %v1339, 8
      %v1358 = vpop.permute.xlu0 %1357
      %1359 = vrot.lane.b32.xlu0 %v1340, 8
      %v1360 = vpop.permute.xlu0 %1359
      %1361 = vrot.lane.b32.xlu0 %v1341, 8
      %v1362 = vpop.permute.xlu0 %1361
      %1363 = vrot.lane.b32.xlu0 %v1342, 8
      %v1364 = vpop.permute.xlu0 %1363
      %1365 = vrot.lane.b32.xlu0 %v1343, 8
      %v1366 = vpop.permute.xlu0 %1365
      %1367 = vrot.lane.b32.xlu0 %v1344, 8
      %v1368 = vpop.permute.xlu0 %1367
      %1369 = vrot.lane.b32.xlu0 %v1345, 8
      %v1370 = vpop.permute.xlu0 %1369
      %1371 = vrot.lane.b32.xlu0 %v1346, 8
      %v1372 = vpop.permute.xlu0 %1371
      %1373 = vrot.lane.b32.xlu0 %v1347, 8
      %v1374 = vpop.permute.xlu0 %1373
      %1375 = vrot.lane.b32.xlu0 %v1348, 8
      %v1376 = vpop.permute.xlu0 %1375
      %1377 = vrot.lane.b32.xlu0 %v1349, 8
      %v1378 = vpop.permute.xlu0 %1377
      %1379 = vrot.lane.b32.xlu0 %v1350, 8
      %v1380 = vpop.permute.xlu0 %1379
      %1381 = vrot.lane.b32.xlu0 %v1351, 8
      %v1382 = vpop.permute.xlu0 %1381
      %1383 = vrot.lane.b32.xlu0 %v1352, 8
      %v1384 = vpop.permute.xlu0 %1383
      %vm1401 = vcmask 97344
      %1402 = vst.msk [vmem:[#allocation2] sm:$0xff] %vm1401, %v1354
      %1403 = vst.msk [vmem:[#allocation2 + $0x8] sm:$0xff] %vm1401, %v1356
      %1404 = vst.msk [vmem:[#allocation2 + $0x10] sm:$0xff] %vm1401, %v1358
      %1405 = vst.msk [vmem:[#allocation2 + $0x18] sm:$0xff] %vm1401, %v1360
      %1406 = vst.msk [vmem:[#allocation2 + $0x20] sm:$0xff] %vm1401, %v1362
      %1407 = vst.msk [vmem:[#allocation2 + $0x28] sm:$0xff] %vm1401, %v1364
      %1408 = vst.msk [vmem:[#allocation2 + $0x30] sm:$0xff] %vm1401, %v1366
      %1409 = vst.msk [vmem:[#allocation2 + $0x38] sm:$0xff] %vm1401, %v1368
      %1410 = vst.msk [vmem:[#allocation2 + $0x40] sm:$0xff] %vm1401, %v1370
      %1411 = vst.msk [vmem:[#allocation2 + $0x48] sm:$0xff] %vm1401, %v1372
      %1412 = vst.msk [vmem:[#allocation2 + $0x50] sm:$0xff] %vm1401, %v1374
      %1413 = vst.msk [vmem:[#allocation2 + $0x58] sm:$0xff] %vm1401, %v1376
      %1414 = vst.msk [vmem:[#allocation2 + $0x60] sm:$0xff] %vm1401, %v1378
      %1415 = vst.msk [vmem:[#allocation2 + $0x68] sm:$0xff] %vm1401, %v1380
      %1416 = vst.msk [vmem:[#allocation2 + $0x70] sm:$0xff] %vm1401, %v1382
      %1417 = vst.msk [vmem:[#allocation2 + $0x78] sm:$0xff] %vm1401, %v1384
      %v1422 = vunpack.c.l.b16 %v361
      %v1423 = vunpack.c.l.b16 %v381
      %v1424 = vunpack.c.l.b16 %v401
      %v1425 = vunpack.c.l.b16 %v421
      %v1426 = vpack.c.b16 %v499, %v498
      %v1427 = vpack.c.b16 %v501, %v500
      %v1428 = vpack.c.b16 %v503, %v502
      %v1429 = vpack.c.b16 %v1422, %v504
      %v1430 = vpack.c.b16 %v507, %v506
      %v1431 = vpack.c.b16 %v509, %v508
      %v1432 = vpack.c.b16 %v511, %v510
      %v1433 = vpack.c.b16 %v1423, %v512
      %v1434 = vpack.c.b16 %v515, %v514
      %v1435 = vpack.c.b16 %v517, %v516
      %v1436 = vpack.c.b16 %v519, %v518
      %v1437 = vpack.c.b16 %v1424, %v520
      %v1438 = vpack.c.b16 %v523, %v522
      %v1439 = vpack.c.b16 %v525, %v524
      %v1440 = vpack.c.b16 %v527, %v526
      %v1441 = vpack.c.b16 %v1425, %v528
      %1442 = vrot.lane.b32.xlu0 %v1426, 12
      %v1443 = vpop.permute.xlu0 %1442
      %1444 = vrot.lane.b32.xlu0 %v1427, 12
      %v1445 = vpop.permute.xlu0 %1444
      %1446 = vrot.lane.b32.xlu0 %v1428, 12
      %v1447 = vpop.permute.xlu0 %1446
      %1448 = vrot.lane.b32.xlu0 %v1429, 12
      %v1449 = vpop.permute.xlu0 %1448
      %1450 = vrot.lane.b32.xlu0 %v1430, 12
      %v1451 = vpop.permute.xlu0 %1450
      %1452 = vrot.lane.b32.xlu0 %v1431, 12
      %v1453 = vpop.permute.xlu0 %1452
      %1454 = vrot.lane.b32.xlu0 %v1432, 12
      %v1455 = vpop.permute.xlu0 %1454
      %1456 = vrot.lane.b32.xlu0 %v1433, 12
      %v1457 = vpop.permute.xlu0 %1456
      %1458 = vrot.lane.b32.xlu0 %v1434, 12
      %v1459 = vpop.permute.xlu0 %1458
      %1460 = vrot.lane.b32.xlu0 %v1435, 12
      %v1461 = vpop.permute.xlu0 %1460
      %1462 = vrot.lane.b32.xlu0 %v1436, 12
      %v1463 = vpop.permute.xlu0 %1462
      %1464 = vrot.lane.b32.xlu0 %v1437, 12
      %v1465 = vpop.permute.xlu0 %1464
      %1466 = vrot.lane.b32.xlu0 %v1438, 12
      %v1467 = vpop.permute.xlu0 %1466
      %1468 = vrot.lane.b32.xlu0 %v1439, 12
      %v1469 = vpop.permute.xlu0 %1468
      %1470 = vrot.lane.b32.xlu0 %v1440, 12
      %v1471 = vpop.permute.xlu0 %1470
      %1472 = vrot.lane.b32.xlu0 %v1441, 12
      %v1473 = vpop.permute.xlu0 %1472
      %vm1490 = vcmask 130144
      %1491 = vst.msk [vmem:[#allocation2] sm:$0xff] %vm1490, %v1443
      %1492 = vst.msk [vmem:[#allocation2 + $0x8] sm:$0xff] %vm1490, %v1445
      %1493 = vst.msk [vmem:[#allocation2 + $0x10] sm:$0xff] %vm1490, %v1447
      %1494 = vst.msk [vmem:[#allocation2 + $0x18] sm:$0xff] %vm1490, %v1449
      %1495 = vst.msk [vmem:[#allocation2 + $0x20] sm:$0xff] %vm1490, %v1451
      %1496 = vst.msk [vmem:[#allocation2 + $0x28] sm:$0xff] %vm1490, %v1453
      %1497 = vst.msk [vmem:[#allocation2 + $0x30] sm:$0xff] %vm1490, %v1455
      %1498 = vst.msk [vmem:[#allocation2 + $0x38] sm:$0xff] %vm1490, %v1457
      %1499 = vst.msk [vmem:[#allocation2 + $0x40] sm:$0xff] %vm1490, %v1459
      %1500 = vst.msk [vmem:[#allocation2 + $0x48] sm:$0xff] %vm1490, %v1461
      %1501 = vst.msk [vmem:[#allocation2 + $0x50] sm:$0xff] %vm1490, %v1463
      %1502 = vst.msk [vmem:[#allocation2 + $0x58] sm:$0xff] %vm1490, %v1465
      %1503 = vst.msk [vmem:[#allocation2 + $0x60] sm:$0xff] %vm1490, %v1467
      %1504 = vst.msk [vmem:[#allocation2 + $0x68] sm:$0xff] %vm1490, %v1469
      %1505 = vst.msk [vmem:[#allocation2 + $0x70] sm:$0xff] %vm1490, %v1471
      %1506 = vst.msk [vmem:[#allocation2 + $0x78] sm:$0xff] %vm1490, %v1473
      %v1508 = vshrl.u32 %v361, 16
      %v1510 = vrot.slane %v1508, 4
      %v1511 = vshll.u32 %v361, 16
      %v1513 = vrot.slane %v1511, 5
      %v1514 = vor.u32 %v1510, %v1513
      %v1515 = vrot.slane %v1514, 4
      %v1517 = vshll.u32 %v362, 16
      %v1519 = vrot.slane %v1517, 5
      %v1520 = vsel %vm580, %v1515, %v1519
      %v1522 = vshrl.u32 %v381, 16
      %v1524 = vrot.slane %v1522, 4
      %v1525 = vshll.u32 %v381, 16
      %v1527 = vrot.slane %v1525, 5
      %v1528 = vor.u32 %v1524, %v1527
      %v1529 = vrot.slane %v1528, 4
      %v1531 = vshll.u32 %v382, 16
      %v1533 = vrot.slane %v1531, 5
      %v1534 = vsel %vm580, %v1529, %v1533
      %v1536 = vshrl.u32 %v401, 16
      %v1538 = vrot.slane %v1536, 4
      %v1539 = vshll.u32 %v401, 16
      %v1541 = vrot.slane %v1539, 5
      %v1542 = vor.u32 %v1538, %v1541
      %v1543 = vrot.slane %v1542, 4
      %v1545 = vshll.u32 %v402, 16
      %v1547 = vrot.slane %v1545, 5
      %v1548 = vsel %vm580, %v1543, %v1547
      %v1550 = vshrl.u32 %v421, 16
      %v1552 = vrot.slane %v1550, 4
      %v1553 = vshll.u32 %v421, 16
      %v1555 = vrot.slane %v1553, 5
      %v1556 = vor.u32 %v1552, %v1555
      %v1557 = vrot.slane %v1556, 4
      %v1559 = vshll.u32 %v422, 16
      %v1561 = vrot.slane %v1559, 5
      %v1562 = vsel %vm580, %v1557, %v1561
      %v1563 = vunpack.c.l.b16 %v1520
      %v1564 = vunpack.c.l.b16 %v1534
      %v1565 = vunpack.c.l.b16 %v1548
      %v1566 = vunpack.c.l.b16 %v1562
      %v1567 = vpack.c.b16 %v1031, %v1030
      %v1568 = vpack.c.b16 %v1033, %v1032
      %v1569 = vpack.c.b16 %v1035, %v1034
      %v1570 = vpack.c.b16 %v1563, %v1036
      %v1571 = vpack.c.b16 %v1039, %v1038
      %v1572 = vpack.c.b16 %v1041, %v1040
      %v1573 = vpack.c.b16 %v1043, %v1042
      %v1574 = vpack.c.b16 %v1564, %v1044
      %v1575 = vpack.c.b16 %v1047, %v1046
      %v1576 = vpack.c.b16 %v1049, %v1048
      %v1577 = vpack.c.b16 %v1051, %v1050
      %v1578 = vpack.c.b16 %v1565, %v1052
      %v1579 = vpack.c.b16 %v1055, %v1054
      %v1580 = vpack.c.b16 %v1057, %v1056
      %v1581 = vpack.c.b16 %v1059, %v1058
      %v1582 = vpack.c.b16 %v1566, %v1060
      %1583 = vrot.lane.b32.xlu0 %v1567, 16
      %v1584 = vpop.permute.xlu0 %1583
      %1585 = vrot.lane.b32.xlu0 %v1568, 16
      %v1586 = vpop.permute.xlu0 %1585
      %1587 = vrot.lane.b32.xlu0 %v1569, 16
      %v1588 = vpop.permute.xlu0 %1587
      %1589 = vrot.lane.b32.xlu0 %v1570, 16
      %v1590 = vpop.permute.xlu0 %1589
      %1591 = vrot.lane.b32.xlu0 %v1571, 16
      %v1592 = vpop.permute.xlu0 %1591
      %1593 = vrot.lane.b32.xlu0 %v1572, 16
      %v1594 = vpop.permute.xlu0 %1593
      %1595 = vrot.lane.b32.xlu0 %v1573, 16
      %v1596 = vpop.permute.xlu0 %1595
      %1597 = vrot.lane.b32.xlu0 %v1574, 16
      %v1598 = vpop.permute.xlu0 %1597
      %1599 = vrot.lane.b32.xlu0 %v1575, 16
      %v1600 = vpop.permute.xlu0 %1599
      %1601 = vrot.lane.b32.xlu0 %v1576, 16
      %v1602 = vpop.permute.xlu0 %1601
      %1603 = vrot.lane.b32.xlu0 %v1577, 16
      %v1604 = vpop.permute.xlu0 %1603
      %1605 = vrot.lane.b32.xlu0 %v1578, 16
      %v1606 = vpop.permute.xlu0 %1605
      %1607 = vrot.lane.b32.xlu0 %v1579, 16
      %v1608 = vpop.permute.xlu0 %1607
      %1609 = vrot.lane.b32.xlu0 %v1580, 16
      %v1610 = vpop.permute.xlu0 %1609
      %1611 = vrot.lane.b32.xlu0 %v1581, 16
      %v1612 = vpop.permute.xlu0 %1611
      %1613 = vrot.lane.b32.xlu0 %v1582, 16
      %v1614 = vpop.permute.xlu0 %1613
      %vm1631 = vcmask 162944
      %1632 = vst.msk [vmem:[#allocation2] sm:$0xff] %vm1631, %v1584
      %1633 = vst.msk [vmem:[#allocation2 + $0x8] sm:$0xff] %vm1631, %v1586
      %1634 = vst.msk [vmem:[#allocation2 + $0x10] sm:$0xff] %vm1631, %v1588
      %1635 = vst.msk [vmem:[#allocation2 + $0x18] sm:$0xff] %vm1631, %v1590
      %1636 = vst.msk [vmem:[#allocation2 + $0x20] sm:$0xff] %vm1631, %v1592
      %1637 = vst.msk [vmem:[#allocation2 + $0x28] sm:$0xff] %vm1631, %v1594
      %1638 = vst.msk [vmem:[#allocation2 + $0x30] sm:$0xff] %vm1631, %v1596
      %1639 = vst.msk [vmem:[#allocation2 + $0x38] sm:$0xff] %vm1631, %v1598
      %1640 = vst.msk [vmem:[#allocation2 + $0x40] sm:$0xff] %vm1631, %v1600
      %1641 = vst.msk [vmem:[#allocation2 + $0x48] sm:$0xff] %vm1631, %v1602
      %1642 = vst.msk [vmem:[#allocation2 + $0x50] sm:$0xff] %vm1631, %v1604
      %1643 = vst.msk [vmem:[#allocation2 + $0x58] sm:$0xff] %vm1631, %v1606
      %1644 = vst.msk [vmem:[#allocation2 + $0x60] sm:$0xff] %vm1631, %v1608
      %1645 = vst.msk [vmem:[#allocation2 + $0x68] sm:$0xff] %vm1631, %v1610
      %1646 = vst.msk [vmem:[#allocation2 + $0x70] sm:$0xff] %vm1631, %v1612
      %1647 = vst.msk [vmem:[#allocation2 + $0x78] sm:$0xff] %vm1631, %v1614
      %v1652 = vrot.slane %v361, 5
      %v1653 = vrot.slane %v1652, 4
      %v1654 = vrot.slane %v362, 5
      %v1655 = vsel %vm1176, %v1653, %v1654
      %v1656 = vrot.slane %v381, 5
      %v1657 = vrot.slane %v1656, 4
      %v1658 = vrot.slane %v382, 5
      %v1659 = vsel %vm1176, %v1657, %v1658
      %v1660 = vrot.slane %v401, 5
      %v1661 = vrot.slane %v1660, 4
      %v1662 = vrot.slane %v402, 5
      %v1663 = vsel %vm1176, %v1661, %v1662
      %v1664 = vrot.slane %v421, 5
      %v1665 = vrot.slane %v1664, 4
      %v1666 = vrot.slane %v422, 5
      %v1667 = vsel %vm1176, %v1665, %v1666
      %v1668 = vunpack.c.l.b16 %v1655
      %v1669 = vunpack.c.l.b16 %v1659
      %v1670 = vunpack.c.l.b16 %v1663
      %v1671 = vunpack.c.l.b16 %v1667
      %v1672 = vpack.c.b16 %v1307, %v1306
      %v1673 = vpack.c.b16 %v1309, %v1308
      %v1674 = vpack.c.b16 %v1311, %v1310
      %v1675 = vpack.c.b16 %v1668, %v1312
      %v1676 = vpack.c.b16 %v1315, %v1314
      %v1677 = vpack.c.b16 %v1317, %v1316
      %v1678 = vpack.c.b16 %v1319, %v1318
      %v1679 = vpack.c.b16 %v1669, %v1320
      %v1680 = vpack.c.b16 %v1323, %v1322
      %v1681 = vpack.c.b16 %v1325, %v1324
      %v1682 = vpack.c.b16 %v1327, %v1326
      %v1683 = vpack.c.b16 %v1670, %v1328
      %v1684 = vpack.c.b16 %v1331, %v1330
      %v1685 = vpack.c.b16 %v1333, %v1332
      %v1686 = vpack.c.b16 %v1335, %v1334
      %v1687 = vpack.c.b16 %v1671, %v1336
      %1688 = vrot.lane.b32.xlu0 %v1672, 20
      %v1689 = vpop.permute.xlu0 %1688
      %1690 = vrot.lane.b32.xlu0 %v1673, 20
      %v1691 = vpop.permute.xlu0 %1690
      %1692 = vrot.lane.b32.xlu0 %v1674, 20
      %v1693 = vpop.permute.xlu0 %1692
      %1694 = vrot.lane.b32.xlu0 %v1675, 20
      %v1695 = vpop.permute.xlu0 %1694
      %1696 = vrot.lane.b32.xlu0 %v1676, 20
      %v1697 = vpop.permute.xlu0 %1696
      %1698 = vrot.lane.b32.xlu0 %v1677, 20
      %v1699 = vpop.permute.xlu0 %1698
      %1700 = vrot.lane.b32.xlu0 %v1678, 20
      %v1701 = vpop.permute.xlu0 %1700
      %1702 = vrot.lane.b32.xlu0 %v1679, 20
      %v1703 = vpop.permute.xlu0 %1702
      %1704 = vrot.lane.b32.xlu0 %v1680, 20
      %v1705 = vpop.permute.xlu0 %1704
      %1706 = vrot.lane.b32.xlu0 %v1681, 20
      %v1707 = vpop.permute.xlu0 %1706
      %1708 = vrot.lane.b32.xlu0 %v1682, 20
      %v1709 = vpop.permute.xlu0 %1708
      %1710 = vrot.lane.b32.xlu0 %v1683, 20
      %v1711 = vpop.permute.xlu0 %1710
      %1712 = vrot.lane.b32.xlu0 %v1684, 20
      %v1713 = vpop.permute.xlu0 %1712
      %1714 = vrot.lane.b32.xlu0 %v1685, 20
      %v1715 = vpop.permute.xlu0 %1714
      %1716 = vrot.lane.b32.xlu0 %v1686, 20
      %v1717 = vpop.permute.xlu0 %1716
      %1718 = vrot.lane.b32.xlu0 %v1687, 20
      %v1719 = vpop.permute.xlu0 %1718
      %vm1736 = vcmask 195744
      %1737 = vst.msk [vmem:[#allocation2] sm:$0xff] %vm1736, %v1689
      %1738 = vst.msk [vmem:[#allocation2 + $0x8] sm:$0xff] %vm1736, %v1691
      %1739 = vst.msk [vmem:[#allocation2 + $0x10] sm:$0xff] %vm1736, %v1693
      %1740 = vst.msk [vmem:[#allocation2 + $0x18] sm:$0xff] %vm1736, %v1695
      %1741 = vst.msk [vmem:[#allocation2 + $0x20] sm:$0xff] %vm1736, %v1697
      %1742 = vst.msk [vmem:[#allocation2 + $0x28] sm:$0xff] %vm1736, %v1699
      %1743 = vst.msk [vmem:[#allocation2 + $0x30] sm:$0xff] %vm1736, %v1701
      %1744 = vst.msk [vmem:[#allocation2 + $0x38] sm:$0xff] %vm1736, %v1703
      %1745 = vst.msk [vmem:[#allocation2 + $0x40] sm:$0xff] %vm1736, %v1705
      %1746 = vst.msk [vmem:[#allocation2 + $0x48] sm:$0xff] %vm1736, %v1707
      %1747 = vst.msk [vmem:[#allocation2 + $0x50] sm:$0xff] %vm1736, %v1709
      %1748 = vst.msk [vmem:[#allocation2 + $0x58] sm:$0xff] %vm1736, %v1711
      %1749 = vst.msk [vmem:[#allocation2 + $0x60] sm:$0xff] %vm1736, %v1713
      %1750 = vst.msk [vmem:[#allocation2 + $0x68] sm:$0xff] %vm1736, %v1715
      %1751 = vst.msk [vmem:[#allocation2 + $0x70] sm:$0xff] %vm1736, %v1717
      %1752 = vst.msk [vmem:[#allocation2 + $0x78] sm:$0xff] %vm1736, %v1719
      %v1757 = vunpack.c.l.b16 %v363
      %v1758 = vunpack.c.l.b16 %v383
      %v1759 = vunpack.c.l.b16 %v403
      %v1760 = vunpack.c.l.b16 %v423
      %v1761 = vpack.c.b16 %v1757, %v1422
      %v1762 = vpack.c.b16 %v1758, %v1423
      %v1763 = vpack.c.b16 %v1759, %v1424
      %v1764 = vpack.c.b16 %v1760, %v1425
      %1765 = vrot.lane.b32.xlu0 %v530, 24
      %v1766 = vpop.permute.xlu0 %1765
      %1767 = vrot.lane.b32.xlu0 %v531, 24
      %v1768 = vpop.permute.xlu0 %1767
      %1769 = vrot.lane.b32.xlu0 %v532, 24
      %v1770 = vpop.permute.xlu0 %1769
      %1771 = vrot.lane.b32.xlu0 %v1761, 24
      %v1772 = vpop.permute.xlu0 %1771
      %1773 = vrot.lane.b32.xlu0 %v534, 24
      %v1774 = vpop.permute.xlu0 %1773
      %1775 = vrot.lane.b32.xlu0 %v535, 24
      %v1776 = vpop.permute.xlu0 %1775
      %1777 = vrot.lane.b32.xlu0 %v536, 24
      %v1778 = vpop.permute.xlu0 %1777
      %1779 = vrot.lane.b32.xlu0 %v1762, 24
      %v1780 = vpop.permute.xlu0 %1779
      %1781 = vrot.lane.b32.xlu0 %v538, 24
      %v1782 = vpop.permute.xlu0 %1781
      %1783 = vrot.lane.b32.xlu0 %v539, 24
      %v1784 = vpop.permute.xlu0 %1783
      %1785 = vrot.lane.b32.xlu0 %v540, 24
      %v1786 = vpop.permute.xlu0 %1785
      %1787 = vrot.lane.b32.xlu0 %v1763, 24
      %v1788 = vpop.permute.xlu0 %1787
      %1789 = vrot.lane.b32.xlu0 %v542, 24
      %v1790 = vpop.permute.xlu0 %1789
      %1791 = vrot.lane.b32.xlu0 %v543, 24
      %v1792 = vpop.permute.xlu0 %1791
      %1793 = vrot.lane.b32.xlu0 %v544, 24
      %v1794 = vpop.permute.xlu0 %1793
      %1795 = vrot.lane.b32.xlu0 %v1764, 24
      %v1796 = vpop.permute.xlu0 %1795
      %vm1813 = vcmask 228544
      %1814 = vst.msk [vmem:[#allocation2] sm:$0xff] %vm1813, %v1766
      %1815 = vst.msk [vmem:[#allocation2 + $0x8] sm:$0xff] %vm1813, %v1768
      %1816 = vst.msk [vmem:[#allocation2 + $0x10] sm:$0xff] %vm1813, %v1770
      %1817 = vst.msk [vmem:[#allocation2 + $0x18] sm:$0xff] %vm1813, %v1772
      %1818 = vst.msk [vmem:[#allocation2 + $0x20] sm:$0xff] %vm1813, %v1774
      %1819 = vst.msk [vmem:[#allocation2 + $0x28] sm:$0xff] %vm1813, %v1776
      %1820 = vst.msk [vmem:[#allocation2 + $0x30] sm:$0xff] %vm1813, %v1778
      %1821 = vst.msk [vmem:[#allocation2 + $0x38] sm:$0xff] %vm1813, %v1780
      %1822 = vst.msk [vmem:[#allocation2 + $0x40] sm:$0xff] %vm1813, %v1782
      %1823 = vst.msk [vmem:[#allocation2 + $0x48] sm:$0xff] %vm1813, %v1784
      %1824 = vst.msk [vmem:[#allocation2 + $0x50] sm:$0xff] %vm1813, %v1786
      %1825 = vst.msk [vmem:[#allocation2 + $0x58] sm:$0xff] %vm1813, %v1788
      %1826 = vst.msk [vmem:[#allocation2 + $0x60] sm:$0xff] %vm1813, %v1790
      %1827 = vst.msk [vmem:[#allocation2 + $0x68] sm:$0xff] %vm1813, %v1792
      %1828 = vst.msk [vmem:[#allocation2 + $0x70] sm:$0xff] %vm1813, %v1794
      %1829 = vst.msk [vmem:[#allocation2 + $0x78] sm:$0xff] %vm1813, %v1796
      %v1831 = vshrl.u32 %v363, 16
      %v1833 = vrot.slane %v1831, 4
      %v1834 = vshll.u32 %v363, 16
      %v1836 = vrot.slane %v1834, 5
      %v1837 = vor.u32 %v1833, %v1836
      %v1838 = vrot.slane %v1837, 4
      %v1840 = vshll.u32 %v364, 16
      %v1842 = vrot.slane %v1840, 5
      %v1843 = vsel %vm580, %v1838, %v1842
      %v1845 = vshrl.u32 %v383, 16
      %v1847 = vrot.slane %v1845, 4
      %v1848 = vshll.u32 %v383, 16
      %v1850 = vrot.slane %v1848, 5
      %v1851 = vor.u32 %v1847, %v1850
      %v1852 = vrot.slane %v1851, 4
      %v1854 = vshll.u32 %v384, 16
      %v1856 = vrot.slane %v1854, 5
      %v1857 = vsel %vm580, %v1852, %v1856
      %v1859 = vshrl.u32 %v403, 16
      %v1861 = vrot.slane %v1859, 4
      %v1862 = vshll.u32 %v403, 16
      %v1864 = vrot.slane %v1862, 5
      %v1865 = vor.u32 %v1861, %v1864
      %v1866 = vrot.slane %v1865, 4
      %v1868 = vshll.u32 %v404, 16
      %v1870 = vrot.slane %v1868, 5
      %v1871 = vsel %vm580, %v1866, %v1870
      %v1873 = vshrl.u32 %v423, 16
      %v1875 = vrot.slane %v1873, 4
      %v1876 = vshll.u32 %v423, 16
      %v1878 = vrot.slane %v1876, 5
      %v1879 = vor.u32 %v1875, %v1878
      %v1880 = vrot.slane %v1879, 4
      %v1882 = vshll.u32 %v424, 16
      %v1884 = vrot.slane %v1882, 5
      %v1885 = vsel %vm580, %v1880, %v1884
      %v1886 = vunpack.c.l.b16 %v1843
      %v1887 = vunpack.c.l.b16 %v1857
      %v1888 = vunpack.c.l.b16 %v1871
      %v1889 = vunpack.c.l.b16 %v1885
      %v1890 = vpack.c.b16 %v1886, %v1563
      %v1891 = vpack.c.b16 %v1887, %v1564
      %v1892 = vpack.c.b16 %v1888, %v1565
      %v1893 = vpack.c.b16 %v1889, %v1566
      %1894 = vrot.lane.b32.xlu0 %v1062, 28
      %v1895 = vpop.permute.xlu0 %1894
      %1896 = vrot.lane.b32.xlu0 %v1063, 28
      %v1897 = vpop.permute.xlu0 %1896
      %1898 = vrot.lane.b32.xlu0 %v1064, 28
      %v1899 = vpop.permute.xlu0 %1898
      %1900 = vrot.lane.b32.xlu0 %v1890, 28
      %v1901 = vpop.permute.xlu0 %1900
      %1902 = vrot.lane.b32.xlu0 %v1066, 28
      %v1903 = vpop.permute.xlu0 %1902
      %1904 = vrot.lane.b32.xlu0 %v1067, 28
      %v1905 = vpop.permute.xlu0 %1904
      %1906 = vrot.lane.b32.xlu0 %v1068, 28
      %v1907 = vpop.permute.xlu0 %1906
      %1908 = vrot.lane.b32.xlu0 %v1891, 28
      %v1909 = vpop.permute.xlu0 %1908
      %1910 = vrot.lane.b32.xlu0 %v1070, 28
      %v1911 = vpop.permute.xlu0 %1910
      %1912 = vrot.lane.b32.xlu0 %v1071, 28
      %v1913 = vpop.permute.xlu0 %1912
      %1914 = vrot.lane.b32.xlu0 %v1072, 28
      %v1915 = vpop.permute.xlu0 %1914
      %1916 = vrot.lane.b32.xlu0 %v1892, 28
      %v1917 = vpop.permute.xlu0 %1916
      %1918 = vrot.lane.b32.xlu0 %v1074, 28
      %v1919 = vpop.permute.xlu0 %1918
      %1920 = vrot.lane.b32.xlu0 %v1075, 28
      %v1921 = vpop.permute.xlu0 %1920
      %1922 = vrot.lane.b32.xlu0 %v1076, 28
      %v1923 = vpop.permute.xlu0 %1922
      %1924 = vrot.lane.b32.xlu0 %v1893, 28
      %v1925 = vpop.permute.xlu0 %1924
      %vm1942 = vcmask 261344
      %1943 = vst.msk [vmem:[#allocation2] sm:$0xff] %vm1942, %v1895
      %1944 = vst.msk [vmem:[#allocation2 + $0x8] sm:$0xff] %vm1942, %v1897
      %1945 = vst.msk [vmem:[#allocation2 + $0x10] sm:$0xff] %vm1942, %v1899
      %1946 = vst.msk [vmem:[#allocation2 + $0x18] sm:$0xff] %vm1942, %v1901
      %1947 = vst.msk [vmem:[#allocation2 + $0x20] sm:$0xff] %vm1942, %v1903
      %1948 = vst.msk [vmem:[#allocation2 + $0x28] sm:$0xff] %vm1942, %v1905
      %1949 = vst.msk [vmem:[#allocation2 + $0x30] sm:$0xff] %vm1942, %v1907
      %1950 = vst.msk [vmem:[#allocation2 + $0x38] sm:$0xff] %vm1942, %v1909
      %1951 = vst.msk [vmem:[#allocation2 + $0x40] sm:$0xff] %vm1942, %v1911
      %1952 = vst.msk [vmem:[#allocation2 + $0x48] sm:$0xff] %vm1942, %v1913
      %1953 = vst.msk [vmem:[#allocation2 + $0x50] sm:$0xff] %vm1942, %v1915
      %1954 = vst.msk [vmem:[#allocation2 + $0x58] sm:$0xff] %vm1942, %v1917
      %1955 = vst.msk [vmem:[#allocation2 + $0x60] sm:$0xff] %vm1942, %v1919
      %1956 = vst.msk [vmem:[#allocation2 + $0x68] sm:$0xff] %vm1942, %v1921
      %1957 = vst.msk [vmem:[#allocation2 + $0x70] sm:$0xff] %vm1942, %v1923
      %1958 = vst.msk [vmem:[#allocation2 + $0x78] sm:$0xff] %vm1942, %v1925
      %v1963 = vrot.slane %v363, 5
      %v1964 = vrot.slane %v1963, 4
      %v1965 = vrot.slane %v364, 5
      %v1966 = vsel %vm1176, %v1964, %v1965
      %v1967 = vrot.slane %v383, 5
      %v1968 = vrot.slane %v1967, 4
      %v1969 = vrot.slane %v384, 5
      %v1970 = vsel %vm1176, %v1968, %v1969
      %v1971 = vrot.slane %v403, 5
      %v1972 = vrot.slane %v1971, 4
      %v1973 = vrot.slane %v404, 5
      %v1974 = vsel %vm1176, %v1972, %v1973
      %v1975 = vrot.slane %v423, 5
      %v1976 = vrot.slane %v1975, 4
      %v1977 = vrot.slane %v424, 5
      %v1978 = vsel %vm1176, %v1976, %v1977
      %v1979 = vunpack.c.l.b16 %v1966
      %v1980 = vunpack.c.l.b16 %v1970
      %v1981 = vunpack.c.l.b16 %v1974
      %v1982 = vunpack.c.l.b16 %v1978
      %v1983 = vpack.c.b16 %v1979, %v1668
      %v1984 = vpack.c.b16 %v1980, %v1669
      %v1985 = vpack.c.b16 %v1981, %v1670
      %v1986 = vpack.c.b16 %v1982, %v1671
      %1987 = vrot.lane.b32.xlu0 %v1338, 32
      %v1988 = vpop.permute.xlu0 %1987
      %1989 = vrot.lane.b32.xlu0 %v1339, 32
      %v1990 = vpop.permute.xlu0 %1989
      %1991 = vrot.lane.b32.xlu0 %v1340, 32
      %v1992 = vpop.permute.xlu0 %1991
      %1993 = vrot.lane.b32.xlu0 %v1983, 32
      %v1994 = vpop.permute.xlu0 %1993
      %1995 = vrot.lane.b32.xlu0 %v1342, 32
      %v1996 = vpop.permute.xlu0 %1995
      %1997 = vrot.lane.b32.xlu0 %v1343, 32
      %v1998 = vpop.permute.xlu0 %1997
      %1999 = vrot.lane.b32.xlu0 %v1344, 32
      %v2000 = vpop.permute.xlu0 %1999
      %2001 = vrot.lane.b32.xlu0 %v1984, 32
      %v2002 = vpop.permute.xlu0 %2001
      %2003 = vrot.lane.b32.xlu0 %v1346, 32
      %v2004 = vpop.permute.xlu0 %2003
      %2005 = vrot.lane.b32.xlu0 %v1347, 32
      %v2006 = vpop.permute.xlu0 %2005
      %2007 = vrot.lane.b32.xlu0 %v1348, 32
      %v2008 = vpop.permute.xlu0 %2007
      %2009 = vrot.lane.b32.xlu0 %v1985, 32
      %v2010 = vpop.permute.xlu0 %2009
      %2011 = vrot.lane.b32.xlu0 %v1350, 32
      %v2012 = vpop.permute.xlu0 %2011
      %2013 = vrot.lane.b32.xlu0 %v1351, 32
      %v2014 = vpop.permute.xlu0 %2013
      %2015 = vrot.lane.b32.xlu0 %v1352, 32
      %v2016 = vpop.permute.xlu0 %2015
      %2017 = vrot.lane.b32.xlu0 %v1986, 32
      %v2018 = vpop.permute.xlu0 %2017
      %vm2035 = vcmask 294144
      %2036 = vst.msk [vmem:[#allocation2] sm:$0xff] %vm2035, %v1988
      %2037 = vst.msk [vmem:[#allocation2 + $0x8] sm:$0xff] %vm2035, %v1990
      %2038 = vst.msk [vmem:[#allocation2 + $0x10] sm:$0xff] %vm2035, %v1992
      %2039 = vst.msk [vmem:[#allocation2 + $0x18] sm:$0xff] %vm2035, %v1994
      %2040 = vst.msk [vmem:[#allocation2 + $0x20] sm:$0xff] %vm2035, %v1996
      %2041 = vst.msk [vmem:[#allocation2 + $0x28] sm:$0xff] %vm2035, %v1998
      %2042 = vst.msk [vmem:[#allocation2 + $0x30] sm:$0xff] %vm2035, %v2000
      %2043 = vst.msk [vmem:[#allocation2 + $0x38] sm:$0xff] %vm2035, %v2002
      %2044 = vst.msk [vmem:[#allocation2 + $0x40] sm:$0xff] %vm2035, %v2004
      %2045 = vst.msk [vmem:[#allocation2 + $0x48] sm:$0xff] %vm2035, %v2006
      %2046 = vst.msk [vmem:[#allocation2 + $0x50] sm:$0xff] %vm2035, %v2008
      %2047 = vst.msk [vmem:[#allocation2 + $0x58] sm:$0xff] %vm2035, %v2010
      %2048 = vst.msk [vmem:[#allocation2 + $0x60] sm:$0xff] %vm2035, %v2012
      %2049 = vst.msk [vmem:[#allocation2 + $0x68] sm:$0xff] %vm2035, %v2014
      %2050 = vst.msk [vmem:[#allocation2 + $0x70] sm:$0xff] %vm2035, %v2016
      %2051 = vst.msk [vmem:[#allocation2 + $0x78] sm:$0xff] %vm2035, %v2018
      %2052 = vrot.lane.b32.xlu0 %v533, 36
      %v2053 = vpop.permute.xlu0 %2052
      %2054 = vrot.lane.b32.xlu0 %v534, 36
      %v2055 = vpop.permute.xlu0 %2054
      %2056 = vrot.lane.b32.xlu0 %v535, 36
      %v2057 = vpop.permute.xlu0 %2056
      %2058 = vrot.lane.b32.xlu0 %v536, 36
      %v2059 = vpop.permute.xlu0 %2058
      %2060 = vrot.lane.b32.xlu0 %v537, 36
      %v2061 = vpop.permute.xlu0 %2060
      %2062 = vrot.lane.b32.xlu0 %v538, 36
      %v2063 = vpop.permute.xlu0 %2062
      %2064 = vrot.lane.b32.xlu0 %v539, 36
      %v2065 = vpop.permute.xlu0 %2064
      %2066 = vrot.lane.b32.xlu0 %v540, 36
      %v2067 = vpop.permute.xlu0 %2066
      %2068 = vrot.lane.b32.xlu0 %v541, 36
      %v2069 = vpop.permute.xlu0 %2068
      %2070 = vrot.lane.b32.xlu0 %v542, 36
      %v2071 = vpop.permute.xlu0 %2070
      %2072 = vrot.lane.b32.xlu0 %v543, 36
      %v2073 = vpop.permute.xlu0 %2072
      %2074 = vrot.lane.b32.xlu0 %v544, 36
      %v2075 = vpop.permute.xlu0 %2074
      %vm2088 = vcmask 326944
      %2089 = vst.msk [vmem:[#allocation2] sm:$0xff] %vm2088, %v2053
      %2090 = vst.msk [vmem:[#allocation2 + $0x8] sm:$0xff] %vm2088, %v2055
      %2091 = vst.msk [vmem:[#allocation2 + $0x10] sm:$0xff] %vm2088, %v2057
      %2092 = vst.msk [vmem:[#allocation2 + $0x18] sm:$0xff] %vm2088, %v2059
      %2093 = vst.msk [vmem:[#allocation2 + $0x20] sm:$0xff] %vm2088, %v2061
      %2094 = vst.msk [vmem:[#allocation2 + $0x28] sm:$0xff] %vm2088, %v2063
      %2095 = vst.msk [vmem:[#allocation2 + $0x30] sm:$0xff] %vm2088, %v2065
      %2096 = vst.msk [vmem:[#allocation2 + $0x38] sm:$0xff] %vm2088, %v2067
      %2097 = vst.msk [vmem:[#allocation2 + $0x40] sm:$0xff] %vm2088, %v2069
      %2098 = vst.msk [vmem:[#allocation2 + $0x48] sm:$0xff] %vm2088, %v2071
      %2099 = vst.msk [vmem:[#allocation2 + $0x50] sm:$0xff] %vm2088, %v2073
      %2100 = vst.msk [vmem:[#allocation2 + $0x58] sm:$0xff] %vm2088, %v2075
      %v2109 = vunpack.c.l.b16 %v425
      %v2110 = vunpack.c.l.b16 %v427
      %v2111 = vunpack.c.l.b16 %v429
      %v2112 = vunpack.c.l.b16 %v431
      %v2113 = vunpack.c.l.b16 %v433
      %v2114 = vunpack.c.l.b16 %v435
      %v2115 = vunpack.c.l.b16 %v437
      %v2116 = vunpack.c.l.b16 %v439
      %v2117 = vpack.c.b16 %v2110, %v2109
      %v2118 = vpack.c.b16 %v2112, %v2111
      %v2119 = vpack.c.b16 %v2114, %v2113
      %v2120 = vpack.c.b16 %v2116, %v2115
      %2121 = vrot.lane.b32.xlu0 %v2117, 36
      %v2122 = vpop.permute.xlu0 %2121
      %2123 = vrot.lane.b32.xlu0 %v2118, 36
      %v2124 = vpop.permute.xlu0 %2123
      %2125 = vrot.lane.b32.xlu0 %v2119, 36
      %v2126 = vpop.permute.xlu0 %2125
      %2127 = vrot.lane.b32.xlu0 %v2120, 36
      %v2128 = vpop.permute.xlu0 %2127
      %2133 = vst.msk [vmem:[#allocation2 + $0x60] sm:$0xff] %vm2088, %v2122
      %2134 = vst.msk [vmem:[#allocation2 + $0x68] sm:$0xff] %vm2088, %v2124
      %2135 = vst.msk [vmem:[#allocation2 + $0x70] sm:$0xff] %vm2088, %v2126
      %2136 = vst.msk [vmem:[#allocation2 + $0x78] sm:$0xff] %vm2088, %v2128
      %2137 = vrot.lane.b32.xlu0 %v1065, 40
      %v2138 = vpop.permute.xlu0 %2137
      %2139 = vrot.lane.b32.xlu0 %v1066, 40
      %v2140 = vpop.permute.xlu0 %2139
      %2141 = vrot.lane.b32.xlu0 %v1067, 40
      %v2142 = vpop.permute.xlu0 %2141
      %2143 = vrot.lane.b32.xlu0 %v1068, 40
      %v2144 = vpop.permute.xlu0 %2143
      %2145 = vrot.lane.b32.xlu0 %v1069, 40
      %v2146 = vpop.permute.xlu0 %2145
      %2147 = vrot.lane.b32.xlu0 %v1070, 40
      %v2148 = vpop.permute.xlu0 %2147
      %2149 = vrot.lane.b32.xlu0 %v1071, 40
      %v2150 = vpop.permute.xlu0 %2149
      %2151 = vrot.lane.b32.xlu0 %v1072, 40
      %v2152 = vpop.permute.xlu0 %2151
      %2153 = vrot.lane.b32.xlu0 %v1073, 40
      %v2154 = vpop.permute.xlu0 %2153
      %2155 = vrot.lane.b32.xlu0 %v1074, 40
      %v2156 = vpop.permute.xlu0 %2155
      %2157 = vrot.lane.b32.xlu0 %v1075, 40
      %v2158 = vpop.permute.xlu0 %2157
      %2159 = vrot.lane.b32.xlu0 %v1076, 40
      %v2160 = vpop.permute.xlu0 %2159
      %vm2173 = vcmask 359744
      %2174 = vst.msk [vmem:[#allocation2] sm:$0xff] %vm2173, %v2138
      %2175 = vst.msk [vmem:[#allocation2 + $0x8] sm:$0xff] %vm2173, %v2140
      %2176 = vst.msk [vmem:[#allocation2 + $0x10] sm:$0xff] %vm2173, %v2142
      %2177 = vst.msk [vmem:[#allocation2 + $0x18] sm:$0xff] %vm2173, %v2144
      %2178 = vst.msk [vmem:[#allocation2 + $0x20] sm:$0xff] %vm2173, %v2146
      %2179 = vst.msk [vmem:[#allocation2 + $0x28] sm:$0xff] %vm2173, %v2148
      %2180 = vst.msk [vmem:[#allocation2 + $0x30] sm:$0xff] %vm2173, %v2150
      %2181 = vst.msk [vmem:[#allocation2 + $0x38] sm:$0xff] %vm2173, %v2152
      %2182 = vst.msk [vmem:[#allocation2 + $0x40] sm:$0xff] %vm2173, %v2154
      %2183 = vst.msk [vmem:[#allocation2 + $0x48] sm:$0xff] %vm2173, %v2156
      %2184 = vst.msk [vmem:[#allocation2 + $0x50] sm:$0xff] %vm2173, %v2158
      %2185 = vst.msk [vmem:[#allocation2 + $0x58] sm:$0xff] %vm2173, %v2160
      %v2187 = vshrl.u32 %v425, 16
      %v2189 = vrot.slane %v2187, 4
      %v2190 = vshll.u32 %v425, 16
      %v2192 = vrot.slane %v2190, 5
      %v2193 = vor.u32 %v2189, %v2192
      %v2194 = vrot.slane %v2193, 4
      %v2196 = vshll.u32 %v426, 16
      %v2198 = vrot.slane %v2196, 5
      %v2199 = vsel %vm580, %v2194, %v2198
      %v2201 = vshrl.u32 %v427, 16
      %v2203 = vrot.slane %v2201, 4
      %v2204 = vshll.u32 %v427, 16
      %v2206 = vrot.slane %v2204, 5
      %v2207 = vor.u32 %v2203, %v2206
      %v2208 = vrot.slane %v2207, 4
      %v2210 = vshll.u32 %v428, 16
      %v2212 = vrot.slane %v2210, 5
      %v2213 = vsel %vm580, %v2208, %v2212
      %v2215 = vshrl.u32 %v429, 16
      %v2217 = vrot.slane %v2215, 4
      %v2218 = vshll.u32 %v429, 16
      %v2220 = vrot.slane %v2218, 5
      %v2221 = vor.u32 %v2217, %v2220
      %v2222 = vrot.slane %v2221, 4
      %v2224 = vshll.u32 %v430, 16
      %v2226 = vrot.slane %v2224, 5
      %v2227 = vsel %vm580, %v2222, %v2226
      %v2229 = vshrl.u32 %v431, 16
      %v2231 = vrot.slane %v2229, 4
      %v2232 = vshll.u32 %v431, 16
      %v2234 = vrot.slane %v2232, 5
      %v2235 = vor.u32 %v2231, %v2234
      %v2236 = vrot.slane %v2235, 4
      %v2238 = vshll.u32 %v432, 16
      %v2240 = vrot.slane %v2238, 5
      %v2241 = vsel %vm580, %v2236, %v2240
      %v2243 = vshrl.u32 %v433, 16
      %v2245 = vrot.slane %v2243, 4
      %v2246 = vshll.u32 %v433, 16
      %v2248 = vrot.slane %v2246, 5
      %v2249 = vor.u32 %v2245, %v2248
      %v2250 = vrot.slane %v2249, 4
      %v2252 = vshll.u32 %v434, 16
      %v2254 = vrot.slane %v2252, 5
      %v2255 = vsel %vm580, %v2250, %v2254
      %v2257 = vshrl.u32 %v435, 16
      %v2259 = vrot.slane %v2257, 4
      %v2260 = vshll.u32 %v435, 16
      %v2262 = vrot.slane %v2260, 5
      %v2263 = vor.u32 %v2259, %v2262
      %v2264 = vrot.slane %v2263, 4
      %v2266 = vshll.u32 %v436, 16
      %v2268 = vrot.slane %v2266, 5
      %v2269 = vsel %vm580, %v2264, %v2268
      %v2271 = vshrl.u32 %v437, 16
      %v2273 = vrot.slane %v2271, 4
      %v2274 = vshll.u32 %v437, 16
      %v2276 = vrot.slane %v2274, 5
      %v2277 = vor.u32 %v2273, %v2276
      %v2278 = vrot.slane %v2277, 4
      %v2280 = vshll.u32 %v438, 16
      %v2282 = vrot.slane %v2280, 5
      %v2283 = vsel %vm580, %v2278, %v2282
      %v2285 = vshrl.u32 %v439, 16
      %v2287 = vrot.slane %v2285, 4
      %v2288 = vshll.u32 %v439, 16
      %v2290 = vrot.slane %v2288, 5
      %v2291 = vor.u32 %v2287, %v2290
      %v2292 = vrot.slane %v2291, 4
      %v2294 = vshll.u32 %v440, 16
      %v2296 = vrot.slane %v2294, 5
      %v2297 = vsel %vm580, %v2292, %v2296
      %v2298 = vunpack.c.l.b16 %v2199
      %v2299 = vunpack.c.l.b16 %v2213
      %v2300 = vunpack.c.l.b16 %v2227
      %v2301 = vunpack.c.l.b16 %v2241
      %v2302 = vunpack.c.l.b16 %v2255
      %v2303 = vunpack.c.l.b16 %v2269
      %v2304 = vunpack.c.l.b16 %v2283
      %v2305 = vunpack.c.l.b16 %v2297
      %v2306 = vpack.c.b16 %v2299, %v2298
      %v2307 = vpack.c.b16 %v2301, %v2300
      %v2308 = vpack.c.b16 %v2303, %v2302
      %v2309 = vpack.c.b16 %v2305, %v2304
      %2310 = vrot.lane.b32.xlu0 %v2306, 40
      %v2311 = vpop.permute.xlu0 %2310
      %2312 = vrot.lane.b32.xlu0 %v2307, 40
      %v2313 = vpop.permute.xlu0 %2312
      %2314 = vrot.lane.b32.xlu0 %v2308, 40
      %v2315 = vpop.permute.xlu0 %2314
      %2316 = vrot.lane.b32.xlu0 %v2309, 40
      %v2317 = vpop.permute.xlu0 %2316
      %2322 = vst.msk [vmem:[#allocation2 + $0x60] sm:$0xff] %vm2173, %v2311
      %2323 = vst.msk [vmem:[#allocation2 + $0x68] sm:$0xff] %vm2173, %v2313
      %2324 = vst.msk [vmem:[#allocation2 + $0x70] sm:$0xff] %vm2173, %v2315
      %2325 = vst.msk [vmem:[#allocation2 + $0x78] sm:$0xff] %vm2173, %v2317
      %2326 = vrot.lane.b32.xlu0 %v1341, 44
      %v2327 = vpop.permute.xlu0 %2326
      %2328 = vrot.lane.b32.xlu0 %v1342, 44
      %v2329 = vpop.permute.xlu0 %2328
      %2330 = vrot.lane.b32.xlu0 %v1343, 44
      %v2331 = vpop.permute.xlu0 %2330
      %2332 = vrot.lane.b32.xlu0 %v1344, 44
      %v2333 = vpop.permute.xlu0 %2332
      %2334 = vrot.lane.b32.xlu0 %v1345, 44
      %v2335 = vpop.permute.xlu0 %2334
      %2336 = vrot.lane.b32.xlu0 %v1346, 44
      %v2337 = vpop.permute.xlu0 %2336
      %2338 = vrot.lane.b32.xlu0 %v1347, 44
      %v2339 = vpop.permute.xlu0 %2338
      %2340 = vrot.lane.b32.xlu0 %v1348, 44
      %v2341 = vpop.permute.xlu0 %2340
      %2342 = vrot.lane.b32.xlu0 %v1349, 44
      %v2343 = vpop.permute.xlu0 %2342
      %2344 = vrot.lane.b32.xlu0 %v1350, 44
      %v2345 = vpop.permute.xlu0 %2344
      %2346 = vrot.lane.b32.xlu0 %v1351, 44
      %v2347 = vpop.permute.xlu0 %2346
      %2348 = vrot.lane.b32.xlu0 %v1352, 44
      %v2349 = vpop.permute.xlu0 %2348
      %vm2362 = vcmask 392544
      %2363 = vst.msk [vmem:[#allocation2] sm:$0xff] %vm2362, %v2327
      %2364 = vst.msk [vmem:[#allocation2 + $0x8] sm:$0xff] %vm2362, %v2329
      %2365 = vst.msk [vmem:[#allocation2 + $0x10] sm:$0xff] %vm2362, %v2331
      %2366 = vst.msk [vmem:[#allocation2 + $0x18] sm:$0xff] %vm2362, %v2333
      %2367 = vst.msk [vmem:[#allocation2 + $0x20] sm:$0xff] %vm2362, %v2335
      %2368 = vst.msk [vmem:[#allocation2 + $0x28] sm:$0xff] %vm2362, %v2337
      %2369 = vst.msk [vmem:[#allocation2 + $0x30] sm:$0xff] %vm2362, %v2339
      %2370 = vst.msk [vmem:[#allocation2 + $0x38] sm:$0xff] %vm2362, %v2341
      %2371 = vst.msk [vmem:[#allocation2 + $0x40] sm:$0xff] %vm2362, %v2343
      %2372 = vst.msk [vmem:[#allocation2 + $0x48] sm:$0xff] %vm2362, %v2345
      %2373 = vst.msk [vmem:[#allocation2 + $0x50] sm:$0xff] %vm2362, %v2347
      %2374 = vst.msk [vmem:[#allocation2 + $0x58] sm:$0xff] %vm2362, %v2349
      %v2383 = vrot.slane %v425, 5
      %v2384 = vrot.slane %v2383, 4
      %v2385 = vrot.slane %v426, 5
      %v2386 = vsel %vm1176, %v2384, %v2385
      %v2387 = vrot.slane %v427, 5
      %v2388 = vrot.slane %v2387, 4
      %v2389 = vrot.slane %v428, 5
      %v2390 = vsel %vm1176, %v2388, %v2389
      %v2391 = vrot.slane %v429, 5
      %v2392 = vrot.slane %v2391, 4
      %v2393 = vrot.slane %v430, 5
      %v2394 = vsel %vm1176, %v2392, %v2393
      %v2395 = vrot.slane %v431, 5
      %v2396 = vrot.slane %v2395, 4
      %v2397 = vrot.slane %v432, 5
      %v2398 = vsel %vm1176, %v2396, %v2397
      %v2399 = vrot.slane %v433, 5
      %v2400 = vrot.slane %v2399, 4
      %v2401 = vrot.slane %v434, 5
      %v2402 = vsel %vm1176, %v2400, %v2401
      %v2403 = vrot.slane %v435, 5
      %v2404 = vrot.slane %v2403, 4
      %v2405 = vrot.slane %v436, 5
      %v2406 = vsel %vm1176, %v2404, %v2405
      %v2407 = vrot.slane %v437, 5
      %v2408 = vrot.slane %v2407, 4
      %v2409 = vrot.slane %v438, 5
      %v2410 = vsel %vm1176, %v2408, %v2409
      %v2411 = vrot.slane %v439, 5
      %v2412 = vrot.slane %v2411, 4
      %v2413 = vrot.slane %v440, 5
      %v2414 = vsel %vm1176, %v2412, %v2413
      %v2415 = vunpack.c.l.b16 %v2386
      %v2416 = vunpack.c.l.b16 %v2390
      %v2417 = vunpack.c.l.b16 %v2394
      %v2418 = vunpack.c.l.b16 %v2398
      %v2419 = vunpack.c.l.b16 %v2402
      %v2420 = vunpack.c.l.b16 %v2406
      %v2421 = vunpack.c.l.b16 %v2410
      %v2422 = vunpack.c.l.b16 %v2414
      %v2423 = vpack.c.b16 %v2416, %v2415
      %v2424 = vpack.c.b16 %v2418, %v2417
      %v2425 = vpack.c.b16 %v2420, %v2419
      %v2426 = vpack.c.b16 %v2422, %v2421
      %2427 = vrot.lane.b32.xlu0 %v2423, 44
      %v2428 = vpop.permute.xlu0 %2427
      %2429 = vrot.lane.b32.xlu0 %v2424, 44
      %v2430 = vpop.permute.xlu0 %2429
      %2431 = vrot.lane.b32.xlu0 %v2425, 44
      %v2432 = vpop.permute.xlu0 %2431
      %2433 = vrot.lane.b32.xlu0 %v2426, 44
      %v2434 = vpop.permute.xlu0 %2433
      %2439 = vst.msk [vmem:[#allocation2 + $0x60] sm:$0xff] %vm2362, %v2428
      %2440 = vst.msk [vmem:[#allocation2 + $0x68] sm:$0xff] %vm2362, %v2430
      %2441 = vst.msk [vmem:[#allocation2 + $0x70] sm:$0xff] %vm2362, %v2432
      %2442 = vst.msk [vmem:[#allocation2 + $0x78] sm:$0xff] %vm2362, %v2434
      %2443 = vrot.lane.b32.xlu0 %v1430, 48
      %v2444 = vpop.permute.xlu0 %2443
      %2445 = vrot.lane.b32.xlu0 %v1431, 48
      %v2446 = vpop.permute.xlu0 %2445
      %2447 = vrot.lane.b32.xlu0 %v1432, 48
      %v2448 = vpop.permute.xlu0 %2447
      %2449 = vrot.lane.b32.xlu0 %v1433, 48
      %v2450 = vpop.permute.xlu0 %2449
      %2451 = vrot.lane.b32.xlu0 %v1434, 48
      %v2452 = vpop.permute.xlu0 %2451
      %2453 = vrot.lane.b32.xlu0 %v1435, 48
      %v2454 = vpop.permute.xlu0 %2453
      %2455 = vrot.lane.b32.xlu0 %v1436, 48
      %v2456 = vpop.permute.xlu0 %2455
      %2457 = vrot.lane.b32.xlu0 %v1437, 48
      %v2458 = vpop.permute.xlu0 %2457
      %2459 = vrot.lane.b32.xlu0 %v1438, 48
      %v2460 = vpop.permute.xlu0 %2459
      %2461 = vrot.lane.b32.xlu0 %v1439, 48
      %v2462 = vpop.permute.xlu0 %2461
      %2463 = vrot.lane.b32.xlu0 %v1440, 48
      %v2464 = vpop.permute.xlu0 %2463
      %2465 = vrot.lane.b32.xlu0 %v1441, 48
      %v2466 = vpop.permute.xlu0 %2465
      %vm2479 = vcmask 425344
      %2480 = vst.msk [vmem:[#allocation2] sm:$0xff] %vm2479, %v2444
      %2481 = vst.msk [vmem:[#allocation2 + $0x8] sm:$0xff] %vm2479, %v2446
      %2482 = vst.msk [vmem:[#allocation2 + $0x10] sm:$0xff] %vm2479, %v2448
      %2483 = vst.msk [vmem:[#allocation2 + $0x18] sm:$0xff] %vm2479, %v2450
      %2484 = vst.msk [vmem:[#allocation2 + $0x20] sm:$0xff] %vm2479, %v2452
      %2485 = vst.msk [vmem:[#allocation2 + $0x28] sm:$0xff] %vm2479, %v2454
      %2486 = vst.msk [vmem:[#allocation2 + $0x30] sm:$0xff] %vm2479, %v2456
      %2487 = vst.msk [vmem:[#allocation2 + $0x38] sm:$0xff] %vm2479, %v2458
      %2488 = vst.msk [vmem:[#allocation2 + $0x40] sm:$0xff] %vm2479, %v2460
      %2489 = vst.msk [vmem:[#allocation2 + $0x48] sm:$0xff] %vm2479, %v2462
      %2490 = vst.msk [vmem:[#allocation2 + $0x50] sm:$0xff] %vm2479, %v2464
      %2491 = vst.msk [vmem:[#allocation2 + $0x58] sm:$0xff] %vm2479, %v2466
      %v2493 = vunpack.c.l.b16 %v441
      %v2494 = vpack.c.b16 %v2111, %v2110
      %v2495 = vpack.c.b16 %v2113, %v2112
      %v2496 = vpack.c.b16 %v2115, %v2114
      %v2497 = vpack.c.b16 %v2493, %v2116
      %2498 = vrot.lane.b32.xlu0 %v2494, 48
      %v2499 = vpop.permute.xlu0 %2498
      %2500 = vrot.lane.b32.xlu0 %v2495, 48
      %v2501 = vpop.permute.xlu0 %2500
      %2502 = vrot.lane.b32.xlu0 %v2496, 48
      %v2503 = vpop.permute.xlu0 %2502
      %2504 = vrot.lane.b32.xlu0 %v2497, 48
      %v2505 = vpop.permute.xlu0 %2504
      %2510 = vst.msk [vmem:[#allocation2 + $0x60] sm:$0xff] %vm2479, %v2499
      %2511 = vst.msk [vmem:[#allocation2 + $0x68] sm:$0xff] %vm2479, %v2501
      %2512 = vst.msk [vmem:[#allocation2 + $0x70] sm:$0xff] %vm2479, %v2503
      %2513 = vst.msk [vmem:[#allocation2 + $0x78] sm:$0xff] %vm2479, %v2505
      %2514 = vrot.lane.b32.xlu0 %v1571, 52
      %v2515 = vpop.permute.xlu0 %2514
      %2516 = vrot.lane.b32.xlu0 %v1572, 52
      %v2517 = vpop.permute.xlu0 %2516
      %2518 = vrot.lane.b32.xlu0 %v1573, 52
      %v2519 = vpop.permute.xlu0 %2518
      %2520 = vrot.lane.b32.xlu0 %v1574, 52
      %v2521 = vpop.permute.xlu0 %2520
      %2522 = vrot.lane.b32.xlu0 %v1575, 52
      %v2523 = vpop.permute.xlu0 %2522
      %2524 = vrot.lane.b32.xlu0 %v1576, 52
      %v2525 = vpop.permute.xlu0 %2524
      %2526 = vrot.lane.b32.xlu0 %v1577, 52
      %v2527 = vpop.permute.xlu0 %2526
      %2528 = vrot.lane.b32.xlu0 %v1578, 52
      %v2529 = vpop.permute.xlu0 %2528
      %2530 = vrot.lane.b32.xlu0 %v1579, 52
      %v2531 = vpop.permute.xlu0 %2530
      %2532 = vrot.lane.b32.xlu0 %v1580, 52
      %v2533 = vpop.permute.xlu0 %2532
      %2534 = vrot.lane.b32.xlu0 %v1581, 52
      %v2535 = vpop.permute.xlu0 %2534
      %2536 = vrot.lane.b32.xlu0 %v1582, 52
      %v2537 = vpop.permute.xlu0 %2536
      %vm2550 = vcmask 458144
      %2551 = vst.msk [vmem:[#allocation2] sm:$0xff] %vm2550, %v2515
      %2552 = vst.msk [vmem:[#allocation2 + $0x8] sm:$0xff] %vm2550, %v2517
      %2553 = vst.msk [vmem:[#allocation2 + $0x10] sm:$0xff] %vm2550, %v2519
      %2554 = vst.msk [vmem:[#allocation2 + $0x18] sm:$0xff] %vm2550, %v2521
      %2555 = vst.msk [vmem:[#allocation2 + $0x20] sm:$0xff] %vm2550, %v2523
      %2556 = vst.msk [vmem:[#allocation2 + $0x28] sm:$0xff] %vm2550, %v2525
      %2557 = vst.msk [vmem:[#allocation2 + $0x30] sm:$0xff] %vm2550, %v2527
      %2558 = vst.msk [vmem:[#allocation2 + $0x38] sm:$0xff] %vm2550, %v2529
      %2559 = vst.msk [vmem:[#allocation2 + $0x40] sm:$0xff] %vm2550, %v2531
      %2560 = vst.msk [vmem:[#allocation2 + $0x48] sm:$0xff] %vm2550, %v2533
      %2561 = vst.msk [vmem:[#allocation2 + $0x50] sm:$0xff] %vm2550, %v2535
      %2562 = vst.msk [vmem:[#allocation2 + $0x58] sm:$0xff] %vm2550, %v2537
      %v2564 = vshrl.u32 %v441, 16
      %v2566 = vrot.slane %v2564, 4
      %v2567 = vshll.u32 %v441, 16
      %v2569 = vrot.slane %v2567, 5
      %v2570 = vor.u32 %v2566, %v2569
      %v2571 = vrot.slane %v2570, 4
      %v2573 = vshll.u32 %v442, 16
      %v2575 = vrot.slane %v2573, 5
      %v2576 = vsel %vm580, %v2571, %v2575
      %v2577 = vunpack.c.l.b16 %v2576
      %v2578 = vpack.c.b16 %v2300, %v2299
      %v2579 = vpack.c.b16 %v2302, %v2301
      %v2580 = vpack.c.b16 %v2304, %v2303
      %v2581 = vpack.c.b16 %v2577, %v2305
      %2582 = vrot.lane.b32.xlu0 %v2578, 52
      %v2583 = vpop.permute.xlu0 %2582
      %2584 = vrot.lane.b32.xlu0 %v2579, 52
      %v2585 = vpop.permute.xlu0 %2584
      %2586 = vrot.lane.b32.xlu0 %v2580, 52
      %v2587 = vpop.permute.xlu0 %2586
      %2588 = vrot.lane.b32.xlu0 %v2581, 52
      %v2589 = vpop.permute.xlu0 %2588
      %2594 = vst.msk [vmem:[#allocation2 + $0x60] sm:$0xff] %vm2550, %v2583
      %2595 = vst.msk [vmem:[#allocation2 + $0x68] sm:$0xff] %vm2550, %v2585
      %2596 = vst.msk [vmem:[#allocation2 + $0x70] sm:$0xff] %vm2550, %v2587
      %2597 = vst.msk [vmem:[#allocation2 + $0x78] sm:$0xff] %vm2550, %v2589
      %2598 = vrot.lane.b32.xlu0 %v1676, 56
      %v2599 = vpop.permute.xlu0 %2598
      %2600 = vrot.lane.b32.xlu0 %v1677, 56
      %v2601 = vpop.permute.xlu0 %2600
      %2602 = vrot.lane.b32.xlu0 %v1678, 56
      %v2603 = vpop.permute.xlu0 %2602
      %2604 = vrot.lane.b32.xlu0 %v1679, 56
      %v2605 = vpop.permute.xlu0 %2604
      %2606 = vrot.lane.b32.xlu0 %v1680, 56
      %v2607 = vpop.permute.xlu0 %2606
      %2608 = vrot.lane.b32.xlu0 %v1681, 56
      %v2609 = vpop.permute.xlu0 %2608
      %2610 = vrot.lane.b32.xlu0 %v1682, 56
      %v2611 = vpop.permute.xlu0 %2610
      %2612 = vrot.lane.b32.xlu0 %v1683, 56
      %v2613 = vpop.permute.xlu0 %2612
      %2614 = vrot.lane.b32.xlu0 %v1684, 56
      %v2615 = vpop.permute.xlu0 %2614
      %2616 = vrot.lane.b32.xlu0 %v1685, 56
      %v2617 = vpop.permute.xlu0 %2616
      %2618 = vrot.lane.b32.xlu0 %v1686, 56
      %v2619 = vpop.permute.xlu0 %2618
      %2620 = vrot.lane.b32.xlu0 %v1687, 56
      %v2621 = vpop.permute.xlu0 %2620
      %vm2634 = vcmask 490944
      %2635 = vst.msk [vmem:[#allocation2] sm:$0xff] %vm2634, %v2599
      %2636 = vst.msk [vmem:[#allocation2 + $0x8] sm:$0xff] %vm2634, %v2601
      %2637 = vst.msk [vmem:[#allocation2 + $0x10] sm:$0xff] %vm2634, %v2603
      %2638 = vst.msk [vmem:[#allocation2 + $0x18] sm:$0xff] %vm2634, %v2605
      %2639 = vst.msk [vmem:[#allocation2 + $0x20] sm:$0xff] %vm2634, %v2607
      %2640 = vst.msk [vmem:[#allocation2 + $0x28] sm:$0xff] %vm2634, %v2609
      %2641 = vst.msk [vmem:[#allocation2 + $0x30] sm:$0xff] %vm2634, %v2611
      %2642 = vst.msk [vmem:[#allocation2 + $0x38] sm:$0xff] %vm2634, %v2613
      %2643 = vst.msk [vmem:[#allocation2 + $0x40] sm:$0xff] %vm2634, %v2615
      %2644 = vst.msk [vmem:[#allocation2 + $0x48] sm:$0xff] %vm2634, %v2617
      %2645 = vst.msk [vmem:[#allocation2 + $0x50] sm:$0xff] %vm2634, %v2619
      %2646 = vst.msk [vmem:[#allocation2 + $0x58] sm:$0xff] %vm2634, %v2621
      %v2648 = vrot.slane %v441, 5
      %v2649 = vrot.slane %v2648, 4
      %v2650 = vrot.slane %v442, 5
      %v2651 = vsel %vm1176, %v2649, %v2650
      %v2652 = vunpack.c.l.b16 %v2651
      %v2653 = vpack.c.b16 %v2417, %v2416
      %v2654 = vpack.c.b16 %v2419, %v2418
      %v2655 = vpack.c.b16 %v2421, %v2420
      %v2656 = vpack.c.b16 %v2652, %v2422
      %2657 = vrot.lane.b32.xlu0 %v2653, 56
      %v2658 = vpop.permute.xlu0 %2657
      %2659 = vrot.lane.b32.xlu0 %v2654, 56
      %v2660 = vpop.permute.xlu0 %2659
      %2661 = vrot.lane.b32.xlu0 %v2655, 56
      %v2662 = vpop.permute.xlu0 %2661
      %2663 = vrot.lane.b32.xlu0 %v2656, 56
      %v2664 = vpop.permute.xlu0 %2663
      %2669 = vst.msk [vmem:[#allocation2 + $0x60] sm:$0xff] %vm2634, %v2658
      %2670 = vst.msk [vmem:[#allocation2 + $0x68] sm:$0xff] %vm2634, %v2660
      %2671 = vst.msk [vmem:[#allocation2 + $0x70] sm:$0xff] %vm2634, %v2662
      %2672 = vst.msk [vmem:[#allocation2 + $0x78] sm:$0xff] %vm2634, %v2664
      %2673 = vrot.lane.b32.xlu0 %v534, 60
      %v2674 = vpop.permute.xlu0 %2673
      %2675 = vrot.lane.b32.xlu0 %v535, 60
      %v2676 = vpop.permute.xlu0 %2675
      %2677 = vrot.lane.b32.xlu0 %v536, 60
      %v2678 = vpop.permute.xlu0 %2677
      %2679 = vrot.lane.b32.xlu0 %v1762, 60
      %v2680 = vpop.permute.xlu0 %2679
      %2681 = vrot.lane.b32.xlu0 %v538, 60
      %v2682 = vpop.permute.xlu0 %2681
      %2683 = vrot.lane.b32.xlu0 %v539, 60
      %v2684 = vpop.permute.xlu0 %2683
      %2685 = vrot.lane.b32.xlu0 %v540, 60
      %v2686 = vpop.permute.xlu0 %2685
      %2687 = vrot.lane.b32.xlu0 %v1763, 60
      %v2688 = vpop.permute.xlu0 %2687
      %2689 = vrot.lane.b32.xlu0 %v542, 60
      %v2690 = vpop.permute.xlu0 %2689
      %2691 = vrot.lane.b32.xlu0 %v543, 60
      %v2692 = vpop.permute.xlu0 %2691
      %2693 = vrot.lane.b32.xlu0 %v544, 60
      %v2694 = vpop.permute.xlu0 %2693
      %2695 = vrot.lane.b32.xlu0 %v1764, 60
      %v2696 = vpop.permute.xlu0 %2695
      %vm2709 = vcmask 523744
      %2710 = vst.msk [vmem:[#allocation2] sm:$0xff] %vm2709, %v2674
      %2711 = vst.msk [vmem:[#allocation2 + $0x8] sm:$0xff] %vm2709, %v2676
      %2712 = vst.msk [vmem:[#allocation2 + $0x10] sm:$0xff] %vm2709, %v2678
      %2713 = vst.msk [vmem:[#allocation2 + $0x18] sm:$0xff] %vm2709, %v2680
      %2714 = vst.msk [vmem:[#allocation2 + $0x20] sm:$0xff] %vm2709, %v2682
      %2715 = vst.msk [vmem:[#allocation2 + $0x28] sm:$0xff] %vm2709, %v2684
      %2716 = vst.msk [vmem:[#allocation2 + $0x30] sm:$0xff] %vm2709, %v2686
      %2717 = vst.msk [vmem:[#allocation2 + $0x38] sm:$0xff] %vm2709, %v2688
      %2718 = vst.msk [vmem:[#allocation2 + $0x40] sm:$0xff] %vm2709, %v2690
      %2719 = vst.msk [vmem:[#allocation2 + $0x48] sm:$0xff] %vm2709, %v2692
      %2720 = vst.msk [vmem:[#allocation2 + $0x50] sm:$0xff] %vm2709, %v2694
      %2721 = vst.msk [vmem:[#allocation2 + $0x58] sm:$0xff] %vm2709, %v2696
      %v2723 = vunpack.c.l.b16 %v443
      %v2724 = vpack.c.b16 %v2723, %v2493
      %2725 = vrot.lane.b32.xlu0 %v2118, 60
      %v2726 = vpop.permute.xlu0 %2725
      %2727 = vrot.lane.b32.xlu0 %v2119, 60
      %v2728 = vpop.permute.xlu0 %2727
      %2729 = vrot.lane.b32.xlu0 %v2120, 60
      %v2730 = vpop.permute.xlu0 %2729
      %2731 = vrot.lane.b32.xlu0 %v2724, 60
      %v2732 = vpop.permute.xlu0 %2731
      %2737 = vst.msk [vmem:[#allocation2 + $0x60] sm:$0xff] %vm2709, %v2726
      %2738 = vst.msk [vmem:[#allocation2 + $0x68] sm:$0xff] %vm2709, %v2728
      %2739 = vst.msk [vmem:[#allocation2 + $0x70] sm:$0xff] %vm2709, %v2730
      %2740 = vst.msk [vmem:[#allocation2 + $0x78] sm:$0xff] %vm2709, %v2732
      %2741 = vrot.lane.b32.xlu0 %v1066, 64
      %v2742 = vpop.permute.xlu0 %2741
      %2743 = vrot.lane.b32.xlu0 %v1067, 64
      %v2744 = vpop.permute.xlu0 %2743
      %2745 = vrot.lane.b32.xlu0 %v1068, 64
      %v2746 = vpop.permute.xlu0 %2745
      %2747 = vrot.lane.b32.xlu0 %v1891, 64
      %v2748 = vpop.permute.xlu0 %2747
      %2749 = vrot.lane.b32.xlu0 %v1070, 64
      %v2750 = vpop.permute.xlu0 %2749
      %2751 = vrot.lane.b32.xlu0 %v1071, 64
      %v2752 = vpop.permute.xlu0 %2751
      %2753 = vrot.lane.b32.xlu0 %v1072, 64
      %v2754 = vpop.permute.xlu0 %2753
      %2755 = vrot.lane.b32.xlu0 %v1892, 64
      %v2756 = vpop.permute.xlu0 %2755
      %2757 = vrot.lane.b32.xlu0 %v1074, 64
      %v2758 = vpop.permute.xlu0 %2757
      %2759 = vrot.lane.b32.xlu0 %v1075, 64
      %v2760 = vpop.permute.xlu0 %2759
      %2761 = vrot.lane.b32.xlu0 %v1076, 64
      %v2762 = vpop.permute.xlu0 %2761
      %2763 = vrot.lane.b32.xlu0 %v1893, 64
      %v2764 = vpop.permute.xlu0 %2763
      %vm2777 = vcmask 556544
      %2778 = vst.msk [vmem:[#allocation2] sm:$0xff] %vm2777, %v2742
      %2779 = vst.msk [vmem:[#allocation2 + $0x8] sm:$0xff] %vm2777, %v2744
      %2780 = vst.msk [vmem:[#allocation2 + $0x10] sm:$0xff] %vm2777, %v2746
      %2781 = vst.msk [vmem:[#allocation2 + $0x18] sm:$0xff] %vm2777, %v2748
      %2782 = vst.msk [vmem:[#allocation2 + $0x20] sm:$0xff] %vm2777, %v2750
      %2783 = vst.msk [vmem:[#allocation2 + $0x28] sm:$0xff] %vm2777, %v2752
      %2784 = vst.msk [vmem:[#allocation2 + $0x30] sm:$0xff] %vm2777, %v2754
      %2785 = vst.msk [vmem:[#allocation2 + $0x38] sm:$0xff] %vm2777, %v2756
      %2786 = vst.msk [vmem:[#allocation2 + $0x40] sm:$0xff] %vm2777, %v2758
      %2787 = vst.msk [vmem:[#allocation2 + $0x48] sm:$0xff] %vm2777, %v2760
      %2788 = vst.msk [vmem:[#allocation2 + $0x50] sm:$0xff] %vm2777, %v2762
      %2789 = vst.msk [vmem:[#allocation2 + $0x58] sm:$0xff] %vm2777, %v2764
      %v2791 = vshrl.u32 %v443, 16
      %v2793 = vrot.slane %v2791, 4
      %v2794 = vshll.u32 %v443, 16
      %v2796 = vrot.slane %v2794, 5
      %v2797 = vor.u32 %v2793, %v2796
      %v2798 = vrot.slane %v2797, 4
      %v2800 = vshll.u32 %v444, 16
      %v2802 = vrot.slane %v2800, 5
      %v2803 = vsel %vm580, %v2798, %v2802
      %v2804 = vunpack.c.l.b16 %v2803
      %v2805 = vpack.c.b16 %v2804, %v2577
      %2806 = vrot.lane.b32.xlu0 %v2307, 64
      %v2807 = vpop.permute.xlu0 %2806
      %2808 = vrot.lane.b32.xlu0 %v2308, 64
      %v2809 = vpop.permute.xlu0 %2808
      %2810 = vrot.lane.b32.xlu0 %v2309, 64
      %v2811 = vpop.permute.xlu0 %2810
      %2812 = vrot.lane.b32.xlu0 %v2805, 64
      %v2813 = vpop.permute.xlu0 %2812
      %2818 = vst.msk [vmem:[#allocation2 + $0x60] sm:$0xff] %vm2777, %v2807
      %2819 = vst.msk [vmem:[#allocation2 + $0x68] sm:$0xff] %vm2777, %v2809
      %2820 = vst.msk [vmem:[#allocation2 + $0x70] sm:$0xff] %vm2777, %v2811
      %2821 = vst.msk [vmem:[#allocation2 + $0x78] sm:$0xff] %vm2777, %v2813
      %2822 = vrot.lane.b32.xlu0 %v1342, 68
      %v2823 = vpop.permute.xlu0 %2822
      %2824 = vrot.lane.b32.xlu0 %v1343, 68
      %v2825 = vpop.permute.xlu0 %2824
      %2826 = vrot.lane.b32.xlu0 %v1344, 68
      %v2827 = vpop.permute.xlu0 %2826
      %2828 = vrot.lane.b32.xlu0 %v1984, 68
      %v2829 = vpop.permute.xlu0 %2828
      %2830 = vrot.lane.b32.xlu0 %v1346, 68
      %v2831 = vpop.permute.xlu0 %2830
      %2832 = vrot.lane.b32.xlu0 %v1347, 68
      %v2833 = vpop.permute.xlu0 %2832
      %2834 = vrot.lane.b32.xlu0 %v1348, 68
      %v2835 = vpop.permute.xlu0 %2834
      %2836 = vrot.lane.b32.xlu0 %v1985, 68
      %v2837 = vpop.permute.xlu0 %2836
      %2838 = vrot.lane.b32.xlu0 %v1350, 68
      %v2839 = vpop.permute.xlu0 %2838
      %2840 = vrot.lane.b32.xlu0 %v1351, 68
      %v2841 = vpop.permute.xlu0 %2840
      %2842 = vrot.lane.b32.xlu0 %v1352, 68
      %v2843 = vpop.permute.xlu0 %2842
      %2844 = vrot.lane.b32.xlu0 %v1986, 68
      %v2845 = vpop.permute.xlu0 %2844
      %vm2858 = vcmask 589344
      %2859 = vst.msk [vmem:[#allocation2] sm:$0xff] %vm2858, %v2823
      %2860 = vst.msk [vmem:[#allocation2 + $0x8] sm:$0xff] %vm2858, %v2825
      %2861 = vst.msk [vmem:[#allocation2 + $0x10] sm:$0xff] %vm2858, %v2827
      %2862 = vst.msk [vmem:[#allocation2 + $0x18] sm:$0xff] %vm2858, %v2829
      %2863 = vst.msk [vmem:[#allocation2 + $0x20] sm:$0xff] %vm2858, %v2831
      %2864 = vst.msk [vmem:[#allocation2 + $0x28] sm:$0xff] %vm2858, %v2833
      %2865 = vst.msk [vmem:[#allocation2 + $0x30] sm:$0xff] %vm2858, %v2835
      %2866 = vst.msk [vmem:[#allocation2 + $0x38] sm:$0xff] %vm2858, %v2837
      %2867 = vst.msk [vmem:[#allocation2 + $0x40] sm:$0xff] %vm2858, %v2839
      %2868 = vst.msk [vmem:[#allocation2 + $0x48] sm:$0xff] %vm2858, %v2841
      %2869 = vst.msk [vmem:[#allocation2 + $0x50] sm:$0xff] %vm2858, %v2843
      %2870 = vst.msk [vmem:[#allocation2 + $0x58] sm:$0xff] %vm2858, %v2845
      %v2872 = vrot.slane %v443, 5
      %v2873 = vrot.slane %v2872, 4
      %v2874 = vrot.slane %v444, 5
      %v2875 = vsel %vm1176, %v2873, %v2874
      %v2876 = vunpack.c.l.b16 %v2875
      %v2877 = vpack.c.b16 %v2876, %v2652
      %2878 = vrot.lane.b32.xlu0 %v2424, 68
      %v2879 = vpop.permute.xlu0 %2878
      %2880 = vrot.lane.b32.xlu0 %v2425, 68
      %v2881 = vpop.permute.xlu0 %2880
      %2882 = vrot.lane.b32.xlu0 %v2426, 68
      %v2883 = vpop.permute.xlu0 %2882
      %2884 = vrot.lane.b32.xlu0 %v2877, 68
      %v2885 = vpop.permute.xlu0 %2884
      %2890 = vst.msk [vmem:[#allocation2 + $0x60] sm:$0xff] %vm2858, %v2879
      %2891 = vst.msk [vmem:[#allocation2 + $0x68] sm:$0xff] %vm2858, %v2881
      %2892 = vst.msk [vmem:[#allocation2 + $0x70] sm:$0xff] %vm2858, %v2883
      %2893 = vst.msk [vmem:[#allocation2 + $0x78] sm:$0xff] %vm2858, %v2885
      %2894 = vrot.lane.b32.xlu0 %v537, 72
      %v2895 = vpop.permute.xlu0 %2894
      %2896 = vrot.lane.b32.xlu0 %v538, 72
      %v2897 = vpop.permute.xlu0 %2896
      %2898 = vrot.lane.b32.xlu0 %v539, 72
      %v2899 = vpop.permute.xlu0 %2898
      %2900 = vrot.lane.b32.xlu0 %v540, 72
      %v2901 = vpop.permute.xlu0 %2900
      %2902 = vrot.lane.b32.xlu0 %v541, 72
      %v2903 = vpop.permute.xlu0 %2902
      %2904 = vrot.lane.b32.xlu0 %v542, 72
      %v2905 = vpop.permute.xlu0 %2904
      %2906 = vrot.lane.b32.xlu0 %v543, 72
      %v2907 = vpop.permute.xlu0 %2906
      %2908 = vrot.lane.b32.xlu0 %v544, 72
      %v2909 = vpop.permute.xlu0 %2908
      %vm2918 = vcmask 622144
      %2919 = vst.msk [vmem:[#allocation2] sm:$0xff] %vm2918, %v2895
      %2920 = vst.msk [vmem:[#allocation2 + $0x8] sm:$0xff] %vm2918, %v2897
      %2921 = vst.msk [vmem:[#allocation2 + $0x10] sm:$0xff] %vm2918, %v2899
      %2922 = vst.msk [vmem:[#allocation2 + $0x18] sm:$0xff] %vm2918, %v2901
      %2923 = vst.msk [vmem:[#allocation2 + $0x20] sm:$0xff] %vm2918, %v2903
      %2924 = vst.msk [vmem:[#allocation2 + $0x28] sm:$0xff] %vm2918, %v2905
      %2925 = vst.msk [vmem:[#allocation2 + $0x30] sm:$0xff] %vm2918, %v2907
      %2926 = vst.msk [vmem:[#allocation2 + $0x38] sm:$0xff] %vm2918, %v2909
      %v2935 = vunpack.c.l.b16 %v445
      %v2936 = vunpack.c.l.b16 %v447
      %v2937 = vunpack.c.l.b16 %v449
      %v2938 = vunpack.c.l.b16 %v451
      %v2939 = vunpack.c.l.b16 %v453
      %v2940 = vunpack.c.l.b16 %v455
      %v2941 = vunpack.c.l.b16 %v457
      %v2942 = vunpack.c.l.b16 %v459
      %v2943 = vpack.c.b16 %v2936, %v2935
      %v2944 = vpack.c.b16 %v2938, %v2937
      %v2945 = vpack.c.b16 %v2940, %v2939
      %v2946 = vpack.c.b16 %v2942, %v2941
      %2947 = vrot.lane.b32.xlu0 %v2117, 72
      %v2948 = vpop.permute.xlu0 %2947
      %2949 = vrot.lane.b32.xlu0 %v2118, 72
      %v2950 = vpop.permute.xlu0 %2949
      %2951 = vrot.lane.b32.xlu0 %v2119, 72
      %v2952 = vpop.permute.xlu0 %2951
      %2953 = vrot.lane.b32.xlu0 %v2120, 72
      %v2954 = vpop.permute.xlu0 %2953
      %2955 = vrot.lane.b32.xlu0 %v2943, 72
      %v2956 = vpop.permute.xlu0 %2955
      %2957 = vrot.lane.b32.xlu0 %v2944, 72
      %v2958 = vpop.permute.xlu0 %2957
      %2959 = vrot.lane.b32.xlu0 %v2945, 72
      %v2960 = vpop.permute.xlu0 %2959
      %2961 = vrot.lane.b32.xlu0 %v2946, 72
      %v2962 = vpop.permute.xlu0 %2961
      %2971 = vst.msk [vmem:[#allocation2 + $0x40] sm:$0xff] %vm2918, %v2948
      %2972 = vst.msk [vmem:[#allocation2 + $0x48] sm:$0xff] %vm2918, %v2950
      %2973 = vst.msk [vmem:[#allocation2 + $0x50] sm:$0xff] %vm2918, %v2952
      %2974 = vst.msk [vmem:[#allocation2 + $0x58] sm:$0xff] %vm2918, %v2954
      %2975 = vst.msk [vmem:[#allocation2 + $0x60] sm:$0xff] %vm2918, %v2956
      %2976 = vst.msk [vmem:[#allocation2 + $0x68] sm:$0xff] %vm2918, %v2958
      %2977 = vst.msk [vmem:[#allocation2 + $0x70] sm:$0xff] %vm2918, %v2960
      %2978 = vst.msk [vmem:[#allocation2 + $0x78] sm:$0xff] %vm2918, %v2962
      %2979 = vrot.lane.b32.xlu0 %v1069, 76
      %v2980 = vpop.permute.xlu0 %2979
      %2981 = vrot.lane.b32.xlu0 %v1070, 76
      %v2982 = vpop.permute.xlu0 %2981
      %2983 = vrot.lane.b32.xlu0 %v1071, 76
      %v2984 = vpop.permute.xlu0 %2983
      %2985 = vrot.lane.b32.xlu0 %v1072, 76
      %v2986 = vpop.permute.xlu0 %2985
      %2987 = vrot.lane.b32.xlu0 %v1073, 76
      %v2988 = vpop.permute.xlu0 %2987
      %2989 = vrot.lane.b32.xlu0 %v1074, 76
      %v2990 = vpop.permute.xlu0 %2989
      %2991 = vrot.lane.b32.xlu0 %v1075, 76
      %v2992 = vpop.permute.xlu0 %2991
      %2993 = vrot.lane.b32.xlu0 %v1076, 76
      %v2994 = vpop.permute.xlu0 %2993
      %vm3003 = vcmask 654944
      %3004 = vst.msk [vmem:[#allocation2] sm:$0xff] %vm3003, %v2980
      %3005 = vst.msk [vmem:[#allocation2 + $0x8] sm:$0xff] %vm3003, %v2982
      %3006 = vst.msk [vmem:[#allocation2 + $0x10] sm:$0xff] %vm3003, %v2984
      %3007 = vst.msk [vmem:[#allocation2 + $0x18] sm:$0xff] %vm3003, %v2986
      %3008 = vst.msk [vmem:[#allocation2 + $0x20] sm:$0xff] %vm3003, %v2988
      %3009 = vst.msk [vmem:[#allocation2 + $0x28] sm:$0xff] %vm3003, %v2990
      %3010 = vst.msk [vmem:[#allocation2 + $0x30] sm:$0xff] %vm3003, %v2992
      %3011 = vst.msk [vmem:[#allocation2 + $0x38] sm:$0xff] %vm3003, %v2994
      %v3013 = vshrl.u32 %v445, 16
      %v3015 = vrot.slane %v3013, 4
      %v3016 = vshll.u32 %v445, 16
      %v3018 = vrot.slane %v3016, 5
      %v3019 = vor.u32 %v3015, %v3018
      %v3020 = vrot.slane %v3019, 4
      %v3022 = vshll.u32 %v446, 16
      %v3024 = vrot.slane %v3022, 5
      %v3025 = vsel %vm580, %v3020, %v3024
      %v3027 = vshrl.u32 %v447, 16
      %v3029 = vrot.slane %v3027, 4
      %v3030 = vshll.u32 %v447, 16
      %v3032 = vrot.slane %v3030, 5
      %v3033 = vor.u32 %v3029, %v3032
      %v3034 = vrot.slane %v3033, 4
      %v3036 = vshll.u32 %v448, 16
      %v3038 = vrot.slane %v3036, 5
      %v3039 = vsel %vm580, %v3034, %v3038
      %v3041 = vshrl.u32 %v449, 16
      %v3043 = vrot.slane %v3041, 4
      %v3044 = vshll.u32 %v449, 16
      %v3046 = vrot.slane %v3044, 5
      %v3047 = vor.u32 %v3043, %v3046
      %v3048 = vrot.slane %v3047, 4
      %v3050 = vshll.u32 %v450, 16
      %v3052 = vrot.slane %v3050, 5
      %v3053 = vsel %vm580, %v3048, %v3052
      %v3055 = vshrl.u32 %v451, 16
      %v3057 = vrot.slane %v3055, 4
      %v3058 = vshll.u32 %v451, 16
      %v3060 = vrot.slane %v3058, 5
      %v3061 = vor.u32 %v3057, %v3060
      %v3062 = vrot.slane %v3061, 4
      %v3064 = vshll.u32 %v452, 16
      %v3066 = vrot.slane %v3064, 5
      %v3067 = vsel %vm580, %v3062, %v3066
      %v3069 = vshrl.u32 %v453, 16
      %v3071 = vrot.slane %v3069, 4
      %v3072 = vshll.u32 %v453, 16
      %v3074 = vrot.slane %v3072, 5
      %v3075 = vor.u32 %v3071, %v3074
      %v3076 = vrot.slane %v3075, 4
      %v3078 = vshll.u32 %v454, 16
      %v3080 = vrot.slane %v3078, 5
      %v3081 = vsel %vm580, %v3076, %v3080
      %v3083 = vshrl.u32 %v455, 16
      %v3085 = vrot.slane %v3083, 4
      %v3086 = vshll.u32 %v455, 16
      %v3088 = vrot.slane %v3086, 5
      %v3089 = vor.u32 %v3085, %v3088
      %v3090 = vrot.slane %v3089, 4
      %v3092 = vshll.u32 %v456, 16
      %v3094 = vrot.slane %v3092, 5
      %v3095 = vsel %vm580, %v3090, %v3094
      %v3097 = vshrl.u32 %v457, 16
      %v3099 = vrot.slane %v3097, 4
      %v3100 = vshll.u32 %v457, 16
      %v3102 = vrot.slane %v3100, 5
      %v3103 = vor.u32 %v3099, %v3102
      %v3104 = vrot.slane %v3103, 4
      %v3106 = vshll.u32 %v458, 16
      %v3108 = vrot.slane %v3106, 5
      %v3109 = vsel %vm580, %v3104, %v3108
      %v3111 = vshrl.u32 %v459, 16
      %v3113 = vrot.slane %v3111, 4
      %v3114 = vshll.u32 %v459, 16
      %v3116 = vrot.slane %v3114, 5
      %v3117 = vor.u32 %v3113, %v3116
      %v3118 = vrot.slane %v3117, 4
      %v3120 = vshll.u32 %v460, 16
      %v3122 = vrot.slane %v3120, 5
      %v3123 = vsel %vm580, %v3118, %v3122
      %v3124 = vunpack.c.l.b16 %v3025
      %v3125 = vunpack.c.l.b16 %v3039
      %v3126 = vunpack.c.l.b16 %v3053
      %v3127 = vunpack.c.l.b16 %v3067
      %v3128 = vunpack.c.l.b16 %v3081
      %v3129 = vunpack.c.l.b16 %v3095
      %v3130 = vunpack.c.l.b16 %v3109
      %v3131 = vunpack.c.l.b16 %v3123
      %v3132 = vpack.c.b16 %v3125, %v3124
      %v3133 = vpack.c.b16 %v3127, %v3126
      %v3134 = vpack.c.b16 %v3129, %v3128
      %v3135 = vpack.c.b16 %v3131, %v3130
      %3136 = vrot.lane.b32.xlu0 %v2306, 76
      %v3137 = vpop.permute.xlu0 %3136
      %3138 = vrot.lane.b32.xlu0 %v2307, 76
      %v3139 = vpop.permute.xlu0 %3138
      %3140 = vrot.lane.b32.xlu0 %v2308, 76
      %v3141 = vpop.permute.xlu0 %3140
      %3142 = vrot.lane.b32.xlu0 %v2309, 76
      %v3143 = vpop.permute.xlu0 %3142
      %3144 = vrot.lane.b32.xlu0 %v3132, 76
      %v3145 = vpop.permute.xlu0 %3144
      %3146 = vrot.lane.b32.xlu0 %v3133, 76
      %v3147 = vpop.permute.xlu0 %3146
      %3148 = vrot.lane.b32.xlu0 %v3134, 76
      %v3149 = vpop.permute.xlu0 %3148
      %3150 = vrot.lane.b32.xlu0 %v3135, 76
      %v3151 = vpop.permute.xlu0 %3150
      %3160 = vst.msk [vmem:[#allocation2 + $0x40] sm:$0xff] %vm3003, %v3137
      %3161 = vst.msk [vmem:[#allocation2 + $0x48] sm:$0xff] %vm3003, %v3139
      %3162 = vst.msk [vmem:[#allocation2 + $0x50] sm:$0xff] %vm3003, %v3141
      %3163 = vst.msk [vmem:[#allocation2 + $0x58] sm:$0xff] %vm3003, %v3143
      %3164 = vst.msk [vmem:[#allocation2 + $0x60] sm:$0xff] %vm3003, %v3145
      %3165 = vst.msk [vmem:[#allocation2 + $0x68] sm:$0xff] %vm3003, %v3147
      %3166 = vst.msk [vmem:[#allocation2 + $0x70] sm:$0xff] %vm3003, %v3149
      %3167 = vst.msk [vmem:[#allocation2 + $0x78] sm:$0xff] %vm3003, %v3151
      %3168 = vrot.lane.b32.xlu0 %v1345, 80
      %v3169 = vpop.permute.xlu0 %3168
      %3170 = vrot.lane.b32.xlu0 %v1346, 80
      %v3171 = vpop.permute.xlu0 %3170
      %3172 = vrot.lane.b32.xlu0 %v1347, 80
      %v3173 = vpop.permute.xlu0 %3172
      %3174 = vrot.lane.b32.xlu0 %v1348, 80
      %v3175 = vpop.permute.xlu0 %3174
      %3176 = vrot.lane.b32.xlu0 %v1349, 80
      %v3177 = vpop.permute.xlu0 %3176
      %3178 = vrot.lane.b32.xlu0 %v1350, 80
      %v3179 = vpop.permute.xlu0 %3178
      %3180 = vrot.lane.b32.xlu0 %v1351, 80
      %v3181 = vpop.permute.xlu0 %3180
      %3182 = vrot.lane.b32.xlu0 %v1352, 80
      %v3183 = vpop.permute.xlu0 %3182
      %vm3192 = vcmask 687744
      %3193 = vst.msk [vmem:[#allocation2] sm:$0xff] %vm3192, %v3169
      %3194 = vst.msk [vmem:[#allocation2 + $0x8] sm:$0xff] %vm3192, %v3171
      %3195 = vst.msk [vmem:[#allocation2 + $0x10] sm:$0xff] %vm3192, %v3173
      %3196 = vst.msk [vmem:[#allocation2 + $0x18] sm:$0xff] %vm3192, %v3175
      %3197 = vst.msk [vmem:[#allocation2 + $0x20] sm:$0xff] %vm3192, %v3177
      %3198 = vst.msk [vmem:[#allocation2 + $0x28] sm:$0xff] %vm3192, %v3179
      %3199 = vst.msk [vmem:[#allocation2 + $0x30] sm:$0xff] %vm3192, %v3181
      %3200 = vst.msk [vmem:[#allocation2 + $0x38] sm:$0xff] %vm3192, %v3183
      %v3209 = vrot.slane %v445, 5
      %v3210 = vrot.slane %v3209, 4
      %v3211 = vrot.slane %v446, 5
      %v3212 = vsel %vm1176, %v3210, %v3211
      %v3213 = vrot.slane %v447, 5
      %v3214 = vrot.slane %v3213, 4
      %v3215 = vrot.slane %v448, 5
      %v3216 = vsel %vm1176, %v3214, %v3215
      %v3217 = vrot.slane %v449, 5
      %v3218 = vrot.slane %v3217, 4
      %v3219 = vrot.slane %v450, 5
      %v3220 = vsel %vm1176, %v3218, %v3219
      %v3221 = vrot.slane %v451, 5
      %v3222 = vrot.slane %v3221, 4
      %v3223 = vrot.slane %v452, 5
      %v3224 = vsel %vm1176, %v3222, %v3223
      %v3225 = vrot.slane %v453, 5
      %v3226 = vrot.slane %v3225, 4
      %v3227 = vrot.slane %v454, 5
      %v3228 = vsel %vm1176, %v3226, %v3227
      %v3229 = vrot.slane %v455, 5
      %v3230 = vrot.slane %v3229, 4
      %v3231 = vrot.slane %v456, 5
      %v3232 = vsel %vm1176, %v3230, %v3231
      %v3233 = vrot.slane %v457, 5
      %v3234 = vrot.slane %v3233, 4
      %v3235 = vrot.slane %v458, 5
      %v3236 = vsel %vm1176, %v3234, %v3235
      %v3237 = vrot.slane %v459, 5
      %v3238 = vrot.slane %v3237, 4
      %v3239 = vrot.slane %v460, 5
      %v3240 = vsel %vm1176, %v3238, %v3239
      %v3241 = vunpack.c.l.b16 %v3212
      %v3242 = vunpack.c.l.b16 %v3216
      %v3243 = vunpack.c.l.b16 %v3220
      %v3244 = vunpack.c.l.b16 %v3224
      %v3245 = vunpack.c.l.b16 %v3228
      %v3246 = vunpack.c.l.b16 %v3232
      %v3247 = vunpack.c.l.b16 %v3236
      %v3248 = vunpack.c.l.b16 %v3240
      %v3249 = vpack.c.b16 %v3242, %v3241
      %v3250 = vpack.c.b16 %v3244, %v3243
      %v3251 = vpack.c.b16 %v3246, %v3245
      %v3252 = vpack.c.b16 %v3248, %v3247
      %3253 = vrot.lane.b32.xlu0 %v2423, 80
      %v3254 = vpop.permute.xlu0 %3253
      %3255 = vrot.lane.b32.xlu0 %v2424, 80
      %v3256 = vpop.permute.xlu0 %3255
      %3257 = vrot.lane.b32.xlu0 %v2425, 80
      %v3258 = vpop.permute.xlu0 %3257
      %3259 = vrot.lane.b32.xlu0 %v2426, 80
      %v3260 = vpop.permute.xlu0 %3259
      %3261 = vrot.lane.b32.xlu0 %v3249, 80
      %v3262 = vpop.permute.xlu0 %3261
      %3263 = vrot.lane.b32.xlu0 %v3250, 80
      %v3264 = vpop.permute.xlu0 %3263
      %3265 = vrot.lane.b32.xlu0 %v3251, 80
      %v3266 = vpop.permute.xlu0 %3265
      %3267 = vrot.lane.b32.xlu0 %v3252, 80
      %v3268 = vpop.permute.xlu0 %3267
      %3277 = vst.msk [vmem:[#allocation2 + $0x40] sm:$0xff] %vm3192, %v3254
      %3278 = vst.msk [vmem:[#allocation2 + $0x48] sm:$0xff] %vm3192, %v3256
      %3279 = vst.msk [vmem:[#allocation2 + $0x50] sm:$0xff] %vm3192, %v3258
      %3280 = vst.msk [vmem:[#allocation2 + $0x58] sm:$0xff] %vm3192, %v3260
      %3281 = vst.msk [vmem:[#allocation2 + $0x60] sm:$0xff] %vm3192, %v3262
      %3282 = vst.msk [vmem:[#allocation2 + $0x68] sm:$0xff] %vm3192, %v3264
      %3283 = vst.msk [vmem:[#allocation2 + $0x70] sm:$0xff] %vm3192, %v3266
      %3284 = vst.msk [vmem:[#allocation2 + $0x78] sm:$0xff] %vm3192, %v3268
      %3285 = vrot.lane.b32.xlu0 %v1434, 84
      %v3286 = vpop.permute.xlu0 %3285
      %3287 = vrot.lane.b32.xlu0 %v1435, 84
      %v3288 = vpop.permute.xlu0 %3287
      %3289 = vrot.lane.b32.xlu0 %v1436, 84
      %v3290 = vpop.permute.xlu0 %3289
      %3291 = vrot.lane.b32.xlu0 %v1437, 84
      %v3292 = vpop.permute.xlu0 %3291
      %3293 = vrot.lane.b32.xlu0 %v1438, 84
      %v3294 = vpop.permute.xlu0 %3293
      %3295 = vrot.lane.b32.xlu0 %v1439, 84
      %v3296 = vpop.permute.xlu0 %3295
      %3297 = vrot.lane.b32.xlu0 %v1440, 84
      %v3298 = vpop.permute.xlu0 %3297
      %3299 = vrot.lane.b32.xlu0 %v1441, 84
      %v3300 = vpop.permute.xlu0 %3299
      %vm3309 = vcmask 720544
      %3310 = vst.msk [vmem:[#allocation2] sm:$0xff] %vm3309, %v3286
      %3311 = vst.msk [vmem:[#allocation2 + $0x8] sm:$0xff] %vm3309, %v3288
      %3312 = vst.msk [vmem:[#allocation2 + $0x10] sm:$0xff] %vm3309, %v3290
      %3313 = vst.msk [vmem:[#allocation2 + $0x18] sm:$0xff] %vm3309, %v3292
      %3314 = vst.msk [vmem:[#allocation2 + $0x20] sm:$0xff] %vm3309, %v3294
      %3315 = vst.msk [vmem:[#allocation2 + $0x28] sm:$0xff] %vm3309, %v3296
      %3316 = vst.msk [vmem:[#allocation2 + $0x30] sm:$0xff] %vm3309, %v3298
      %3317 = vst.msk [vmem:[#allocation2 + $0x38] sm:$0xff] %vm3309, %v3300
      %v3319 = vunpack.c.l.b16 %v461
      %v3320 = vpack.c.b16 %v2937, %v2936
      %v3321 = vpack.c.b16 %v2939, %v2938
      %v3322 = vpack.c.b16 %v2941, %v2940
      %v3323 = vpack.c.b16 %v3319, %v2942
      %3324 = vrot.lane.b32.xlu0 %v2494, 84
      %v3325 = vpop.permute.xlu0 %3324
      %3326 = vrot.lane.b32.xlu0 %v2495, 84
      %v3327 = vpop.permute.xlu0 %3326
      %3328 = vrot.lane.b32.xlu0 %v2496, 84
      %v3329 = vpop.permute.xlu0 %3328
      %3330 = vrot.lane.b32.xlu0 %v2497, 84
      %v3331 = vpop.permute.xlu0 %3330
      %3332 = vrot.lane.b32.xlu0 %v3320, 84
      %v3333 = vpop.permute.xlu0 %3332
      %3334 = vrot.lane.b32.xlu0 %v3321, 84
      %v3335 = vpop.permute.xlu0 %3334
      %3336 = vrot.lane.b32.xlu0 %v3322, 84
      %v3337 = vpop.permute.xlu0 %3336
      %3338 = vrot.lane.b32.xlu0 %v3323, 84
      %v3339 = vpop.permute.xlu0 %3338
      %3348 = vst.msk [vmem:[#allocation2 + $0x40] sm:$0xff] %vm3309, %v3325
      %3349 = vst.msk [vmem:[#allocation2 + $0x48] sm:$0xff] %vm3309, %v3327
      %3350 = vst.msk [vmem:[#allocation2 + $0x50] sm:$0xff] %vm3309, %v3329
      %3351 = vst.msk [vmem:[#allocation2 + $0x58] sm:$0xff] %vm3309, %v3331
      %3352 = vst.msk [vmem:[#allocation2 + $0x60] sm:$0xff] %vm3309, %v3333
      %3353 = vst.msk [vmem:[#allocation2 + $0x68] sm:$0xff] %vm3309, %v3335
      %3354 = vst.msk [vmem:[#allocation2 + $0x70] sm:$0xff] %vm3309, %v3337
      %3355 = vst.msk [vmem:[#allocation2 + $0x78] sm:$0xff] %vm3309, %v3339
      %3356 = vrot.lane.b32.xlu0 %v1575, 88
      %v3357 = vpop.permute.xlu0 %3356
      %3358 = vrot.lane.b32.xlu0 %v1576, 88
      %v3359 = vpop.permute.xlu0 %3358
      %3360 = vrot.lane.b32.xlu0 %v1577, 88
      %v3361 = vpop.permute.xlu0 %3360
      %3362 = vrot.lane.b32.xlu0 %v1578, 88
      %v3363 = vpop.permute.xlu0 %3362
      %3364 = vrot.lane.b32.xlu0 %v1579, 88
      %v3365 = vpop.permute.xlu0 %3364
      %3366 = vrot.lane.b32.xlu0 %v1580, 88
      %v3367 = vpop.permute.xlu0 %3366
      %3368 = vrot.lane.b32.xlu0 %v1581, 88
      %v3369 = vpop.permute.xlu0 %3368
      %3370 = vrot.lane.b32.xlu0 %v1582, 88
      %v3371 = vpop.permute.xlu0 %3370
      %vm3380 = vcmask 753344
      %3381 = vst.msk [vmem:[#allocation2] sm:$0xff] %vm3380, %v3357
      %3382 = vst.msk [vmem:[#allocation2 + $0x8] sm:$0xff] %vm3380, %v3359
      %3383 = vst.msk [vmem:[#allocation2 + $0x10] sm:$0xff] %vm3380, %v3361
      %3384 = vst.msk [vmem:[#allocation2 + $0x18] sm:$0xff] %vm3380, %v3363
      %3385 = vst.msk [vmem:[#allocation2 + $0x20] sm:$0xff] %vm3380, %v3365
      %3386 = vst.msk [vmem:[#allocation2 + $0x28] sm:$0xff] %vm3380, %v3367
      %3387 = vst.msk [vmem:[#allocation2 + $0x30] sm:$0xff] %vm3380, %v3369
      %3388 = vst.msk [vmem:[#allocation2 + $0x38] sm:$0xff] %vm3380, %v3371
      %v3390 = vshrl.u32 %v461, 16
      %v3392 = vrot.slane %v3390, 4
      %v3393 = vshll.u32 %v461, 16
      %v3395 = vrot.slane %v3393, 5
      %v3396 = vor.u32 %v3392, %v3395
      %v3397 = vrot.slane %v3396, 4
      %v3399 = vshll.u32 %v462, 16
      %v3401 = vrot.slane %v3399, 5
      %v3402 = vsel %vm580, %v3397, %v3401
      %v3403 = vunpack.c.l.b16 %v3402
      %v3404 = vpack.c.b16 %v3126, %v3125
      %v3405 = vpack.c.b16 %v3128, %v3127
      %v3406 = vpack.c.b16 %v3130, %v3129
      %v3407 = vpack.c.b16 %v3403, %v3131
      %3408 = vrot.lane.b32.xlu0 %v2578, 88
      %v3409 = vpop.permute.xlu0 %3408
      %3410 = vrot.lane.b32.xlu0 %v2579, 88
      %v3411 = vpop.permute.xlu0 %3410
      %3412 = vrot.lane.b32.xlu0 %v2580, 88
      %v3413 = vpop.permute.xlu0 %3412
      %3414 = vrot.lane.b32.xlu0 %v2581, 88
      %v3415 = vpop.permute.xlu0 %3414
      %3416 = vrot.lane.b32.xlu0 %v3404, 88
      %v3417 = vpop.permute.xlu0 %3416
      %3418 = vrot.lane.b32.xlu0 %v3405, 88
      %v3419 = vpop.permute.xlu0 %3418
      %3420 = vrot.lane.b32.xlu0 %v3406, 88
      %v3421 = vpop.permute.xlu0 %3420
      %3422 = vrot.lane.b32.xlu0 %v3407, 88
      %v3423 = vpop.permute.xlu0 %3422
      %3432 = vst.msk [vmem:[#allocation2 + $0x40] sm:$0xff] %vm3380, %v3409
      %3433 = vst.msk [vmem:[#allocation2 + $0x48] sm:$0xff] %vm3380, %v3411
      %3434 = vst.msk [vmem:[#allocation2 + $0x50] sm:$0xff] %vm3380, %v3413
      %3435 = vst.msk [vmem:[#allocation2 + $0x58] sm:$0xff] %vm3380, %v3415
      %3436 = vst.msk [vmem:[#allocation2 + $0x60] sm:$0xff] %vm3380, %v3417
      %3437 = vst.msk [vmem:[#allocation2 + $0x68] sm:$0xff] %vm3380, %v3419
      %3438 = vst.msk [vmem:[#allocation2 + $0x70] sm:$0xff] %vm3380, %v3421
      %3439 = vst.msk [vmem:[#allocation2 + $0x78] sm:$0xff] %vm3380, %v3423
      %3440 = vrot.lane.b32.xlu0 %v1680, 92
      %v3441 = vpop.permute.xlu0 %3440
      %3442 = vrot.lane.b32.xlu0 %v1681, 92
      %v3443 = vpop.permute.xlu0 %3442
      %3444 = vrot.lane.b32.xlu0 %v1682, 92
      %v3445 = vpop.permute.xlu0 %3444
      %3446 = vrot.lane.b32.xlu0 %v1683, 92
      %v3447 = vpop.permute.xlu0 %3446
      %3448 = vrot.lane.b32.xlu0 %v1684, 92
      %v3449 = vpop.permute.xlu0 %3448
      %3450 = vrot.lane.b32.xlu0 %v1685, 92
      %v3451 = vpop.permute.xlu0 %3450
      %3452 = vrot.lane.b32.xlu0 %v1686, 92
      %v3453 = vpop.permute.xlu0 %3452
      %3454 = vrot.lane.b32.xlu0 %v1687, 92
      %v3455 = vpop.permute.xlu0 %3454
      %vm3464 = vcmask 786144
      %3465 = vst.msk [vmem:[#allocation2] sm:$0xff] %vm3464, %v3441
      %3466 = vst.msk [vmem:[#allocation2 + $0x8] sm:$0xff] %vm3464, %v3443
      %3467 = vst.msk [vmem:[#allocation2 + $0x10] sm:$0xff] %vm3464, %v3445
      %3468 = vst.msk [vmem:[#allocation2 + $0x18] sm:$0xff] %vm3464, %v3447
      %3469 = vst.msk [vmem:[#allocation2 + $0x20] sm:$0xff] %vm3464, %v3449
      %3470 = vst.msk [vmem:[#allocation2 + $0x28] sm:$0xff] %vm3464, %v3451
      %3471 = vst.msk [vmem:[#allocation2 + $0x30] sm:$0xff] %vm3464, %v3453
      %3472 = vst.msk [vmem:[#allocation2 + $0x38] sm:$0xff] %vm3464, %v3455
      %v3474 = vrot.slane %v461, 5
      %v3475 = vrot.slane %v3474, 4
      %v3476 = vrot.slane %v462, 5
      %v3477 = vsel %vm1176, %v3475, %v3476
      %v3478 = vunpack.c.l.b16 %v3477
      %v3479 = vpack.c.b16 %v3243, %v3242
      %v3480 = vpack.c.b16 %v3245, %v3244
      %v3481 = vpack.c.b16 %v3247, %v3246
      %v3482 = vpack.c.b16 %v3478, %v3248
      %3483 = vrot.lane.b32.xlu0 %v2653, 92
      %v3484 = vpop.permute.xlu0 %3483
      %3485 = vrot.lane.b32.xlu0 %v2654, 92
      %v3486 = vpop.permute.xlu0 %3485
      %3487 = vrot.lane.b32.xlu0 %v2655, 92
      %v3488 = vpop.permute.xlu0 %3487
      %3489 = vrot.lane.b32.xlu0 %v2656, 92
      %v3490 = vpop.permute.xlu0 %3489
      %3491 = vrot.lane.b32.xlu0 %v3479, 92
      %v3492 = vpop.permute.xlu0 %3491
      %3493 = vrot.lane.b32.xlu0 %v3480, 92
      %v3494 = vpop.permute.xlu0 %3493
      %3495 = vrot.lane.b32.xlu0 %v3481, 92
      %v3496 = vpop.permute.xlu0 %3495
      %3497 = vrot.lane.b32.xlu0 %v3482, 92
      %v3498 = vpop.permute.xlu0 %3497
      %3507 = vst.msk [vmem:[#allocation2 + $0x40] sm:$0xff] %vm3464, %v3484
      %3508 = vst.msk [vmem:[#allocation2 + $0x48] sm:$0xff] %vm3464, %v3486
      %3509 = vst.msk [vmem:[#allocation2 + $0x50] sm:$0xff] %vm3464, %v3488
      %3510 = vst.msk [vmem:[#allocation2 + $0x58] sm:$0xff] %vm3464, %v3490
      %3511 = vst.msk [vmem:[#allocation2 + $0x60] sm:$0xff] %vm3464, %v3492
      %3512 = vst.msk [vmem:[#allocation2 + $0x68] sm:$0xff] %vm3464, %v3494
      %3513 = vst.msk [vmem:[#allocation2 + $0x70] sm:$0xff] %vm3464, %v3496
      %3514 = vst.msk [vmem:[#allocation2 + $0x78] sm:$0xff] %vm3464, %v3498
      %3515 = vrot.lane.b32.xlu0 %v538, 96
      %v3516 = vpop.permute.xlu0 %3515
      %3517 = vrot.lane.b32.xlu0 %v539, 96
      %v3518 = vpop.permute.xlu0 %3517
      %3519 = vrot.lane.b32.xlu0 %v540, 96
      %v3520 = vpop.permute.xlu0 %3519
      %3521 = vrot.lane.b32.xlu0 %v1763, 96
      %v3522 = vpop.permute.xlu0 %3521
      %3523 = vrot.lane.b32.xlu0 %v542, 96
      %v3524 = vpop.permute.xlu0 %3523
      %3525 = vrot.lane.b32.xlu0 %v543, 96
      %v3526 = vpop.permute.xlu0 %3525
      %3527 = vrot.lane.b32.xlu0 %v544, 96
      %v3528 = vpop.permute.xlu0 %3527
      %3529 = vrot.lane.b32.xlu0 %v1764, 96
      %v3530 = vpop.permute.xlu0 %3529
      %vm3539 = vcmask 818944
      %3540 = vst.msk [vmem:[#allocation2] sm:$0xff] %vm3539, %v3516
      %3541 = vst.msk [vmem:[#allocation2 + $0x8] sm:$0xff] %vm3539, %v3518
      %3542 = vst.msk [vmem:[#allocation2 + $0x10] sm:$0xff] %vm3539, %v3520
      %3543 = vst.msk [vmem:[#allocation2 + $0x18] sm:$0xff] %vm3539, %v3522
      %3544 = vst.msk [vmem:[#allocation2 + $0x20] sm:$0xff] %vm3539, %v3524
      %3545 = vst.msk [vmem:[#allocation2 + $0x28] sm:$0xff] %vm3539, %v3526
      %3546 = vst.msk [vmem:[#allocation2 + $0x30] sm:$0xff] %vm3539, %v3528
      %3547 = vst.msk [vmem:[#allocation2 + $0x38] sm:$0xff] %vm3539, %v3530
      %v3549 = vunpack.c.l.b16 %v463
      %v3550 = vpack.c.b16 %v3549, %v3319
      %3551 = vrot.lane.b32.xlu0 %v2118, 96
      %v3552 = vpop.permute.xlu0 %3551
      %3553 = vrot.lane.b32.xlu0 %v2119, 96
      %v3554 = vpop.permute.xlu0 %3553
      %3555 = vrot.lane.b32.xlu0 %v2120, 96
      %v3556 = vpop.permute.xlu0 %3555
      %3557 = vrot.lane.b32.xlu0 %v2724, 96
      %v3558 = vpop.permute.xlu0 %3557
      %3559 = vrot.lane.b32.xlu0 %v2944, 96
      %v3560 = vpop.permute.xlu0 %3559
      %3561 = vrot.lane.b32.xlu0 %v2945, 96
      %v3562 = vpop.permute.xlu0 %3561
      %3563 = vrot.lane.b32.xlu0 %v2946, 96
      %v3564 = vpop.permute.xlu0 %3563
      %3565 = vrot.lane.b32.xlu0 %v3550, 96
      %v3566 = vpop.permute.xlu0 %3565
      %3575 = vst.msk [vmem:[#allocation2 + $0x40] sm:$0xff] %vm3539, %v3552
      %3576 = vst.msk [vmem:[#allocation2 + $0x48] sm:$0xff] %vm3539, %v3554
      %3577 = vst.msk [vmem:[#allocation2 + $0x50] sm:$0xff] %vm3539, %v3556
      %3578 = vst.msk [vmem:[#allocation2 + $0x58] sm:$0xff] %vm3539, %v3558
      %3579 = vst.msk [vmem:[#allocation2 + $0x60] sm:$0xff] %vm3539, %v3560
      %3580 = vst.msk [vmem:[#allocation2 + $0x68] sm:$0xff] %vm3539, %v3562
      %3581 = vst.msk [vmem:[#allocation2 + $0x70] sm:$0xff] %vm3539, %v3564
      %3582 = vst.msk [vmem:[#allocation2 + $0x78] sm:$0xff] %vm3539, %v3566
      %3583 = vrot.lane.b32.xlu0 %v1070, 100
      %v3584 = vpop.permute.xlu0 %3583
      %3585 = vrot.lane.b32.xlu0 %v1071, 100
      %v3586 = vpop.permute.xlu0 %3585
      %3587 = vrot.lane.b32.xlu0 %v1072, 100
      %v3588 = vpop.permute.xlu0 %3587
      %3589 = vrot.lane.b32.xlu0 %v1892, 100
      %v3590 = vpop.permute.xlu0 %3589
      %3591 = vrot.lane.b32.xlu0 %v1074, 100
      %v3592 = vpop.permute.xlu0 %3591
      %3593 = vrot.lane.b32.xlu0 %v1075, 100
      %v3594 = vpop.permute.xlu0 %3593
      %3595 = vrot.lane.b32.xlu0 %v1076, 100
      %v3596 = vpop.permute.xlu0 %3595
      %3597 = vrot.lane.b32.xlu0 %v1893, 100
      %v3598 = vpop.permute.xlu0 %3597
      %vm3607 = vcmask 851744
      %3608 = vst.msk [vmem:[#allocation2] sm:$0xff] %vm3607, %v3584
      %3609 = vst.msk [vmem:[#allocation2 + $0x8] sm:$0xff] %vm3607, %v3586
      %3610 = vst.msk [vmem:[#allocation2 + $0x10] sm:$0xff] %vm3607, %v3588
      %3611 = vst.msk [vmem:[#allocation2 + $0x18] sm:$0xff] %vm3607, %v3590
      %3612 = vst.msk [vmem:[#allocation2 + $0x20] sm:$0xff] %vm3607, %v3592
      %3613 = vst.msk [vmem:[#allocation2 + $0x28] sm:$0xff] %vm3607, %v3594
      %3614 = vst.msk [vmem:[#allocation2 + $0x30] sm:$0xff] %vm3607, %v3596
      %3615 = vst.msk [vmem:[#allocation2 + $0x38] sm:$0xff] %vm3607, %v3598
      %v3617 = vshrl.u32 %v463, 16
      %v3619 = vrot.slane %v3617, 4
      %v3620 = vshll.u32 %v463, 16
      %v3622 = vrot.slane %v3620, 5
      %v3623 = vor.u32 %v3619, %v3622
      %v3624 = vrot.slane %v3623, 4
      %v3626 = vshll.u32 %v464, 16
      %v3628 = vrot.slane %v3626, 5
      %v3629 = vsel %vm580, %v3624, %v3628
      %v3630 = vunpack.c.l.b16 %v3629
      %v3631 = vpack.c.b16 %v3630, %v3403
      %3632 = vrot.lane.b32.xlu0 %v2307, 100
      %v3633 = vpop.permute.xlu0 %3632
      %3634 = vrot.lane.b32.xlu0 %v2308, 100
      %v3635 = vpop.permute.xlu0 %3634
      %3636 = vrot.lane.b32.xlu0 %v2309, 100
      %v3637 = vpop.permute.xlu0 %3636
      %3638 = vrot.lane.b32.xlu0 %v2805, 100
      %v3639 = vpop.permute.xlu0 %3638
      %3640 = vrot.lane.b32.xlu0 %v3133, 100
      %v3641 = vpop.permute.xlu0 %3640
      %3642 = vrot.lane.b32.xlu0 %v3134, 100
      %v3643 = vpop.permute.xlu0 %3642
      %3644 = vrot.lane.b32.xlu0 %v3135, 100
      %v3645 = vpop.permute.xlu0 %3644
      %3646 = vrot.lane.b32.xlu0 %v3631, 100
      %v3647 = vpop.permute.xlu0 %3646
      %3656 = vst.msk [vmem:[#allocation2 + $0x40] sm:$0xff] %vm3607, %v3633
      %3657 = vst.msk [vmem:[#allocation2 + $0x48] sm:$0xff] %vm3607, %v3635
      %3658 = vst.msk [vmem:[#allocation2 + $0x50] sm:$0xff] %vm3607, %v3637
      %3659 = vst.msk [vmem:[#allocation2 + $0x58] sm:$0xff] %vm3607, %v3639
      %3660 = vst.msk [vmem:[#allocation2 + $0x60] sm:$0xff] %vm3607, %v3641
      %3661 = vst.msk [vmem:[#allocation2 + $0x68] sm:$0xff] %vm3607, %v3643
      %3662 = vst.msk [vmem:[#allocation2 + $0x70] sm:$0xff] %vm3607, %v3645
      %3663 = vst.msk [vmem:[#allocation2 + $0x78] sm:$0xff] %vm3607, %v3647
      %3664 = vrot.lane.b32.xlu0 %v1346, 104
      %v3665 = vpop.permute.xlu0 %3664
      %3666 = vrot.lane.b32.xlu0 %v1347, 104
      %v3667 = vpop.permute.xlu0 %3666
      %3668 = vrot.lane.b32.xlu0 %v1348, 104
      %v3669 = vpop.permute.xlu0 %3668
      %3670 = vrot.lane.b32.xlu0 %v1985, 104
      %v3671 = vpop.permute.xlu0 %3670
      %3672 = vrot.lane.b32.xlu0 %v1350, 104
      %v3673 = vpop.permute.xlu0 %3672
      %3674 = vrot.lane.b32.xlu0 %v1351, 104
      %v3675 = vpop.permute.xlu0 %3674
      %3676 = vrot.lane.b32.xlu0 %v1352, 104
      %v3677 = vpop.permute.xlu0 %3676
      %3678 = vrot.lane.b32.xlu0 %v1986, 104
      %v3679 = vpop.permute.xlu0 %3678
      %vm3688 = vcmask 884544
      %3689 = vst.msk [vmem:[#allocation2] sm:$0xff] %vm3688, %v3665
      %3690 = vst.msk [vmem:[#allocation2 + $0x8] sm:$0xff] %vm3688, %v3667
      %3691 = vst.msk [vmem:[#allocation2 + $0x10] sm:$0xff] %vm3688, %v3669
      %3692 = vst.msk [vmem:[#allocation2 + $0x18] sm:$0xff] %vm3688, %v3671
      %3693 = vst.msk [vmem:[#allocation2 + $0x20] sm:$0xff] %vm3688, %v3673
      %3694 = vst.msk [vmem:[#allocation2 + $0x28] sm:$0xff] %vm3688, %v3675
      %3695 = vst.msk [vmem:[#allocation2 + $0x30] sm:$0xff] %vm3688, %v3677
      %3696 = vst.msk [vmem:[#allocation2 + $0x38] sm:$0xff] %vm3688, %v3679
      %v3698 = vrot.slane %v463, 5
      %v3699 = vrot.slane %v3698, 4
      %v3700 = vrot.slane %v464, 5
      %v3701 = vsel %vm1176, %v3699, %v3700
      %v3702 = vunpack.c.l.b16 %v3701
      %v3703 = vpack.c.b16 %v3702, %v3478
      %3704 = vrot.lane.b32.xlu0 %v2424, 104
      %v3705 = vpop.permute.xlu0 %3704
      %3706 = vrot.lane.b32.xlu0 %v2425, 104
      %v3707 = vpop.permute.xlu0 %3706
      %3708 = vrot.lane.b32.xlu0 %v2426, 104
      %v3709 = vpop.permute.xlu0 %3708
      %3710 = vrot.lane.b32.xlu0 %v2877, 104
      %v3711 = vpop.permute.xlu0 %3710
      %3712 = vrot.lane.b32.xlu0 %v3250, 104
      %v3713 = vpop.permute.xlu0 %3712
      %3714 = vrot.lane.b32.xlu0 %v3251, 104
      %v3715 = vpop.permute.xlu0 %3714
      %3716 = vrot.lane.b32.xlu0 %v3252, 104
      %v3717 = vpop.permute.xlu0 %3716
      %3718 = vrot.lane.b32.xlu0 %v3703, 104
      %v3719 = vpop.permute.xlu0 %3718
      %3728 = vst.msk [vmem:[#allocation2 + $0x40] sm:$0xff] %vm3688, %v3705
      %3729 = vst.msk [vmem:[#allocation2 + $0x48] sm:$0xff] %vm3688, %v3707
      %3730 = vst.msk [vmem:[#allocation2 + $0x50] sm:$0xff] %vm3688, %v3709
      %3731 = vst.msk [vmem:[#allocation2 + $0x58] sm:$0xff] %vm3688, %v3711
      %3732 = vst.msk [vmem:[#allocation2 + $0x60] sm:$0xff] %vm3688, %v3713
      %3733 = vst.msk [vmem:[#allocation2 + $0x68] sm:$0xff] %vm3688, %v3715
      %3734 = vst.msk [vmem:[#allocation2 + $0x70] sm:$0xff] %vm3688, %v3717
      %3735 = vst.msk [vmem:[#allocation2 + $0x78] sm:$0xff] %vm3688, %v3719
      %v3736 = vld [vmem:[%s2] sm:$0xf]
      %v3737 = vld [vmem:[#allocation2] sm:$0xff]
      %v3738 = vld [vmem:[#allocation2 + $0x8] sm:$0xff]
      %v3739 = vld [vmem:[#allocation2 + $0x10] sm:$0xff]
      %v3740 = vld [vmem:[#allocation2 + $0x18] sm:$0xff]
      %v3741 = vld [vmem:[#allocation2 + $0x20] sm:$0xff]
      %v3742 = vld [vmem:[#allocation2 + $0x28] sm:$0xff]
      %v3743 = vld [vmem:[#allocation2 + $0x30] sm:$0xff]
      %v3744 = vld [vmem:[#allocation2 + $0x38] sm:$0xff]
      %v3745 = vld [vmem:[#allocation2 + $0x40] sm:$0xff]
      %v3746 = vld [vmem:[#allocation2 + $0x48] sm:$0xff]
      %v3747 = vld [vmem:[#allocation2 + $0x50] sm:$0xff]
      %v3748 = vld [vmem:[#allocation2 + $0x58] sm:$0xff]
      %v3749 = vld [vmem:[#allocation2 + $0x60] sm:$0xff]
      %v3750 = vld [vmem:[#allocation2 + $0x68] sm:$0xff]
      %v3751 = vld [vmem:[#allocation2 + $0x70] sm:$0xff]
      %v3752 = vld [vmem:[#allocation2 + $0x78] sm:$0xff]
      %vm3753 = vcmask 883712
      %v3755 = vsel %vm3753, %v3736, 0
      %v3758 = vsel %vm3753, %v3737, 0
      %v3761 = vsel %vm3753, %v3738, 0
      %v3764 = vsel %vm3753, %v3739, 0
      %v3767 = vsel %vm3753, %v3740, 0
      %v3770 = vsel %vm3753, %v3741, 0
      %v3773 = vsel %vm3753, %v3742, 0
      %v3776 = vsel %vm3753, %v3743, 0
      %v3779 = vsel %vm3753, %v3744, 0
      %v3782 = vsel %vm3753, %v3745, 0
      %v3785 = vsel %vm3753, %v3746, 0
      %v3788 = vsel %vm3753, %v3747, 0
      %v3791 = vsel %vm3753, %v3748, 0
      %v3794 = vsel %vm3753, %v3749, 0
      %v3797 = vsel %vm3753, %v3750, 0
      %v3800 = vsel %vm3753, %v3751, 0
      %v3803 = vsel %vm3753, %v3752, 0
      %3805 = vmatprep.subr.bf16.mxu0 0
      %3806 = vmatpush1.bf16.xpose.msra.mxu0 %v3758
      %3807 = vmatprep.subr.bf16.mxu0 0
      %3808 = vmatpush1.bf16.xpose.msra.mxu0 %v3761
      %3809 = vmatprep.subr.bf16.mxu0 0
      %3810 = vmatpush1.bf16.xpose.msra.mxu0 %v3764
      %3811 = vmatprep.subr.bf16.mxu0 0
      %3812 = vmatpush1.bf16.xpose.msra.mxu0 %v3767
      %3813 = vmatprep.subr.bf16.mxu0 0
      %3814 = vmatpush1.bf16.xpose.msra.mxu0 %v3770
      %3815 = vmatprep.subr.bf16.mxu0 0
      %3816 = vmatpush1.bf16.xpose.msra.mxu0 %v3773
      %3817 = vmatprep.subr.bf16.mxu0 0
      %3818 = vmatpush1.bf16.xpose.msra.mxu0 %v3776
      %3819 = vmatprep.subr.bf16.mxu0 0
      %3820 = vmatpush1.bf16.xpose.msra.mxu0 %v3779
      %3821 = vmatprep.subr.bf16.mxu0 0
      %3822 = vmatpush1.bf16.xpose.msra.mxu0 %v3782
      %3823 = vmatprep.subr.bf16.mxu0 0
      %3824 = vmatpush1.bf16.xpose.msra.mxu0 %v3785
      %3825 = vmatprep.subr.bf16.mxu0 0
      %3826 = vmatpush1.bf16.xpose.msra.mxu0 %v3788
      %3827 = vmatprep.subr.bf16.mxu0 0
      %3828 = vmatpush1.bf16.xpose.msra.mxu0 %v3791
      %3829 = vmatprep.subr.bf16.mxu0 0
      %3830 = vmatpush1.bf16.xpose.msra.mxu0 %v3794
      %3831 = vmatprep.subr.bf16.mxu0 0
      %3832 = vmatpush1.bf16.xpose.msra.mxu0 %v3797
      %3833 = vmatprep.subr.bf16.mxu0 0
      %3834 = vmatpush1.bf16.xpose.msra.mxu0 %v3800
      %3835 = vmatprep.subr.bf16.mxu0 0
      %3836 = vmatpush1.bf16.xpose.msra.mxu0 %v3803
      %3837 = vmatprep.mubr.bf16.mxu0 0
      %3838 = vmatmul.mubr.bf16.gmra.mrb[0].mxu0 %v3755
      %v3839 = vpop.f32.mrb[0].mxu0
      %v3840 = vadd.f32 0.0, %v3839
      %v3841 = vpop.f32.mrb[0].mxu0
      %v3842 = vadd.f32 0.0, %v3841
      %v3843 = vpop.f32.mrb[0].mxu0
      %v3844 = vpop.f32.mrb[0].mxu0
      %3845 = vdwg.mxu0
      %v3846 = vpack.c.bf16 %v3840, %v3840
      %v3847 = vpack.c.bf16 %v3842, %v3842
      %v3850 = vunpack.c.l.b16 %v3846
      %v3851 = vunpack.c.l.b16 %v3847
      %v3852 = vpack.c.b16 %v3851, %v3850
      %3854 = vst [vmem:[%s334] sm:$0xff] %v3852
      %v3855 = vadd.f32 %v3840, %v3842
      %3856 = vadd.xlane.f32.xlu0 %v3855
      %v3857 = vpop.xlane.xlu0 %3856
      %v3858 = vmul.f32 %v3840, %v3840
      %v3859 = vmul.f32 %v3842, %v3842
      %v3860 = vadd.f32 %v3858, %v3859
      %3861 = vadd.xlane.f32.xlu0 %v3860
      %v3862 = vpop.xlane.xlu0 %3861
      %vm3863 = vcmask 7168
      %v3864 = vsel %vm3863, %v3857, %v3862
      %vm3865 = vcmask 15360
      %3866 = vst.msk [vmem:[%s343] sm:$0xff] %vm3865, %v3864
      %s3867 = smul.u32 2, %s21
      %p3868 = scmp.lt.s32.totalorder %s20, 1
      %s3869 = scalar_select %p3868, %s20, 1
      %p3870 = scmp.lt.s32.totalorder %s3867, 3
      %s3871 = scalar_select %p3870, %s3867, 3
      %s3872 = smul.addr %s3869, 4
      %s3873 = sadd.s32 %s3871, %s3872
      %s3874 = smul.addr %s3873, 4
      %s3875 = scalar_lea.vmem %s3, %s3874
      %p3876 = scmp.lt.s32.totalorder %s20, 1
      %s3877 = scalar_select %p3876, %s20, 1
      %p3878 = scmp.lt.s32.totalorder %s21, 1
      %s3879 = scalar_select %p3878, %s21, 1
      %s3880 = smul.addr %s3877, 2
      %s3881 = sadd.s32 %s3879, %s3880
      %s3882 = smul.addr %s3881, 8
      %s3883 = scalar_lea.vmem %s4, %s3882
      // Predicated region
      $region33: #{conv_bn_relu_3d.2} parent=31 // pred_check
        %p3884 = pneg %p129
      $region34: #{conv_bn_relu_3d.2} parent=31 // pred_check_branch
        %3886 = sbr.rel (%p3884) target = $region36
      $region35: #{conv_bn_relu_3d.2} parent=31 // pred_region
        %s3887 = smul.u32 2, %s21
      $region36: #{conv_bn_relu_3d.2} parent=31 // pred_fallthru
        _
      // Predicated region
      $region37: #{conv_bn_relu_3d.2} parent=31 // pred_check
        %p3888 = pneg %p157
      $region38: #{conv_bn_relu_3d.2} parent=31 // pred_check_branch
        %3890 = sbr.rel (%p3888) target = $region40
      $region39: #{conv_bn_relu_3d.2} parent=31 // pred_region
        _
      $region40: #{conv_bn_relu_3d.2} parent=31 // pred_fallthru
        _
    $region32: #{conv_bn_relu_3d.2} parent=5 // pred_fallthru
      _
    %p3891 = scmp.le.s32.totalorder 2, %s11
    // Predicated region
    $region41: #{conv_bn_relu_3d.2} parent=5 // pred_check
      %p3892 = pneg %p3891
    $region42: #{conv_bn_relu_3d.2} parent=5 // pred_check_branch
      %3894 = sbr.rel (%p3892) target = $region44
    $region43: #{conv_bn_relu_3d.2} parent=5 // pred_region
      %s3895 = ssub.s32 %s11, 2
      // Predicated region
      $region45: #{conv_bn_relu_3d.2} parent=43 // pred_check
        %p3896 = pneg %p135
      $region46: #{conv_bn_relu_3d.2} parent=43 // pred_check_branch
        %3898 = sbr.rel (%p3896) target = $region48
      $region47: #{conv_bn_relu_3d.2} parent=43 // pred_region
        %s3899 = smul.u32 2, %s23
        %p3900 = scmp.lt.s32.totalorder %s22, 1
        %s3901 = scalar_select %p3900, %s22, 1
        %p3902 = scmp.lt.s32.totalorder %s3899, 3
        %s3903 = scalar_select %p3902, %s3899, 3
        %s3904 = smul.addr %s3901, 4
        %s3905 = sadd.s32 %s3903, %s3904
        %s3906 = smul.addr %s3905, 4
        %s3907 = scalar_lea.vmem %s3, %s3906
      $region48: #{conv_bn_relu_3d.2} parent=43 // pred_fallthru
        _
      // Predicated region
      $region49: #{conv_bn_relu_3d.2} parent=43 // pred_check
        %p3908 = pneg %p163
      $region50: #{conv_bn_relu_3d.2} parent=43 // pred_check_branch
        %3910 = sbr.rel (%p3908) target = $region52
      $region51: #{conv_bn_relu_3d.2} parent=43 // pred_region
        %p3911 = scmp.lt.s32.totalorder %s22, 1
        %s3912 = scalar_select %p3911, %s22, 1
        %p3913 = scmp.lt.s32.totalorder %s23, 1
        %s3914 = scalar_select %p3913, %s23, 1
        %s3915 = smul.addr %s3912, 2
        %s3916 = sadd.s32 %s3914, %s3915
        %s3917 = smul.addr %s3916, 8
        %s3918 = scalar_lea.vmem %s4, %s3917
      $region52: #{conv_bn_relu_3d.2} parent=43 // pred_fallthru
        _
    $region44: #{conv_bn_relu_3d.2} parent=5 // pred_fallthru
      _
  $region6: #{conv_bn_relu_3d.2} parent=0 // loop_footer
    %s15 = sadd.s32 1, %s11
  $region7: #{conv_bn_relu_3d.2} parent=0 // loop_footer_branch
    %10 = sbr.rel target = $region3
  $region8: #{conv_bn_relu_3d.2} parent=0 // loop_exit
    _

</llo_original>
